<compile_context>
chip_gen: v5e
topology: v5e:2x2
jax: 0.10.0
libtpu: 0.0.40
codegen_flags: <defaults>
</compile_context>

<pallas_src>
import functools
import math

import jax
import jax.numpy as jnp
from jax.experimental import pallas as pl
from jax.experimental.pallas import tpu as pltpu


# ----------------------------------------------------------------------------
# Capability probes (cached)
# ----------------------------------------------------------------------------
_SINGLE_BUFFER_OK = None


def _single_buffer_supported():
    """True iff pl.BlockSpec(..., pipeline_mode=pl.Buffered(1)) compiles & runs."""
    global _SINGLE_BUFFER_OK
    if _SINGLE_BUFFER_OK is not None:
        return _SINGLE_BUFFER_OK
    try:
        spec = pl.BlockSpec((8, 128), lambda i: (0, 0),
                            pipeline_mode=pl.Buffered(1))

        def _k(x_ref, o_ref):
            o_ref[...] = x_ref[...] + 1.0

        fn = pl.pallas_call(
            _k,
            out_shape=jax.ShapeDtypeStruct((8, 128), jnp.float32),
            grid=(2,),
            in_specs=[spec],
            out_specs=pl.BlockSpec((8, 128), lambda i: (0, 0)))
        jax.block_until_ready(fn(jnp.zeros((8, 128), jnp.float32)))
        _SINGLE_BUFFER_OK = True
    except Exception:
        _SINGLE_BUFFER_OK = False
    return _SINGLE_BUFFER_OK


def _physical_vmem_bytes():
    try:
        v = getattr(pltpu.get_tpu_info(), "vmem_capacity_bytes", None)
        if v:
            return int(v)
    except Exception:
        pass
    return 64 * 2 ** 20            # conservative default (v7x per-TensorCore)


# ----------------------------------------------------------------------------
# In-kernel helpers
# ----------------------------------------------------------------------------
def _layernorm(x, g, b, eps=1e-5):
    # PyTorch LayerNorm: biased variance over last dim, eps=1e-5 (f32 stats).
    mu = jnp.mean(x, axis=-1, keepdims=True)
    xc = x - mu
    var = jnp.mean(xc * xc, axis=-1, keepdims=True)
    return xc * jax.lax.rsqrt(var + eps) * g + b


# ----------------------------------------------------------------------------
# Fused kernel: [residual add] + TransformerEncoderLayer + [LN/ReLU/convT]
# Grid: (n_dff_tiles,)  -- batch is folded into the block (B*L rows).
# ----------------------------------------------------------------------------
def transformer_layer_kernel(*refs, batch, seq, num_heads, q_tile,
                             fuse_residual, fuse_post):
    it = iter(refs)
    x_ref = next(it)
    res_ref = next(it) if fuse_residual else None
    wqkv_ref = next(it); bqkv_ref = next(it)
    wo_ref = next(it); bo_ref = next(it)
    ln1g_ref = next(it); ln1b_ref = next(it)
    w1_ref = next(it); b1_ref = next(it); w2_ref = next(it)
    b2_ref = next(it); ln2g_ref = next(it); ln2b_ref = next(it)
    if fuse_post:
        plng_ref = next(it); plnb_ref = next(it)
        w2d_ref = next(it); pbias_ref = next(it)
    o_ref = next(it)
    q_scr = next(it); k_scr = next(it); v_scr = next(it)
    ctx_scr = next(it)
    h1_ref = next(it); h1b_ref = next(it); acc_ref = next(it)

    B, L, H = batch, seq, num_heads
    BL, D = x_ref.shape
    hd = D // H
    scale = 1.0 / math.sqrt(hd)
    step = pl.program_id(0)                      # dff-tile (reduction) index

    # --- attention + first residual/LayerNorm: only on the first dff tile -----
    @pl.when(step == 0)
    def _attention():
        x = x_ref[...].astype(jnp.float32)       # (BL, D)
        if fuse_residual:
            x = x + res_ref[...].astype(jnp.float32)   # fused "data + features"
        xb = x.astype(jnp.bfloat16)

        # Packed QKV projection over all B*L rows (bf16 MXU, f32 accumulation).
        qkv = (jnp.dot(xb, wqkv_ref[...], preferred_element_type=jnp.float32)
               + bqkv_ref[...])
        qkvb = qkv.astype(jnp.bfloat16)

        # Stage (head, batch)-major copies so attention runs as one batched
        # (H*B, L, hd) computation (step-0-only cost).
        for h in range(H):
            qh = qkvb[:, h * hd:(h + 1) * hd]
            kh = qkvb[:, D + h * hd:D + (h + 1) * hd]
            vh = qkvb[:, 2 * D + h * hd:2 * D + (h + 1) * hd]
            for b in range(B):
                g, r = h * B + b, b * L
                q_scr[g] = qh[r:r + L, :]
                k_scr[g] = kh[r:r + L, :]
                v_scr[g] = vh[r:r + L, :]
        q_all = q_scr[...]
        k_all = k_scr[...]
        v_all = v_scr[...]

        # Query-chunked attention: bounds the (H*B, q_tile, L) score temporary.
        for q0 in range(0, L, q_tile):
            s = jnp.einsum("gqd,gkd->gqk", q_all[:, q0:q0 + q_tile, :], k_all,
                           preferred_element_type=jnp.float32) * scale
            s = s - jnp.max(s, axis=-1, keepdims=True)
            p = jnp.exp(s)
            # NOTE: approx reciprocal (EUP) -> ~1e-3 rel. error vs exact softmax.
            p = p * pl.reciprocal(jnp.sum(p, axis=-1, keepdims=True), approx=True)
            ctx = jnp.einsum("gqk,gkd->gqd", p.astype(jnp.bfloat16), v_all,
                             preferred_element_type=jnp.float32
                             ).astype(jnp.bfloat16)          # (H*B, q_tile, hd)
            # Reassemble heads into a (BL, D) buffer (one full-width store per
            # batch element per chunk) so the out-projection is a single matmul.
            for b in range(B):
                r = b * L + q0
                ctx_scr[r:r + q_tile, :] = jnp.concatenate(
                    [ctx[h * B + b] for h in range(H)], axis=-1)

        attn = (jnp.dot(ctx_scr[...], wo_ref[...],
                        preferred_element_type=jnp.float32) + bo_ref[...])
        h1 = _layernorm(x + attn, ln1g_ref[...], ln1b_ref[...])
        h1_ref[...] = h1
        h1b_ref[...] = h1.astype(jnp.bfloat16)   # bf16 cache reused every step
        acc_ref[...] = jnp.zeros_like(acc_ref)

    # --- FFN: accumulate one dff tile per grid step (ReLU is per hidden unit) --
    mid = jnp.maximum(
        jnp.dot(h1b_ref[...], w1_ref[...], preferred_element_type=jnp.float32)
        + b1_ref[...], 0.0)
    acc_ref[...] += jnp.dot(mid.astype(jnp.bfloat16), w2_ref[...],
                            preferred_element_type=jnp.float32)

    # --- finalize on the last dff tile -----------------------------------------
    @pl.when(step == pl.num_programs(0) - 1)
    def _finalize():
        h2 = _layernorm(h1_ref[...] + acc_ref[...] + b2_ref[...],
                        ln2g_ref[...], ln2b_ref[...])
        if fuse_post:
            # Stage-final LayerNorm -> ReLU -> ConvTranspose1d-as-matmul.
            y = jnp.maximum(_layernorm(h2, plng_ref[...], plnb_ref[...]), 0.0)
            o_ref[...] = (jnp.dot(y.astype(jnp.bfloat16), w2d_ref[...],
                                  preferred_element_type=jnp.float32)
                          + pbias_ref[...]).astype(o_ref.dtype)
        else:
            o_ref[...] = h2.astype(o_ref.dtype)


# ----------------------------------------------------------------------------
# VMEM budgeting (blocks + scratch + in-kernel temporaries)
# ----------------------------------------------------------------------------
def _nbytes(*arrs):
    return sum(int(a.size) * a.dtype.itemsize for a in arrs)


def _vmem_budget_bytes(B, L, D, tdff, Dout, H, q_tile,
                       fuse_residual, fuse_post, single_buf, out_itemsize):
    BL = B * L
    bf, f4 = 2, 4
    wb = 1 if single_buf else 2
    byt = 0
    # pipelined blocks
    byt += BL * D * bf * wb * (2 if fuse_residual else 1)      # x (+ residual)
    byt += BL * Dout * out_itemsize * 2                        # output block
    byt += (3 * D * D + D * D) * bf * wb                       # wqkv, wo
    byt += 10 * D * f4 * wb                                    # biases / LN params
    if fuse_post:
        byt += D * Dout * bf * wb + (2 * D + Dout) * f4 * wb
    byt += 2 * D * tdff * bf * 2 + tdff * f4 * 2               # streamed FFN tiles
    # persistent scratch
    byt += 3 * BL * D * bf                                     # q / k / v
    byt += BL * D * bf                                         # ctx reassembly
    byt += BL * D * (f4 + bf)                                  # h1 (f32) + h1 (bf16)
    byt += BL * D * f4                                         # FFN accumulator
    # in-kernel temporaries (rough peak)
    byt += BL * 3 * D * (f4 + bf)                              # qkv f32 + bf16
    byt += H * B * q_tile * L * (2 * f4 + bf)                  # s, p, p_bf16
    byt += B * q_tile * D * (f4 + bf)                          # ctx chunk
    byt += BL * D * f4                                         # attn
    byt += BL * tdff * (f4 + bf)                               # FFN mid
    return byt


# ----------------------------------------------------------------------------
# Wrapper
# ----------------------------------------------------------------------------
def pallas_transformer_layer(x, lp, num_heads, *, residual=None, post=None,
                             out_dtype=jnp.bfloat16):
    B, L, D = x.shape
    H = num_heads
    assert D % H == 0
    hd = D // H
    dff = lp["w1_t"].shape[1]
    fuse_residual = residual is not None
    fuse_post = post is not None
    Dout = post["w2d"].shape[1] if fuse_post else D
    BL = B * L
    out_itemsize = jnp.dtype(out_dtype).itemsize

    single_buf = _single_buffer_supported()
    phys = _physical_vmem_bytes()
    cap = max(32 * 2 ** 20, int(phys * 0.85))    # ~54 MiB on v7x, ~108 MiB on v5e/v6e

    # Query-chunk size (bounds the (H*B, q_tile, L) score/probability temporary).
    q_tile = L
    while q_tile > 128 and q_tile % 2 == 0 and H * B * q_tile * L * 10 > (8 << 20):
        q_tile //= 2

    # dff tile: largest power-of-two divisor of dff whose footprint fits `cap`
    # (resident FFN weights / nk=1 whenever they fit).
    tdff = dff
    while (tdff > 128 and tdff % 2 == 0 and
           _vmem_budget_bytes(B, L, D, tdff, Dout, H, q_tile, fuse_residual,
                              fuse_post, single_buf, out_itemsize) > cap):
        tdff //= 2
    nk = dff // tdff

    budget = _vmem_budget_bytes(B, L, D, tdff, Dout, H, q_tile, fuse_residual,
                                fuse_post, single_buf, out_itemsize)
    vmem_limit = int(min(cap, max(32 * 2 ** 20, int(budget * 1.25) + (4 << 20))))

    def _const_spec(shape):
        nd = len(shape)
        idx = lambda k, _nd=nd: (0,) * _nd
        if single_buf:
            return pl.BlockSpec(shape, idx, pipeline_mode=pl.Buffered(1))
        return pl.BlockSpec(shape, idx)

    # bf16 inter-layer activations (f32 stats/accumulation stay in-kernel).
    x2 = x.astype(jnp.bfloat16).reshape(BL, D)
    inputs = [x2]
    in_specs = [_const_spec((BL, D))]
    if fuse_residual:
        inputs.append(residual.astype(jnp.bfloat16).reshape(BL, D))
        in_specs.append(_const_spec((BL, D)))

    pre_ws = [lp["wqkv_t"], lp["bqkv"], lp["wo_t"], lp["bo"], lp["ln1g"], lp["ln1b"]]
    inputs += pre_ws
    in_specs += [_const_spec(w.shape) for w in pre_ws]

    # dff-streamed FFN weights: with batch folded into the block, each tile is
    # fetched exactly once per layer; keep default double buffering here.
    inputs += [lp["w1_t"], lp["b1"], lp["w2_t"]]
    in_specs += [pl.BlockSpec((D, tdff), lambda k: (0, k)),
                 pl.BlockSpec((1, tdff), lambda k: (0, k)),
                 pl.BlockSpec((tdff, D), lambda k: (k, 0))]

    post_ws = [lp["b2"], lp["ln2g"], lp["ln2b"]]
    inputs += post_ws
    in_specs += [_const_spec(w.shape) for w in post_ws]
    if fuse_post:
        conv_ws = [post["lng"], post["lnb"], post["w2d"], post["bias"]]
        inputs += conv_ws
        in_specs += [_const_spec(w.shape) for w in conv_ws]

    out_shape = jax.ShapeDtypeStruct((BL, Dout), out_dtype)
    out_spec = pl.BlockSpec((BL, Dout), lambda k: (0, 0))

    scratch_shapes = [
        pltpu.VMEM((H * B, L, hd), jnp.bfloat16),   # head/batch-major q
        pltpu.VMEM((H * B, L, hd), jnp.bfloat16),   # head/batch-major k
        pltpu.VMEM((H * B, L, hd), jnp.bfloat16),   # head/batch-major v
        pltpu.VMEM((BL, D), jnp.bfloat16),          # reassembled context
        pltpu.VMEM((BL, D), jnp.float32),           # h1 = LN1(x + attn)  (f32)
        pltpu.VMEM((BL, D), jnp.bfloat16),          # bf16 copy of h1 for FFN
        pltpu.VMEM((BL, D), jnp.float32),           # FFN f32 accumulator
    ]

    flops = (2 * BL * D * 3 * D           # qkv projection
             + 4 * B * L * L * D          # QK^T + PV
             + 2 * BL * D * D             # out projection
             + 4 * BL * D * dff           # FFN
             + (2 * BL * D * Dout if fuse_post else 0))
    cost = pl.CostEstimate(
        flops=int(flops),
        transcendentals=int(B * H * L * L),
        bytes_accessed=int(_nbytes(*inputs) + BL * Dout * out_itemsize))

    kernel = functools.partial(
        transformer_layer_kernel, batch=B, seq=L, num_heads=H, q_tile=q_tile,
        fuse_residual=fuse_residual, fuse_post=fuse_post)

    out2 = pl.pallas_call(
        kernel,
        out_shape=out_shape,
        grid=(nk,),
        in_specs=in_specs,
        out_specs=out_spec,
        scratch_shapes=scratch_shapes,
        compiler_params=pltpu.CompilerParams(
            dimension_semantics=("arbitrary",),
            vmem_limit_bytes=vmem_limit),
        cost_estimate=cost,
    )(*inputs)
    return out2.reshape(B, L, Dout)


# ----------------------------------------------------------------------------
# Parameter init (deterministic, synthetic).  Matmul weights in bf16 (MXU),
# biases / LayerNorm params in f32.
# ----------------------------------------------------------------------------
def init_params(key, base_dims, base_heads, stage_layers, stage_count, K):
    params = []
    scale = 0.02
    for s in range(stage_count):
        D = base_dims * (2 ** s)
        dff = 4 * D
        layers = []
        for _ in range(stage_layers):
            key, k0, k1, k2, k3 = jax.random.split(key, 5)
            layers.append(dict(
                wqkv_t=(jax.random.normal(k0, (D, 3 * D), jnp.float32) * scale
                        ).astype(jnp.bfloat16),
                bqkv=jnp.zeros((1, 3 * D), jnp.float32),
                wo_t=(jax.random.normal(k1, (D, D), jnp.float32) * scale
                      ).astype(jnp.bfloat16),
                bo=jnp.zeros((1, D), jnp.float32),
                ln1g=jnp.ones((1, D), jnp.float32),
                ln1b=jnp.zeros((1, D), jnp.float32),
                w1_t=(jax.random.normal(k2, (D, dff), jnp.float32) * scale
                      ).astype(jnp.bfloat16),
                b1=jnp.zeros((1, dff), jnp.float32),
                w2_t=(jax.random.normal(k3, (dff, D), jnp.float32) * scale
                      ).astype(jnp.bfloat16),
                b2=jnp.zeros((1, D), jnp.float32),
                ln2g=jnp.ones((1, D), jnp.float32),
                ln2b=jnp.zeros((1, D), jnp.float32),
            ))
        stage = dict(layers=layers)
        if s > 0:
            Cout = D // 2
            key, kc, kb = jax.random.split(key, 3)
            wconv = jax.random.normal(kc, (D, Cout, K), jnp.float32) * scale  # (Cin,Cout,K)
            stage["post"] = dict(
                lng=jnp.ones((1, D), jnp.float32),
                lnb=jnp.zeros((1, D), jnp.float32),
                # W2d[ci, k*Cout + co] = wconv[ci, co, k]
                w2d=jnp.transpose(wconv, (0, 2, 1)).reshape(D, K * Cout
                                                            ).astype(jnp.bfloat16),
                bias=jnp.tile(jax.random.normal(kb, (1, Cout), jnp.float32) * scale,
                              (1, K)),
            )
        params.append(stage)
    return params


# ----------------------------------------------------------------------------
# Forward pass (stages processed deep -> shallow, like the PyTorch module).
# The residual add is fused into the first layer of a stage; the stage-final
# LN/ReLU/ConvTranspose1d is fused into the last layer of the stage.
# ----------------------------------------------------------------------------
def transformer_neck_forward(encoder_features, params, base_heads, K):
    stage_count = len(params)
    data = None
    for i in reversed(range(stage_count)):
        feat = encoder_features[i]
        residual = data                              # None for the deepest stage
        layers = params[i]["layers"]
        post = params[i].get("post")
        nheads = base_heads * (2 ** i)

        x = feat
        for li, lp in enumerate(layers):
            fuse_res = (li == 0) and (residual is not None)
            fuse_p = (li == len(layers) - 1) and (post is not None)
            final_out = (i == 0) and (li == len(layers) - 1)
            x = pallas_transformer_layer(
                x, lp, nheads,
                residual=residual if fuse_res else None,
                post=post if fuse_p else None,
                out_dtype=jnp.float32 if final_out else jnp.bfloat16)
        if post is not None:
            # (B, L, K*Cout) -> (B, L*K, Cout): pure contiguity-preserving reshape.
            Bx, Lx, KC = x.shape
            x = x.reshape(Bx, Lx * K, KC // K)
        data = x
    return data


# ----------------------------------------------------------------------------
if __name__ == "__main__":
    # Small synthetic config (module defaults are base_dims=256, stage_count=4).
    base_dims, base_heads = 32, 2
    stage_layers, stage_count, K = 2, 3, 4
    B, L0 = 2, 128

    key = jax.random.PRNGKey(0)
    kf, kp = jax.random.split(key)

    encoder_features = []
    for s in range(stage_count):
        D = base_dims * (2 ** s)
        L = L0 // (K ** s)
        kf, ks = jax.random.split(kf)
        encoder_features.append(jax.random.normal(ks, (B, L, D), jnp.float32))

    params = init_params(kp, base_dims, base_heads, stage_layers, stage_count, K)

    out = transformer_neck_forward(encoder_features, params, base_heads, K)
    out = jax.block_until_ready(out)
    assert out.shape == (B, L0, base_dims), out.shape
    assert bool(jnp.all(jnp.isfinite(out)))
    print("KERNEL_OK")
</pallas_src>

<mosaic_0001>
module attributes {stable_mosaic.version = 11 : i64} {
  func.func @_k(%arg0: i32, %arg1: memref<8x128xf32, #tpu.memory_space<vmem>>, %arg2: memref<8x128xf32, #tpu.memory_space<vmem>>) attributes {dimension_semantics = [#tpu.dimension_semantics<arbitrary>], iteration_bounds = array<i64: 2>, scalar_prefetch = 0 : i64, scratch_operands = 0 : i64, tpu.core_type = #tpu.core_type<tc>, window_params = [{pipeline_mode = #tpu.pipeline_mode<synchronous>, transform_indices = @transform_0, window_bounds = array<i64: 8, 128>}, {pipeline_mode = #tpu.pipeline_mode<synchronous>, transform_indices = @transform_1, window_bounds = array<i64: 8, 128>}]} {
    %c0 = arith.constant 0 : index
    %c0_0 = arith.constant 0 : index
    %0 = vector.load %arg1[%c0, %c0_0] : memref<8x128xf32, #tpu.memory_space<vmem>>, vector<8x128xf32>
    %cst = arith.constant 1.000000e+00 : f32
    %1 = vector.broadcast %cst : f32 to vector<8x128xf32>
    %2 = arith.addf %0, %1 : vector<8x128xf32>
    %c0_1 = arith.constant 0 : index
    %c0_2 = arith.constant 0 : index
    %3 = vector.load %arg2[%c0_1, %c0_2] : memref<8x128xf32, #tpu.memory_space<vmem>>, vector<8x128xf32>
    tpu.vector_store %arg2[%c0_1, %c0_2], %2 {strides = array<i32>} : memref<8x128xf32, #tpu.memory_space<vmem>>, vector<8x128xf32>,
    return
  }
  func.func @transform_0(%arg0: i32) -> (i32, i32) {
    %c0_i32 = arith.constant 0 : i32
    %c0_i32_0 = arith.constant 0 : i32
    %c0_i32_1 = arith.constant 0 : i32
    return %c0_i32, %c0_i32_0 : i32, i32
  }
  func.func @transform_1(%arg0: i32) -> (i32, i32) {
    %c0_i32 = arith.constant 0 : i32
    %c0_i32_0 = arith.constant 0 : i32
    %c0_i32_1 = arith.constant 0 : i32
    return %c0_i32, %c0_i32_0 : i32, i32
  }
}

module attributes {stable_mosaic.version = 11 : i64} {
  func.func @transformer_layer_kernel(%arg0: i32, %arg1: memref<16x128xbf16, #tpu.memory_space<vmem>>, %arg2: memref<128x384xbf16, #tpu.memory_space<vmem>>, %arg3: memref<1x384xf32, #tpu.memory_space<vmem>>, %arg4: memref<128x128xbf16, #tpu.memory_space<vmem>>, %arg5: memref<1x128xf32, #tpu.memory_space<vmem>>, %arg6: memref<1x128xf32, #tpu.memory_space<vmem>>, %arg7: memref<1x128xf32, #tpu.memory_space<vmem>>, %arg8: memref<128x512xbf16, #tpu.memory_space<vmem>>, %arg9: memref<1x512xf32, #tpu.memory_space<vmem>>, %arg10: memref<512x128xbf16, #tpu.memory_space<vmem>>, %arg11: memref<1x128xf32, #tpu.memory_space<vmem>>, %arg12: memref<1x128xf32, #tpu.memory_space<vmem>>, %arg13: memref<1x128xf32, #tpu.memory_space<vmem>>, %arg14: memref<16x128xbf16, #tpu.memory_space<vmem>>, %arg15: memref<16x8x16xbf16, #tpu.memory_space<vmem>>, %arg16: memref<16x8x16xbf16, #tpu.memory_space<vmem>>, %arg17: memref<16x8x16xbf16, #tpu.memory_space<vmem>>, %arg18: memref<16x128xbf16, #tpu.memory_space<vmem>>, %arg19: memref<16x128xf32, #tpu.memory_space<vmem>>, %arg20: memref<16x128xbf16, #tpu.memory_space<vmem>>, %arg21: memref<16x128xf32, #tpu.memory_space<vmem>>) attributes {dimension_semantics = [#tpu.dimension_semantics<arbitrary>], iteration_bounds = array<i64: 1>, scalar_prefetch = 0 : i64, scratch_operands = 7 : i64, tpu.core_type = #tpu.core_type<tc>, window_params = [{pipeline_mode = #tpu.pipeline_mode<synchronous>, transform_indices = @transform_0, window_bounds = array<i64: 16, 128>}, {pipeline_mode = #tpu.pipeline_mode<synchronous>, transform_indices = @transform_1, window_bounds = array<i64: 128, 384>}, {pipeline_mode = #tpu.pipeline_mode<synchronous>, transform_indices = @transform_2, window_bounds = array<i64: 1, 384>}, {pipeline_mode = #tpu.pipeline_mode<synchronous>, transform_indices = @transform_3, window_bounds = array<i64: 128, 128>}, {pipeline_mode = #tpu.pipeline_mode<synchronous>, transform_indices = @transform_4, window_bounds = array<i64: 1, 128>}, {pipeline_mode = #tpu.pipeline_mode<synchronous>, transform_indices = @transform_5, window_bounds = array<i64: 1, 128>}, {pipeline_mode = #tpu.pipeline_mode<synchronous>, transform_indices = @transform_6, window_bounds = array<i64: 1, 128>}, {transform_indices = @transform_7, window_bounds = array<i64: 128, 512>}, {transform_indices = @transform_8, window_bounds = array<i64: 1, 512>}, {transform_indices = @transform_9, window_bounds = array<i64: 512, 128>}, {pipeline_mode = #tpu.pipeline_mode<synchronous>, transform_indices = @transform_10, window_bounds = array<i64: 1, 128>}, {pipeline_mode = #tpu.pipeline_mode<synchronous>, transform_indices = @transform_11, window_bounds = array<i64: 1, 128>}, {pipeline_mode = #tpu.pipeline_mode<synchronous>, transform_indices = @transform_12, window_bounds = array<i64: 1, 128>}, {pipeline_mode = #tpu.pipeline_mode<synchronous>, transform_indices = @transform_13, window_bounds = array<i64: 16, 128>}]} {
    %c0_i32 = arith.constant 0 : i32
    %0 = arith.cmpi eq, %arg0, %c0_i32 : i32
    %1 = arith.extui %0 : i1 to i32
    %c0_i32_0 = arith.constant 0 : i32
    %2 = arith.cmpi ne, %1, %c0_i32_0 : i32
    scf.if %2 {
      %c0_16 = arith.constant 0 : index
      %c0_17 = arith.constant 0 : index
      %20 = vector.load %arg1[%c0_16, %c0_17] : memref<16x128xbf16, #tpu.memory_space<vmem>>, vector<16x128xbf16>
      %21 = arith.extf %20 : vector<16x128xbf16> to vector<16x128xf32>
      %22 = arith.truncf %21 : vector<16x128xf32> to vector<16x128xbf16>
      %c0_18 = arith.constant 0 : index
      %c0_19 = arith.constant 0 : index
      %23 = vector.load %arg2[%c0_18, %c0_19] : memref<128x384xbf16, #tpu.memory_space<vmem>>, vector<128x384xbf16>
      %cst_20 = arith.constant dense<0.000000e+00> : vector<16x384xf32>
      %24 = tpu.matmul %22, %23, %cst_20 {dimension_numbers = #tpu.dot_dimension_numbers<[1], [0], [0], [1], [0, 0, 1, 1], [], []>} : vector<16x128xbf16>, vector<128x384xbf16>, vector<16x384xf32> -> vector<16x384xf32>
      %c0_21 = arith.constant 0 : index
      %c0_22 = arith.constant 0 : index
      %25 = vector.load %arg3[%c0_21, %c0_22] : memref<1x384xf32, #tpu.memory_space<vmem>>, vector<1x384xf32>
      %26 = vector.broadcast %25 : vector<1x384xf32> to vector<16x384xf32>
      %27 = arith.addf %24, %26 : vector<16x384xf32>
      %28 = arith.truncf %27 : vector<16x384xf32> to vector<16x384xbf16>
      %29 = vector.extract_strided_slice %28 {offsets = [0, 0], sizes = [16, 16], strides = [1, 1]} : vector<16x384xbf16> to vector<16x16xbf16>
      %30 = vector.extract_strided_slice %28 {offsets = [0, 128], sizes = [16, 16], strides = [1, 1]} : vector<16x384xbf16> to vector<16x16xbf16>
      %31 = vector.extract_strided_slice %28 {offsets = [0, 256], sizes = [16, 16], strides = [1, 1]} : vector<16x384xbf16> to vector<16x16xbf16>
      %32 = vector.extract_strided_slice %29 {offsets = [0, 0], sizes = [8, 16], strides = [1, 1]} : vector<16x16xbf16> to vector<8x16xbf16>
      %c0_23 = arith.constant 0 : index
      %c0_24 = arith.constant 0 : index
      %c0_25 = arith.constant 0 : index
      %33 = vector.load %arg15[%c0_23, %c0_24, %c0_25] : memref<16x8x16xbf16, #tpu.memory_space<vmem>>, vector<1x8x16xbf16>
      %34 = vector.shape_cast %33 : vector<1x8x16xbf16> to vector<8x16xbf16>
      %35 = vector.shape_cast %32 : vector<8x16xbf16> to vector<1x8x16xbf16>
      tpu.vector_store %arg15[%c0_23, %c0_24, %c0_25], %35 {strides = array<i32>} : memref<16x8x16xbf16, #tpu.memory_space<vmem>>, vector<1x8x16xbf16>,
      %36 = vector.extract_strided_slice %30 {offsets = [0, 0], sizes = [8, 16], strides = [1, 1]} : vector<16x16xbf16> to vector<8x16xbf16>
      %c0_26 = arith.constant 0 : index
      %c0_27 = arith.constant 0 : index
      %c0_28 = arith.constant 0 : index
      %37 = vector.load %arg16[%c0_26, %c0_27, %c0_28] : memref<16x8x16xbf16, #tpu.memory_space<vmem>>, vector<1x8x16xbf16>
      %38 = vector.shape_cast %37 : vector<1x8x16xbf16> to vector<8x16xbf16>
      %39 = vector.shape_cast %36 : vector<8x16xbf16> to vector<1x8x16xbf16>
      tpu.vector_store %arg16[%c0_26, %c0_27, %c0_28], %39 {strides = array<i32>} : memref<16x8x16xbf16, #tpu.memory_space<vmem>>, vector<1x8x16xbf16>,
      %40 = vector.extract_strided_slice %31 {offsets = [0, 0], sizes = [8, 16], strides = [1, 1]} : vector<16x16xbf16> to vector<8x16xbf16>
      %c0_29 = arith.constant 0 : index
      %c0_30 = arith.constant 0 : index
      %c0_31 = arith.constant 0 : index
      %41 = vector.load %arg17[%c0_29, %c0_30, %c0_31] : memref<16x8x16xbf16, #tpu.memory_space<vmem>>, vector<1x8x16xbf16>
      %42 = vector.shape_cast %41 : vector<1x8x16xbf16> to vector<8x16xbf16>
      %43 = vector.shape_cast %40 : vector<8x16xbf16> to vector<1x8x16xbf16>
      tpu.vector_store %arg17[%c0_29, %c0_30, %c0_31], %43 {strides = array<i32>} : memref<16x8x16xbf16, #tpu.memory_space<vmem>>, vector<1x8x16xbf16>,
      %44 = vector.extract_strided_slice %29 {offsets = [8, 0], sizes = [8, 16], strides = [1, 1]} : vector<16x16xbf16> to vector<8x16xbf16>
      %c1 = arith.constant 1 : index
      %c0_32 = arith.constant 0 : index
      %c0_33 = arith.constant 0 : index
      %45 = vector.load %arg15[%c1, %c0_32, %c0_33] : memref<16x8x16xbf16, #tpu.memory_space<vmem>>, vector<1x8x16xbf16>
      %46 = vector.shape_cast %45 : vector<1x8x16xbf16> to vector<8x16xbf16>
      %47 = vector.shape_cast %44 : vector<8x16xbf16> to vector<1x8x16xbf16>
      tpu.vector_store %arg15[%c1, %c0_32, %c0_33], %47 {strides = array<i32>} : memref<16x8x16xbf16, #tpu.memory_space<vmem>>, vector<1x8x16xbf16>,
      %48 = vector.extract_strided_slice %30 {offsets = [8, 0], sizes = [8, 16], strides = [1, 1]} : vector<16x16xbf16> to vector<8x16xbf16>
      %c1_34 = arith.constant 1 : index
      %c0_35 = arith.constant 0 : index
      %c0_36 = arith.constant 0 : index
      %49 = vector.load %arg16[%c1_34, %c0_35, %c0_36] : memref<16x8x16xbf16, #tpu.memory_space<vmem>>, vector<1x8x16xbf16>
      %50 = vector.shape_cast %49 : vector<1x8x16xbf16> to vector<8x16xbf16>
      %51 = vector.shape_cast %48 : vector<8x16xbf16> to vector<1x8x16xbf16>
      tpu.vector_store %arg16[%c1_34, %c0_35, %c0_36], %51 {strides = array<i32>} : memref<16x8x16xbf16, #tpu.memory_space<vmem>>, vector<1x8x16xbf16>,
      %52 = vector.extract_strided_slice %31 {offsets = [8, 0], sizes = [8, 16], strides = [1, 1]} : vector<16x16xbf16> to vector<8x16xbf16>
      %c1_37 = arith.constant 1 : index
      %c0_38 = arith.constant 0 : index
      %c0_39 = arith.constant 0 : index
      %53 = vector.load %arg17[%c1_37, %c0_38, %c0_39] : memref<16x8x16xbf16, #tpu.memory_space<vmem>>, vector<1x8x16xbf16>
      %54 = vector.shape_cast %53 : vector<1x8x16xbf16> to vector<8x16xbf16>
      %55 = vector.shape_cast %52 : vector<8x16xbf16> to vector<1x8x16xbf16>
      tpu.vector_store %arg17[%c1_37, %c0_38, %c0_39], %55 {strides = array<i32>} : memref<16x8x16xbf16, #tpu.memory_space<vmem>>, vector<1x8x16xbf16>,
      %56 = vector.extract_strided_slice %28 {offsets = [0, 16], sizes = [16, 16], strides = [1, 1]} : vector<16x384xbf16> to vector<16x16xbf16>
      %57 = vector.extract_strided_slice %28 {offsets = [0, 144], sizes = [16, 16], strides = [1, 1]} : vector<16x384xbf16> to vector<16x16xbf16>
      %58 = vector.extract_strided_slice %28 {offsets = [0, 272], sizes = [16, 16], strides = [1, 1]} : vector<16x384xbf16> to vector<16x16xbf16>
      %59 = vector.extract_strided_slice %56 {offsets = [0, 0], sizes = [8, 16], strides = [1, 1]} : vector<16x16xbf16> to vector<8x16xbf16>
      %c2 = arith.constant 2 : index
      %c0_40 = arith.constant 0 : index
      %c0_41 = arith.constant 0 : index
      %60 = vector.load %arg15[%c2, %c0_40, %c0_41] : memref<16x8x16xbf16, #tpu.memory_space<vmem>>, vector<1x8x16xbf16>
      %61 = vector.shape_cast %60 : vector<1x8x16xbf16> to vector<8x16xbf16>
      %62 = vector.shape_cast %59 : vector<8x16xbf16> to vector<1x8x16xbf16>
      tpu.vector_store %arg15[%c2, %c0_40, %c0_41], %62 {strides = array<i32>} : memref<16x8x16xbf16, #tpu.memory_space<vmem>>, vector<1x8x16xbf16>,
      %63 = vector.extract_strided_slice %57 {offsets = [0, 0], sizes = [8, 16], strides = [1, 1]} : vector<16x16xbf16> to vector<8x16xbf16>
      %c2_42 = arith.constant 2 : index
      %c0_43 = arith.constant 0 : index
      %c0_44 = arith.constant 0 : index
      %64 = vector.load %arg16[%c2_42, %c0_43, %c0_44] : memref<16x8x16xbf16, #tpu.memory_space<vmem>>, vector<1x8x16xbf16>
      %65 = vector.shape_cast %64 : vector<1x8x16xbf16> to vector<8x16xbf16>
      %66 = vector.shape_cast %63 : vector<8x16xbf16> to vector<1x8x16xbf16>
      tpu.vector_store %arg16[%c2_42, %c0_43, %c0_44], %66 {strides = array<i32>} : memref<16x8x16xbf16, #tpu.memory_space<vmem>>, vector<1x8x16xbf16>,
      %67 = vector.extract_strided_slice %58 {offsets = [0, 0], sizes = [8, 16], strides = [1, 1]} : vector<16x16xbf16> to vector<8x16xbf16>
      %c2_45 = arith.constant 2 : index
      %c0_46 = arith.constant 0 : index
      %c0_47 = arith.constant 0 : index
      %68 = vector.load %arg17[%c2_45, %c0_46, %c0_47] : memref<16x8x16xbf16, #tpu.memory_space<vmem>>, vector<1x8x16xbf16>
      %69 = vector.shape_cast %68 : vector<1x8x16xbf16> to vector<8x16xbf16>
      %70 = vector.shape_cast %67 : vector<8x16xbf16> to vector<1x8x16xbf16>
      tpu.vector_store %arg17[%c2_45, %c0_46, %c0_47], %70 {strides = array<i32>} : memref<16x8x16xbf16, #tpu.memory_space<vmem>>, vector<1x8x16xbf16>,
      %71 = vector.extract_strided_slice %56 {offsets = [8, 0], sizes = [8, 16], strides = [1, 1]} : vector<16x16xbf16> to vector<8x16xbf16>
      %c3 = arith.constant 3 : index
      %c0_48 = arith.constant 0 : index
      %c0_49 = arith.constant 0 : index
      %72 = vector.load %arg15[%c3, %c0_48, %c0_49] : memref<16x8x16xbf16, #tpu.memory_space<vmem>>, vector<1x8x16xbf16>
      %73 = vector.shape_cast %72 : vector<1x8x16xbf16> to vector<8x16xbf16>
      %74 = vector.shape_cast %71 : vector<8x16xbf16> to vector<1x8x16xbf16>
      tpu.vector_store %arg15[%c3, %c0_48, %c0_49], %74 {strides = array<i32>} : memref<16x8x16xbf16, #tpu.memory_space<vmem>>, vector<1x8x16xbf16>,
      %75 = vector.extract_strided_slice %57 {offsets = [8, 0], sizes = [8, 16], strides = [1, 1]} : vector<16x16xbf16> to vector<8x16xbf16>
      %c3_50 = arith.constant 3 : index
      %c0_51 = arith.constant 0 : index
      %c0_52 = arith.constant 0 : index
      %76 = vector.load %arg16[%c3_50, %c0_51, %c0_52] : memref<16x8x16xbf16, #tpu.memory_space<vmem>>, vector<1x8x16xbf16>
      %77 = vector.shape_cast %76 : vector<1x8x16xbf16> to vector<8x16xbf16>
      %78 = vector.shape_cast %75 : vector<8x16xbf16> to vector<1x8x16xbf16>
      tpu.vector_store %arg16[%c3_50, %c0_51, %c0_52], %78 {strides = array<i32>} : memref<16x8x16xbf16, #tpu.memory_space<vmem>>, vector<1x8x16xbf16>,
      %79 = vector.extract_strided_slice %58 {offsets = [8, 0], sizes = [8, 16], strides = [1, 1]} : vector<16x16xbf16> to vector<8x16xbf16>
      %c3_53 = arith.constant 3 : index
      %c0_54 = arith.constant 0 : index
      %c0_55 = arith.constant 0 : index
      %80 = vector.load %arg17[%c3_53, %c0_54, %c0_55] : memref<16x8x16xbf16, #tpu.memory_space<vmem>>, vector<1x8x16xbf16>
      %81 = vector.shape_cast %80 : vector<1x8x16xbf16> to vector<8x16xbf16>
      %82 = vector.shape_cast %79 : vector<8x16xbf16> to vector<1x8x16xbf16>
      tpu.vector_store %arg17[%c3_53, %c0_54, %c0_55], %82 {strides = array<i32>} : memref<16x8x16xbf16, #tpu.memory_space<vmem>>, vector<1x8x16xbf16>,
      %83 = vector.extract_strided_slice %28 {offsets = [0, 32], sizes = [16, 16], strides = [1, 1]} : vector<16x384xbf16> to vector<16x16xbf16>
      %84 = vector.extract_strided_slice %28 {offsets = [0, 160], sizes = [16, 16], strides = [1, 1]} : vector<16x384xbf16> to vector<16x16xbf16>
      %85 = vector.extract_strided_slice %28 {offsets = [0, 288], sizes = [16, 16], strides = [1, 1]} : vector<16x384xbf16> to vector<16x16xbf16>
      %86 = vector.extract_strided_slice %83 {offsets = [0, 0], sizes = [8, 16], strides = [1, 1]} : vector<16x16xbf16> to vector<8x16xbf16>
      %c4 = arith.constant 4 : index
      %c0_56 = arith.constant 0 : index
      %c0_57 = arith.constant 0 : index
      %87 = vector.load %arg15[%c4, %c0_56, %c0_57] : memref<16x8x16xbf16, #tpu.memory_space<vmem>>, vector<1x8x16xbf16>
      %88 = vector.shape_cast %87 : vector<1x8x16xbf16> to vector<8x16xbf16>
      %89 = vector.shape_cast %86 : vector<8x16xbf16> to vector<1x8x16xbf16>
      tpu.vector_store %arg15[%c4, %c0_56, %c0_57], %89 {strides = array<i32>} : memref<16x8x16xbf16, #tpu.memory_space<vmem>>, vector<1x8x16xbf16>,
      %90 = vector.extract_strided_slice %84 {offsets = [0, 0], sizes = [8, 16], strides = [1, 1]} : vector<16x16xbf16> to vector<8x16xbf16>
      %c4_58 = arith.constant 4 : index
      %c0_59 = arith.constant 0 : index
      %c0_60 = arith.constant 0 : index
      %91 = vector.load %arg16[%c4_58, %c0_59, %c0_60] : memref<16x8x16xbf16, #tpu.memory_space<vmem>>, vector<1x8x16xbf16>
      %92 = vector.shape_cast %91 : vector<1x8x16xbf16> to vector<8x16xbf16>
      %93 = vector.shape_cast %90 : vector<8x16xbf16> to vector<1x8x16xbf16>
      tpu.vector_store %arg16[%c4_58, %c0_59, %c0_60], %93 {strides = array<i32>} : memref<16x8x16xbf16, #tpu.memory_space<vmem>>, vector<1x8x16xbf16>,
      %94 = vector.extract_strided_slice %85 {offsets = [0, 0], sizes = [8, 16], strides = [1, 1]} : vector<16x16xbf16> to vector<8x16xbf16>
      %c4_61 = arith.constant 4 : index
      %c0_62 = arith.constant 0 : index
      %c0_63 = arith.constant 0 : index
      %95 = vector.load %arg17[%c4_61, %c0_62, %c0_63] : memref<16x8x16xbf16, #tpu.memory_space<vmem>>, vector<1x8x16xbf16>
      %96 = vector.shape_cast %95 : vector<1x8x16xbf16> to vector<8x16xbf16>
      %97 = vector.shape_cast %94 : vector<8x16xbf16> to vector<1x8x16xbf16>
      tpu.vector_store %arg17[%c4_61, %c0_62, %c0_63], %97 {strides = array<i32>} : memref<16x8x16xbf16, #tpu.memory_space<vmem>>, vector<1x8x16xbf16>,
      %98 = vector.extract_strided_slice %83 {offsets = [8, 0], sizes = [8, 16], strides = [1, 1]} : vector<16x16xbf16> to vector<8x16xbf16>
      %c5 = arith.constant 5 : index
      %c0_64 = arith.constant 0 : index
      %c0_65 = arith.constant 0 : index
      %99 = vector.load %arg15[%c5, %c0_64, %c0_65] : memref<16x8x16xbf16, #tpu.memory_space<vmem>>, vector<1x8x16xbf16>
      %100 = vector.shape_cast %99 : vector<1x8x16xbf16> to vector<8x16xbf16>
      %101 = vector.shape_cast %98 : vector<8x16xbf16> to vector<1x8x16xbf16>
      tpu.vector_store %arg15[%c5, %c0_64, %c0_65], %101 {strides = array<i32>} : memref<16x8x16xbf16, #tpu.memory_space<vmem>>, vector<1x8x16xbf16>,
      %102 = vector.extract_strided_slice %84 {offsets = [8, 0], sizes = [8, 16], strides = [1, 1]} : vector<16x16xbf16> to vector<8x16xbf16>
      %c5_66 = arith.constant 5 : index
      %c0_67 = arith.constant 0 : index
      %c0_68 = arith.constant 0 : index
      %103 = vector.load %arg16[%c5_66, %c0_67, %c0_68] : memref<16x8x16xbf16, #tpu.memory_space<vmem>>, vector<1x8x16xbf16>
      %104 = vector.shape_cast %103 : vector<1x8x16xbf16> to vector<8x16xbf16>
      %105 = vector.shape_cast %102 : vector<8x16xbf16> to vector<1x8x16xbf16>
      tpu.vector_store %arg16[%c5_66, %c0_67, %c0_68], %105 {strides = array<i32>} : memref<16x8x16xbf16, #tpu.memory_space<vmem>>, vector<1x8x16xbf16>,
      %106 = vector.extract_strided_slice %85 {offsets = [8, 0], sizes = [8, 16], strides = [1, 1]} : vector<16x16xbf16> to vector<8x16xbf16>
      %c5_69 = arith.constant 5 : index
      %c0_70 = arith.constant 0 : index
      %c0_71 = arith.constant 0 : index
      %107 = vector.load %arg17[%c5_69, %c0_70, %c0_71] : memref<16x8x16xbf16, #tpu.memory_space<vmem>>, vector<1x8x16xbf16>
      %108 = vector.shape_cast %107 : vector<1x8x16xbf16> to vector<8x16xbf16>
      %109 = vector.shape_cast %106 : vector<8x16xbf16> to vector<1x8x16xbf16>
      tpu.vector_store %arg17[%c5_69, %c0_70, %c0_71], %109 {strides = array<i32>} : memref<16x8x16xbf16, #tpu.memory_space<vmem>>, vector<1x8x16xbf16>,
      %110 = vector.extract_strided_slice %28 {offsets = [0, 48], sizes = [16, 16], strides = [1, 1]} : vector<16x384xbf16> to vector<16x16xbf16>
      %111 = vector.extract_strided_slice %28 {offsets = [0, 176], sizes = [16, 16], strides = [1, 1]} : vector<16x384xbf16> to vector<16x16xbf16>
      %112 = vector.extract_strided_slice %28 {offsets = [0, 304], sizes = [16, 16], strides = [1, 1]} : vector<16x384xbf16> to vector<16x16xbf16>
      %113 = vector.extract_strided_slice %110 {offsets = [0, 0], sizes = [8, 16], strides = [1, 1]} : vector<16x16xbf16> to vector<8x16xbf16>
      %c6 = arith.constant 6 : index
      %c0_72 = arith.constant 0 : index
      %c0_73 = arith.constant 0 : index
      %114 = vector.load %arg15[%c6, %c0_72, %c0_73] : memref<16x8x16xbf16, #tpu.memory_space<vmem>>, vector<1x8x16xbf16>
      %115 = vector.shape_cast %114 : vector<1x8x16xbf16> to vector<8x16xbf16>
      %116 = vector.shape_cast %113 : vector<8x16xbf16> to vector<1x8x16xbf16>
      tpu.vector_store %arg15[%c6, %c0_72, %c0_73], %116 {strides = array<i32>} : memref<16x8x16xbf16, #tpu.memory_space<vmem>>, vector<1x8x16xbf16>,
      %117 = vector.extract_strided_slice %111 {offsets = [0, 0], sizes = [8, 16], strides = [1, 1]} : vector<16x16xbf16> to vector<8x16xbf16>
      %c6_74 = arith.constant 6 : index
      %c0_75 = arith.constant 0 : index
      %c0_76 = arith.constant 0 : index
      %118 = vector.load %arg16[%c6_74, %c0_75, %c0_76] : memref<16x8x16xbf16, #tpu.memory_space<vmem>>, vector<1x8x16xbf16>
      %119 = vector.shape_cast %118 : vector<1x8x16xbf16> to vector<8x16xbf16>
      %120 = vector.shape_cast %117 : vector<8x16xbf16> to vector<1x8x16xbf16>
      tpu.vector_store %arg16[%c6_74, %c0_75, %c0_76], %120 {strides = array<i32>} : memref<16x8x16xbf16, #tpu.memory_space<vmem>>, vector<1x8x16xbf16>,
      %121 = vector.extract_strided_slice %112 {offsets = [0, 0], sizes = [8, 16], strides = [1, 1]} : vector<16x16xbf16> to vector<8x16xbf16>
      %c6_77 = arith.constant 6 : index
      %c0_78 = arith.constant 0 : index
      %c0_79 = arith.constant 0 : index
      %122 = vector.load %arg17[%c6_77, %c0_78, %c0_79] : memref<16x8x16xbf16, #tpu.memory_space<vmem>>, vector<1x8x16xbf16>
      %123 = vector.shape_cast %122 : vector<1x8x16xbf16> to vector<8x16xbf16>
      %124 = vector.shape_cast %121 : vector<8x16xbf16> to vector<1x8x16xbf16>
      tpu.vector_store %arg17[%c6_77, %c0_78, %c0_79], %124 {strides = array<i32>} : memref<16x8x16xbf16, #tpu.memory_space<vmem>>, vector<1x8x16xbf16>,
      %125 = vector.extract_strided_slice %110 {offsets = [8, 0], sizes = [8, 16], strides = [1, 1]} : vector<16x16xbf16> to vector<8x16xbf16>
      %c7 = arith.constant 7 : index
      %c0_80 = arith.constant 0 : index
      %c0_81 = arith.constant 0 : index
      %126 = vector.load %arg15[%c7, %c0_80, %c0_81] : memref<16x8x16xbf16, #tpu.memory_space<vmem>>, vector<1x8x16xbf16>
      %127 = vector.shape_cast %126 : vector<1x8x16xbf16> to vector<8x16xbf16>
      %128 = vector.shape_cast %125 : vector<8x16xbf16> to vector<1x8x16xbf16>
      tpu.vector_store %arg15[%c7, %c0_80, %c0_81], %128 {strides = array<i32>} : memref<16x8x16xbf16, #tpu.memory_space<vmem>>, vector<1x8x16xbf16>,
      %129 = vector.extract_strided_slice %111 {offsets = [8, 0], sizes = [8, 16], strides = [1, 1]} : vector<16x16xbf16> to vector<8x16xbf16>
      %c7_82 = arith.constant 7 : index
      %c0_83 = arith.constant 0 : index
      %c0_84 = arith.constant 0 : index
      %130 = vector.load %arg16[%c7_82, %c0_83, %c0_84] : memref<16x8x16xbf16, #tpu.memory_space<vmem>>, vector<1x8x16xbf16>
      %131 = vector.shape_cast %130 : vector<1x8x16xbf16> to vector<8x16xbf16>
      %132 = vector.shape_cast %129 : vector<8x16xbf16> to vector<1x8x16xbf16>
      tpu.vector_store %arg16[%c7_82, %c0_83, %c0_84], %132 {strides = array<i32>} : memref<16x8x16xbf16, #tpu.memory_space<vmem>>, vector<1x8x16xbf16>,
      %133 = vector.extract_strided_slice %112 {offsets = [8, 0], sizes = [8, 16], strides = [1, 1]} : vector<16x16xbf16> to vector<8x16xbf16>
      %c7_85 = arith.constant 7 : index
      %c0_86 = arith.constant 0 : index
      %c0_87 = arith.constant 0 : index
      %134 = vector.load %arg17[%c7_85, %c0_86, %c0_87] : memref<16x8x16xbf16, #tpu.memory_space<vmem>>, vector<1x8x16xbf16>
      %135 = vector.shape_cast %134 : vector<1x8x16xbf16> to vector<8x16xbf16>
      %136 = vector.shape_cast %133 : vector<8x16xbf16> to vector<1x8x16xbf16>
      tpu.vector_store %arg17[%c7_85, %c0_86, %c0_87], %136 {strides = array<i32>} : memref<16x8x16xbf16, #tpu.memory_space<vmem>>, vector<1x8x16xbf16>,
      %137 = vector.extract_strided_slice %28 {offsets = [0, 64], sizes = [16, 16], strides = [1, 1]} : vector<16x384xbf16> to vector<16x16xbf16>
      %138 = vector.extract_strided_slice %28 {offsets = [0, 192], sizes = [16, 16], strides = [1, 1]} : vector<16x384xbf16> to vector<16x16xbf16>
      %139 = vector.extract_strided_slice %28 {offsets = [0, 320], sizes = [16, 16], strides = [1, 1]} : vector<16x384xbf16> to vector<16x16xbf16>
      %140 = vector.extract_strided_slice %137 {offsets = [0, 0], sizes = [8, 16], strides = [1, 1]} : vector<16x16xbf16> to vector<8x16xbf16>
      %c8 = arith.constant 8 : index
      %c0_88 = arith.constant 0 : index
      %c0_89 = arith.constant 0 : index
      %141 = vector.load %arg15[%c8, %c0_88, %c0_89] : memref<16x8x16xbf16, #tpu.memory_space<vmem>>, vector<1x8x16xbf16>
      %142 = vector.shape_cast %141 : vector<1x8x16xbf16> to vector<8x16xbf16>
      %143 = vector.shape_cast %140 : vector<8x16xbf16> to vector<1x8x16xbf16>
      tpu.vector_store %arg15[%c8, %c0_88, %c0_89], %143 {strides = array<i32>} : memref<16x8x16xbf16, #tpu.memory_space<vmem>>, vector<1x8x16xbf16>,
      %144 = vector.extract_strided_slice %138 {offsets = [0, 0], sizes = [8, 16], strides = [1, 1]} : vector<16x16xbf16> to vector<8x16xbf16>
      %c8_90 = arith.constant 8 : index
      %c0_91 = arith.constant 0 : index
      %c0_92 = arith.constant 0 : index
      %145 = vector.load %arg16[%c8_90, %c0_91, %c0_92] : memref<16x8x16xbf16, #tpu.memory_space<vmem>>, vector<1x8x16xbf16>
      %146 = vector.shape_cast %145 : vector<1x8x16xbf16> to vector<8x16xbf16>
      %147 = vector.shape_cast %144 : vector<8x16xbf16> to vector<1x8x16xbf16>
      tpu.vector_store %arg16[%c8_90, %c0_91, %c0_92], %147 {strides = array<i32>} : memref<16x8x16xbf16, #tpu.memory_space<vmem>>, vector<1x8x16xbf16>,
      %148 = vector.extract_strided_slice %139 {offsets = [0, 0], sizes = [8, 16], strides = [1, 1]} : vector<16x16xbf16> to vector<8x16xbf16>
      %c8_93 = arith.constant 8 : index
      %c0_94 = arith.constant 0 : index
      %c0_95 = arith.constant 0 : index
      %149 = vector.load %arg17[%c8_93, %c0_94, %c0_95] : memref<16x8x16xbf16, #tpu.memory_space<vmem>>, vector<1x8x16xbf16>
      %150 = vector.shape_cast %149 : vector<1x8x16xbf16> to vector<8x16xbf16>
      %151 = vector.shape_cast %148 : vector<8x16xbf16> to vector<1x8x16xbf16>
      tpu.vector_store %arg17[%c8_93, %c0_94, %c0_95], %151 {strides = array<i32>} : memref<16x8x16xbf16, #tpu.memory_space<vmem>>, vector<1x8x16xbf16>,
      %152 = vector.extract_strided_slice %137 {offsets = [8, 0], sizes = [8, 16], strides = [1, 1]} : vector<16x16xbf16> to vector<8x16xbf16>
      %c9 = arith.constant 9 : index
      %c0_96 = arith.constant 0 : index
      %c0_97 = arith.constant 0 : index
      %153 = vector.load %arg15[%c9, %c0_96, %c0_97] : memref<16x8x16xbf16, #tpu.memory_space<vmem>>, vector<1x8x16xbf16>
      %154 = vector.shape_cast %153 : vector<1x8x16xbf16> to vector<8x16xbf16>
      %155 = vector.shape_cast %152 : vector<8x16xbf16> to vector<1x8x16xbf16>
      tpu.vector_store %arg15[%c9, %c0_96, %c0_97], %155 {strides = array<i32>} : memref<16x8x16xbf16, #tpu.memory_space<vmem>>, vector<1x8x16xbf16>,
      %156 = vector.extract_strided_slice %138 {offsets = [8, 0], sizes = [8, 16], strides = [1, 1]} : vector<16x16xbf16> to vector<8x16xbf16>
      %c9_98 = arith.constant 9 : index
      %c0_99 = arith.constant 0 : index
      %c0_100 = arith.constant 0 : index
      %157 = vector.load %arg16[%c9_98, %c0_99, %c0_100] : memref<16x8x16xbf16, #tpu.memory_space<vmem>>, vector<1x8x16xbf16>
      %158 = vector.shape_cast %157 : vector<1x8x16xbf16> to vector<8x16xbf16>
      %159 = vector.shape_cast %156 : vector<8x16xbf16> to vector<1x8x16xbf16>
      tpu.vector_store %arg16[%c9_98, %c0_99, %c0_100], %159 {strides = array<i32>} : memref<16x8x16xbf16, #tpu.memory_space<vmem>>, vector<1x8x16xbf16>,
      %160 = vector.extract_strided_slice %139 {offsets = [8, 0], sizes = [8, 16], strides = [1, 1]} : vector<16x16xbf16> to vector<8x16xbf16>
      %c9_101 = arith.constant 9 : index
      %c0_102 = arith.constant 0 : index
      %c0_103 = arith.constant 0 : index
      %161 = vector.load %arg17[%c9_101, %c0_102, %c0_103] : memref<16x8x16xbf16, #tpu.memory_space<vmem>>, vector<1x8x16xbf16>
      %162 = vector.shape_cast %161 : vector<1x8x16xbf16> to vector<8x16xbf16>
      %163 = vector.shape_cast %160 : vector<8x16xbf16> to vector<1x8x16xbf16>
      tpu.vector_store %arg17[%c9_101, %c0_102, %c0_103], %163 {strides = array<i32>} : memref<16x8x16xbf16, #tpu.memory_space<vmem>>, vector<1x8x16xbf16>,
      %164 = vector.extract_strided_slice %28 {offsets = [0, 80], sizes = [16, 16], strides = [1, 1]} : vector<16x384xbf16> to vector<16x16xbf16>
      %165 = vector.extract_strided_slice %28 {offsets = [0, 208], sizes = [16, 16], strides = [1, 1]} : vector<16x384xbf16> to vector<16x16xbf16>
      %166 = vector.extract_strided_slice %28 {offsets = [0, 336], sizes = [16, 16], strides = [1, 1]} : vector<16x384xbf16> to vector<16x16xbf16>
      %167 = vector.extract_strided_slice %164 {offsets = [0, 0], sizes = [8, 16], strides = [1, 1]} : vector<16x16xbf16> to vector<8x16xbf16>
      %c10 = arith.constant 10 : index
      %c0_104 = arith.constant 0 : index
      %c0_105 = arith.constant 0 : index
      %168 = vector.load %arg15[%c10, %c0_104, %c0_105] : memref<16x8x16xbf16, #tpu.memory_space<vmem>>, vector<1x8x16xbf16>
      %169 = vector.shape_cast %168 : vector<1x8x16xbf16> to vector<8x16xbf16>
      %170 = vector.shape_cast %167 : vector<8x16xbf16> to vector<1x8x16xbf16>
      tpu.vector_store %arg15[%c10, %c0_104, %c0_105], %170 {strides = array<i32>} : memref<16x8x16xbf16, #tpu.memory_space<vmem>>, vector<1x8x16xbf16>,
      %171 = vector.extract_strided_slice %165 {offsets = [0, 0], sizes = [8, 16], strides = [1, 1]} : vector<16x16xbf16> to vector<8x16xbf16>
      %c10_106 = arith.constant 10 : index
      %c0_107 = arith.constant 0 : index
      %c0_108 = arith.constant 0 : index
      %172 = vector.load %arg16[%c10_106, %c0_107, %c0_108] : memref<16x8x16xbf16, #tpu.memory_space<vmem>>, vector<1x8x16xbf16>
      %173 = vector.shape_cast %172 : vector<1x8x16xbf16> to vector<8x16xbf16>
      %174 = vector.shape_cast %171 : vector<8x16xbf16> to vector<1x8x16xbf16>
      tpu.vector_store %arg16[%c10_106, %c0_107, %c0_108], %174 {strides = array<i32>} : memref<16x8x16xbf16, #tpu.memory_space<vmem>>, vector<1x8x16xbf16>,
      %175 = vector.extract_strided_slice %166 {offsets = [0, 0], sizes = [8, 16], strides = [1, 1]} : vector<16x16xbf16> to vector<8x16xbf16>
      %c10_109 = arith.constant 10 : index
      %c0_110 = arith.constant 0 : index
      %c0_111 = arith.constant 0 : index
      %176 = vector.load %arg17[%c10_109, %c0_110, %c0_111] : memref<16x8x16xbf16, #tpu.memory_space<vmem>>, vector<1x8x16xbf16>
      %177 = vector.shape_cast %176 : vector<1x8x16xbf16> to vector<8x16xbf16>
      %178 = vector.shape_cast %175 : vector<8x16xbf16> to vector<1x8x16xbf16>
      tpu.vector_store %arg17[%c10_109, %c0_110, %c0_111], %178 {strides = array<i32>} : memref<16x8x16xbf16, #tpu.memory_space<vmem>>, vector<1x8x16xbf16>,
      %179 = vector.extract_strided_slice %164 {offsets = [8, 0], sizes = [8, 16], strides = [1, 1]} : vector<16x16xbf16> to vector<8x16xbf16>
      %c11 = arith.constant 11 : index
      %c0_112 = arith.constant 0 : index
      %c0_113 = arith.constant 0 : index
      %180 = vector.load %arg15[%c11, %c0_112, %c0_113] : memref<16x8x16xbf16, #tpu.memory_space<vmem>>, vector<1x8x16xbf16>
      %181 = vector.shape_cast %180 : vector<1x8x16xbf16> to vector<8x16xbf16>
      %182 = vector.shape_cast %179 : vector<8x16xbf16> to vector<1x8x16xbf16>
      tpu.vector_store %arg15[%c11, %c0_112, %c0_113], %182 {strides = array<i32>} : memref<16x8x16xbf16, #tpu.memory_space<vmem>>, vector<1x8x16xbf16>,
      %183 = vector.extract_strided_slice %165 {offsets = [8, 0], sizes = [8, 16], strides = [1, 1]} : vector<16x16xbf16> to vector<8x16xbf16>
      %c11_114 = arith.constant 11 : index
      %c0_115 = arith.constant 0 : index
      %c0_116 = arith.constant 0 : index
      %184 = vector.load %arg16[%c11_114, %c0_115, %c0_116] : memref<16x8x16xbf16, #tpu.memory_space<vmem>>, vector<1x8x16xbf16>
      %185 = vector.shape_cast %184 : vector<1x8x16xbf16> to vector<8x16xbf16>
      %186 = vector.shape_cast %183 : vector<8x16xbf16> to vector<1x8x16xbf16>
      tpu.vector_store %arg16[%c11_114, %c0_115, %c0_116], %186 {strides = array<i32>} : memref<16x8x16xbf16, #tpu.memory_space<vmem>>, vector<1x8x16xbf16>,
      %187 = vector.extract_strided_slice %166 {offsets = [8, 0], sizes = [8, 16], strides = [1, 1]} : vector<16x16xbf16> to vector<8x16xbf16>
      %c11_117 = arith.constant 11 : index
      %c0_118 = arith.constant 0 : index
      %c0_119 = arith.constant 0 : index
      %188 = vector.load %arg17[%c11_117, %c0_118, %c0_119] : memref<16x8x16xbf16, #tpu.memory_space<vmem>>, vector<1x8x16xbf16>
      %189 = vector.shape_cast %188 : vector<1x8x16xbf16> to vector<8x16xbf16>
      %190 = vector.shape_cast %187 : vector<8x16xbf16> to vector<1x8x16xbf16>
      tpu.vector_store %arg17[%c11_117, %c0_118, %c0_119], %190 {strides = array<i32>} : memref<16x8x16xbf16, #tpu.memory_space<vmem>>, vector<1x8x16xbf16>,
      %191 = vector.extract_strided_slice %28 {offsets = [0, 96], sizes = [16, 16], strides = [1, 1]} : vector<16x384xbf16> to vector<16x16xbf16>
      %192 = vector.extract_strided_slice %28 {offsets = [0, 224], sizes = [16, 16], strides = [1, 1]} : vector<16x384xbf16> to vector<16x16xbf16>
      %193 = vector.extract_strided_slice %28 {offsets = [0, 352], sizes = [16, 16], strides = [1, 1]} : vector<16x384xbf16> to vector<16x16xbf16>
      %194 = vector.extract_strided_slice %191 {offsets = [0, 0], sizes = [8, 16], strides = [1, 1]} : vector<16x16xbf16> to vector<8x16xbf16>
      %c12 = arith.constant 12 : index
      %c0_120 = arith.constant 0 : index
      %c0_121 = arith.constant 0 : index
      %195 = vector.load %arg15[%c12, %c0_120, %c0_121] : memref<16x8x16xbf16, #tpu.memory_space<vmem>>, vector<1x8x16xbf16>
      %196 = vector.shape_cast %195 : vector<1x8x16xbf16> to vector<8x16xbf16>
      %197 = vector.shape_cast %194 : vector<8x16xbf16> to vector<1x8x16xbf16>
      tpu.vector_store %arg15[%c12, %c0_120, %c0_121], %197 {strides = array<i32>} : memref<16x8x16xbf16, #tpu.memory_space<vmem>>, vector<1x8x16xbf16>,
      %198 = vector.extract_strided_slice %192 {offsets = [0, 0], sizes = [8, 16], strides = [1, 1]} : vector<16x16xbf16> to vector<8x16xbf16>
      %c12_122 = arith.constant 12 : index
      %c0_123 = arith.constant 0 : index
      %c0_124 = arith.constant 0 : index
      %199 = vector.load %arg16[%c12_122, %c0_123, %c0_124] : memref<16x8x16xbf16, #tpu.memory_space<vmem>>, vector<1x8x16xbf16>
      %200 = vector.shape_cast %199 : vector<1x8x16xbf16> to vector<8x16xbf16>
      %201 = vector.shape_cast %198 : vector<8x16xbf16> to vector<1x8x16xbf16>
      tpu.vector_store %arg16[%c12_122, %c0_123, %c0_124], %201 {strides = array<i32>} : memref<16x8x16xbf16, #tpu.memory_space<vmem>>, vector<1x8x16xbf16>,
      %202 = vector.extract_strided_slice %193 {offsets = [0, 0], sizes = [8, 16], strides = [1, 1]} : vector<16x16xbf16> to vector<8x16xbf16>
      %c12_125 = arith.constant 12 : index
      %c0_126 = arith.constant 0 : index
      %c0_127 = arith.constant 0 : index
      %203 = vector.load %arg17[%c12_125, %c0_126, %c0_127] : memref<16x8x16xbf16, #tpu.memory_space<vmem>>, vector<1x8x16xbf16>
      %204 = vector.shape_cast %203 : vector<1x8x16xbf16> to vector<8x16xbf16>
      %205 = vector.shape_cast %202 : vector<8x16xbf16> to vector<1x8x16xbf16>
      tpu.vector_store %arg17[%c12_125, %c0_126, %c0_127], %205 {strides = array<i32>} : memref<16x8x16xbf16, #tpu.memory_space<vmem>>, vector<1x8x16xbf16>,
      %206 = vector.extract_strided_slice %191 {offsets = [8, 0], sizes = [8, 16], strides = [1, 1]} : vector<16x16xbf16> to vector<8x16xbf16>
      %c13 = arith.constant 13 : index
      %c0_128 = arith.constant 0 : index
      %c0_129 = arith.constant 0 : index
      %207 = vector.load %arg15[%c13, %c0_128, %c0_129] : memref<16x8x16xbf16, #tpu.memory_space<vmem>>, vector<1x8x16xbf16>
      %208 = vector.shape_cast %207 : vector<1x8x16xbf16> to vector<8x16xbf16>
      %209 = vector.shape_cast %206 : vector<8x16xbf16> to vector<1x8x16xbf16>
      tpu.vector_store %arg15[%c13, %c0_128, %c0_129], %209 {strides = array<i32>} : memref<16x8x16xbf16, #tpu.memory_space<vmem>>, vector<1x8x16xbf16>,
      %210 = vector.extract_strided_slice %192 {offsets = [8, 0], sizes = [8, 16], strides = [1, 1]} : vector<16x16xbf16> to vector<8x16xbf16>
      %c13_130 = arith.constant 13 : index
      %c0_131 = arith.constant 0 : index
      %c0_132 = arith.constant 0 : index
      %211 = vector.load %arg16[%c13_130, %c0_131, %c0_132] : memref<16x8x16xbf16, #tpu.memory_space<vmem>>, vector<1x8x16xbf16>
      %212 = vector.shape_cast %211 : vector<1x8x16xbf16> to vector<8x16xbf16>
      %213 = vector.shape_cast %210 : vector<8x16xbf16> to vector<1x8x16xbf16>
      tpu.vector_store %arg16[%c13_130, %c0_131, %c0_132], %213 {strides = array<i32>} : memref<16x8x16xbf16, #tpu.memory_space<vmem>>, vector<1x8x16xbf16>,
      %214 = vector.extract_strided_slice %193 {offsets = [8, 0], sizes = [8, 16], strides = [1, 1]} : vector<16x16xbf16> to vector<8x16xbf16>
      %c13_133 = arith.constant 13 : index
      %c0_134 = arith.constant 0 : index
      %c0_135 = arith.constant 0 : index
      %215 = vector.load %arg17[%c13_133, %c0_134, %c0_135] : memref<16x8x16xbf16, #tpu.memory_space<vmem>>, vector<1x8x16xbf16>
      %216 = vector.shape_cast %215 : vector<1x8x16xbf16> to vector<8x16xbf16>
      %217 = vector.shape_cast %214 : vector<8x16xbf16> to vector<1x8x16xbf16>
      tpu.vector_store %arg17[%c13_133, %c0_134, %c0_135], %217 {strides = array<i32>} : memref<16x8x16xbf16, #tpu.memory_space<vmem>>, vector<1x8x16xbf16>,
      %218 = vector.extract_strided_slice %28 {offsets = [0, 112], sizes = [16, 16], strides = [1, 1]} : vector<16x384xbf16> to vector<16x16xbf16>
      %219 = vector.extract_strided_slice %28 {offsets = [0, 240], sizes = [16, 16], strides = [1, 1]} : vector<16x384xbf16> to vector<16x16xbf16>
      %220 = vector.extract_strided_slice %28 {offsets = [0, 368], sizes = [16, 16], strides = [1, 1]} : vector<16x384xbf16> to vector<16x16xbf16>
      %221 = vector.extract_strided_slice %218 {offsets = [0, 0], sizes = [8, 16], strides = [1, 1]} : vector<16x16xbf16> to vector<8x16xbf16>
      %c14 = arith.constant 14 : index
      %c0_136 = arith.constant 0 : index
      %c0_137 = arith.constant 0 : index
      %222 = vector.load %arg15[%c14, %c0_136, %c0_137] : memref<16x8x16xbf16, #tpu.memory_space<vmem>>, vector<1x8x16xbf16>
      %223 = vector.shape_cast %222 : vector<1x8x16xbf16> to vector<8x16xbf16>
      %224 = vector.shape_cast %221 : vector<8x16xbf16> to vector<1x8x16xbf16>
      tpu.vector_store %arg15[%c14, %c0_136, %c0_137], %224 {strides = array<i32>} : memref<16x8x16xbf16, #tpu.memory_space<vmem>>, vector<1x8x16xbf16>,
      %225 = vector.extract_strided_slice %219 {offsets = [0, 0], sizes = [8, 16], strides = [1, 1]} : vector<16x16xbf16> to vector<8x16xbf16>
      %c14_138 = arith.constant 14 : index
      %c0_139 = arith.constant 0 : index
      %c0_140 = arith.constant 0 : index
      %226 = vector.load %arg16[%c14_138, %c0_139, %c0_140] : memref<16x8x16xbf16, #tpu.memory_space<vmem>>, vector<1x8x16xbf16>
      %227 = vector.shape_cast %226 : vector<1x8x16xbf16> to vector<8x16xbf16>
      %228 = vector.shape_cast %225 : vector<8x16xbf16> to vector<1x8x16xbf16>
      tpu.vector_store %arg16[%c14_138, %c0_139, %c0_140], %228 {strides = array<i32>} : memref<16x8x16xbf16, #tpu.memory_space<vmem>>, vector<1x8x16xbf16>,
      %229 = vector.extract_strided_slice %220 {offsets = [0, 0], sizes = [8, 16], strides = [1, 1]} : vector<16x16xbf16> to vector<8x16xbf16>
      %c14_141 = arith.constant 14 : index
      %c0_142 = arith.constant 0 : index
      %c0_143 = arith.constant 0 : index
      %230 = vector.load %arg17[%c14_141, %c0_142, %c0_143] : memref<16x8x16xbf16, #tpu.memory_space<vmem>>, vector<1x8x16xbf16>
      %231 = vector.shape_cast %230 : vector<1x8x16xbf16> to vector<8x16xbf16>
      %232 = vector.shape_cast %229 : vector<8x16xbf16> to vector<1x8x16xbf16>
      tpu.vector_store %arg17[%c14_141, %c0_142, %c0_143], %232 {strides = array<i32>} : memref<16x8x16xbf16, #tpu.memory_space<vmem>>, vector<1x8x16xbf16>,
      %233 = vector.extract_strided_slice %218 {offsets = [8, 0], sizes = [8, 16], strides = [1, 1]} : vector<16x16xbf16> to vector<8x16xbf16>
      %c15 = arith.constant 15 : index
      %c0_144 = arith.constant 0 : index
      %c0_145 = arith.constant 0 : index
      %234 = vector.load %arg15[%c15, %c0_144, %c0_145] : memref<16x8x16xbf16, #tpu.memory_space<vmem>>, vector<1x8x16xbf16>
      %235 = vector.shape_cast %234 : vector<1x8x16xbf16> to vector<8x16xbf16>
      %236 = vector.shape_cast %233 : vector<8x16xbf16> to vector<1x8x16xbf16>
      tpu.vector_store %arg15[%c15, %c0_144, %c0_145], %236 {strides = array<i32>} : memref<16x8x16xbf16, #tpu.memory_space<vmem>>, vector<1x8x16xbf16>,
      %237 = vector.extract_strided_slice %219 {offsets = [8, 0], sizes = [8, 16], strides = [1, 1]} : vector<16x16xbf16> to vector<8x16xbf16>
      %c15_146 = arith.constant 15 : index
      %c0_147 = arith.constant 0 : index
      %c0_148 = arith.constant 0 : index
      %238 = vector.load %arg16[%c15_146, %c0_147, %c0_148] : memref<16x8x16xbf16, #tpu.memory_space<vmem>>, vector<1x8x16xbf16>
      %239 = vector.shape_cast %238 : vector<1x8x16xbf16> to vector<8x16xbf16>
      %240 = vector.shape_cast %237 : vector<8x16xbf16> to vector<1x8x16xbf16>
      tpu.vector_store %arg16[%c15_146, %c0_147, %c0_148], %240 {strides = array<i32>} : memref<16x8x16xbf16, #tpu.memory_space<vmem>>, vector<1x8x16xbf16>,
      %241 = vector.extract_strided_slice %220 {offsets = [8, 0], sizes = [8, 16], strides = [1, 1]} : vector<16x16xbf16> to vector<8x16xbf16>
      %c15_149 = arith.constant 15 : index
      %c0_150 = arith.constant 0 : index
      %c0_151 = arith.constant 0 : index
      %242 = vector.load %arg17[%c15_149, %c0_150, %c0_151] : memref<16x8x16xbf16, #tpu.memory_space<vmem>>, vector<1x8x16xbf16>
      %243 = vector.shape_cast %242 : vector<1x8x16xbf16> to vector<8x16xbf16>
      %244 = vector.shape_cast %241 : vector<8x16xbf16> to vector<1x8x16xbf16>
      tpu.vector_store %arg17[%c15_149, %c0_150, %c0_151], %244 {strides = array<i32>} : memref<16x8x16xbf16, #tpu.memory_space<vmem>>, vector<1x8x16xbf16>,
      %c0_152 = arith.constant 0 : index
      %c0_153 = arith.constant 0 : index
      %c0_154 = arith.constant 0 : index
      %245 = vector.load %arg15[%c0_152, %c0_153, %c0_154] : memref<16x8x16xbf16, #tpu.memory_space<vmem>>, vector<16x8x16xbf16>
      %c0_155 = arith.constant 0 : index
      %c0_156 = arith.constant 0 : index
      %c0_157 = arith.constant 0 : index
      %246 = vector.load %arg16[%c0_155, %c0_156, %c0_157] : memref<16x8x16xbf16, #tpu.memory_space<vmem>>, vector<16x8x16xbf16>
      %c0_158 = arith.constant 0 : index
      %c0_159 = arith.constant 0 : index
      %c0_160 = arith.constant 0 : index
      %247 = vector.load %arg17[%c0_158, %c0_159, %c0_160] : memref<16x8x16xbf16, #tpu.memory_space<vmem>>, vector<16x8x16xbf16>
      "tpu.trace_start"() <{level = 10 : i32, message = "gqd,gkd->gqk"}> : () -> ()
      %cst_161 = arith.constant dense<0.000000e+00> : vector<16x8x8xf32>
      %248 = tpu.matmul %245, %246, %cst_161 {dimension_numbers = #tpu.dot_dimension_numbers<[2], [2], [1], [1], [0, 0, 0, 1, 1, 1], [0], [0]>} : vector<16x8x16xbf16>, vector<16x8x16xbf16>, vector<16x8x8xf32> -> vector<16x8x8xf32>
      "tpu.trace_stop"() : () -> ()
      %cst_162 = arith.constant 2.500000e-01 : f32
      %249 = vector.broadcast %cst_162 : f32 to vector<16x8x8xf32>
      %250 = arith.mulf %248, %249 : vector<16x8x8xf32>
      %cst_163 = arith.constant dense<0xFF800000> : vector<16x8xf32>
      %251 = vector.multi_reduction <maximumf>, %250, %cst_163 [2] : vector<16x8x8xf32> to vector<16x8xf32>
      %252 = vector.shape_cast %251 : vector<16x8xf32> to vector<16x8x1xf32>
      %253 = vector.broadcast %252 : vector<16x8x1xf32> to vector<16x8x8xf32>
      %254 = arith.subf %250, %253 : vector<16x8x8xf32>
      %255 = math.exp %254 : vector<16x8x8xf32>
      %cst_164 = arith.constant dense<0.000000e+00> : vector<16x8xf32>
      %256 = vector.multi_reduction <add>, %255, %cst_164 [2] : vector<16x8x8xf32> to vector<16x8xf32>
      %257 = vector.shape_cast %256 : vector<16x8xf32> to vector<16x8x1xf32>
      %258 = tpu.reciprocal %257 {approx = true} : vector<16x8x1xf32> -> vector<16x8x1xf32>
      %259 = vector.broadcast %258 : vector<16x8x1xf32> to vector<16x8x8xf32>
      %260 = arith.mulf %255, %259 : vector<16x8x8xf32>
      %261 = arith.truncf %260 : vector<16x8x8xf32> to vector<16x8x8xbf16>
      "tpu.trace_start"() <{level = 10 : i32, message = "gqk,gkd->gqd"}> : () -> ()
      %cst_165 = arith.constant dense<0.000000e+00> : vector<16x8x16xf32>
      %262 = tpu.matmul %261, %247, %cst_165 {dimension_numbers = #tpu.dot_dimension_numbers<[2], [1], [1], [2], [0, 0, 0, 1, 1, 2], [0], [0]>} : vector<16x8x8xbf16>, vector<16x8x16xbf16>, vector<16x8x16xf32> -> vector<16x8x16xf32>
      "tpu.trace_stop"() : () -> ()
      %263 = arith.truncf %262 : vector<16x8x16xf32> to vector<16x8x16xbf16>
      %264 = vector.extract_strided_slice %263 {offsets = [0, 0, 0], sizes = [1, 8, 16], strides = [1, 1, 1]} : vector<16x8x16xbf16> to vector<1x8x16xbf16>
      %265 = vector.shape_cast %264 : vector<1x8x16xbf16> to vector<8x16xbf16>
      %266 = vector.extract_strided_slice %263 {offsets = [2, 0, 0], sizes = [1, 8, 16], strides = [1, 1, 1]} : vector<16x8x16xbf16> to vector<1x8x16xbf16>
      %267 = vector.shape_cast %266 : vector<1x8x16xbf16> to vector<8x16xbf16>
      %268 = vector.extract_strided_slice %263 {offsets = [4, 0, 0], sizes = [1, 8, 16], strides = [1, 1, 1]} : vector<16x8x16xbf16> to vector<1x8x16xbf16>
      %269 = vector.shape_cast %268 : vector<1x8x16xbf16> to vector<8x16xbf16>
      %270 = vector.extract_strided_slice %263 {offsets = [6, 0, 0], sizes = [1, 8, 16], strides = [1, 1, 1]} : vector<16x8x16xbf16> to vector<1x8x16xbf16>
      %271 = vector.shape_cast %270 : vector<1x8x16xbf16> to vector<8x16xbf16>
      %272 = vector.extract_strided_slice %263 {offsets = [8, 0, 0], sizes = [1, 8, 16], strides = [1, 1, 1]} : vector<16x8x16xbf16> to vector<1x8x16xbf16>
      %273 = vector.shape_cast %272 : vector<1x8x16xbf16> to vector<8x16xbf16>
      %274 = vector.extract_strided_slice %263 {offsets = [10, 0, 0], sizes = [1, 8, 16], strides = [1, 1, 1]} : vector<16x8x16xbf16> to vector<1x8x16xbf16>
      %275 = vector.shape_cast %274 : vector<1x8x16xbf16> to vector<8x16xbf16>
      %276 = vector.extract_strided_slice %263 {offsets = [12, 0, 0], sizes = [1, 8, 16], strides = [1, 1, 1]} : vector<16x8x16xbf16> to vector<1x8x16xbf16>
      %277 = vector.shape_cast %276 : vector<1x8x16xbf16> to vector<8x16xbf16>
      %278 = vector.extract_strided_slice %263 {offsets = [14, 0, 0], sizes = [1, 8, 16], strides = [1, 1, 1]} : vector<16x8x16xbf16> to vector<1x8x16xbf16>
      %279 = vector.shape_cast %278 : vector<1x8x16xbf16> to vector<8x16xbf16>
      %280 = tpu.concatenate %265, %267, %269, %271, %273, %275, %277, %279 in 1 : vector<8x16xbf16>, vector<8x16xbf16>, vector<8x16xbf16>, vector<8x16xbf16>, vector<8x16xbf16>, vector<8x16xbf16>, vector<8x16xbf16>, vector<8x16xbf16> -> vector<8x128xbf16>
      %c0_166 = arith.constant 0 : index
      %c0_167 = arith.constant 0 : index
      %281 = vector.load %arg18[%c0_166, %c0_167] : memref<16x128xbf16, #tpu.memory_space<vmem>>, vector<8x128xbf16>
      tpu.vector_store %arg18[%c0_166, %c0_167], %280 {strides = array<i32>} : memref<16x128xbf16, #tpu.memory_space<vmem>>, vector<8x128xbf16>,
      %282 = vector.extract_strided_slice %263 {offsets = [1, 0, 0], sizes = [1, 8, 16], strides = [1, 1, 1]} : vector<16x8x16xbf16> to vector<1x8x16xbf16>
      %283 = vector.shape_cast %282 : vector<1x8x16xbf16> to vector<8x16xbf16>
      %284 = vector.extract_strided_slice %263 {offsets = [3, 0, 0], sizes = [1, 8, 16], strides = [1, 1, 1]} : vector<16x8x16xbf16> to vector<1x8x16xbf16>
      %285 = vector.shape_cast %284 : vector<1x8x16xbf16> to vector<8x16xbf16>
      %286 = vector.extract_strided_slice %263 {offsets = [5, 0, 0], sizes = [1, 8, 16], strides = [1, 1, 1]} : vector<16x8x16xbf16> to vector<1x8x16xbf16>
      %287 = vector.shape_cast %286 : vector<1x8x16xbf16> to vector<8x16xbf16>
      %288 = vector.extract_strided_slice %263 {offsets = [7, 0, 0], sizes = [1, 8, 16], strides = [1, 1, 1]} : vector<16x8x16xbf16> to vector<1x8x16xbf16>
      %289 = vector.shape_cast %288 : vector<1x8x16xbf16> to vector<8x16xbf16>
      %290 = vector.extract_strided_slice %263 {offsets = [9, 0, 0], sizes = [1, 8, 16], strides = [1, 1, 1]} : vector<16x8x16xbf16> to vector<1x8x16xbf16>
      %291 = vector.shape_cast %290 : vector<1x8x16xbf16> to vector<8x16xbf16>
      %292 = vector.extract_strided_slice %263 {offsets = [11, 0, 0], sizes = [1, 8, 16], strides = [1, 1, 1]} : vector<16x8x16xbf16> to vector<1x8x16xbf16>
      %293 = vector.shape_cast %292 : vector<1x8x16xbf16> to vector<8x16xbf16>
      %294 = vector.extract_strided_slice %263 {offsets = [13, 0, 0], sizes = [1, 8, 16], strides = [1, 1, 1]} : vector<16x8x16xbf16> to vector<1x8x16xbf16>
      %295 = vector.shape_cast %294 : vector<1x8x16xbf16> to vector<8x16xbf16>
      %296 = vector.extract_strided_slice %263 {offsets = [15, 0, 0], sizes = [1, 8, 16], strides = [1, 1, 1]} : vector<16x8x16xbf16> to vector<1x8x16xbf16>
      %297 = vector.shape_cast %296 : vector<1x8x16xbf16> to vector<8x16xbf16>
      %298 = tpu.concatenate %283, %285, %287, %289, %291, %293, %295, %297 in 1 : vector<8x16xbf16>, vector<8x16xbf16>, vector<8x16xbf16>, vector<8x16xbf16>, vector<8x16xbf16>, vector<8x16xbf16>, vector<8x16xbf16>, vector<8x16xbf16> -> vector<8x128xbf16>
      %c8_168 = arith.constant 8 : index
      %c0_169 = arith.constant 0 : index
      %299 = vector.load %arg18[%c8_168, %c0_169] : memref<16x128xbf16, #tpu.memory_space<vmem>>, vector<8x128xbf16>
      tpu.vector_store %arg18[%c8_168, %c0_169], %298 {strides = array<i32>} : memref<16x128xbf16, #tpu.memory_space<vmem>>, vector<8x128xbf16>,
      %c0_170 = arith.constant 0 : index
      %c0_171 = arith.constant 0 : index
      %300 = vector.load %arg18[%c0_170, %c0_171] : memref<16x128xbf16, #tpu.memory_space<vmem>>, vector<16x128xbf16>
      %c0_172 = arith.constant 0 : index
      %c0_173 = arith.constant 0 : index
      %301 = vector.load %arg4[%c0_172, %c0_173] : memref<128x128xbf16, #tpu.memory_space<vmem>>, vector<128x128xbf16>
      %cst_174 = arith.constant dense<0.000000e+00> : vector<16x128xf32>
      %302 = tpu.matmul %300, %301, %cst_174 {dimension_numbers = #tpu.dot_dimension_numbers<[1], [0], [0], [1], [0, 0, 1, 1], [], []>} : vector<16x128xbf16>, vector<128x128xbf16>, vector<16x128xf32> -> vector<16x128xf32>
      %c0_175 = arith.constant 0 : index
      %c0_176 = arith.constant 0 : index
      %303 = vector.load %arg5[%c0_175, %c0_176] : memref<1x128xf32, #tpu.memory_space<vmem>>, vector<1x128xf32>
      %304 = vector.broadcast %303 : vector<1x128xf32> to vector<16x128xf32>
      %305 = arith.addf %302, %304 : vector<16x128xf32>
      %306 = arith.addf %21, %305 : vector<16x128xf32>
      %c0_177 = arith.constant 0 : index
      %c0_178 = arith.constant 0 : index
      %307 = vector.load %arg6[%c0_177, %c0_178] : memref<1x128xf32, #tpu.memory_space<vmem>>, vector<1x128xf32>
      %c0_179 = arith.constant 0 : index
      %c0_180 = arith.constant 0 : index
      %308 = vector.load %arg7[%c0_179, %c0_180] : memref<1x128xf32, #tpu.memory_space<vmem>>, vector<1x128xf32>
      %cst_181 = arith.constant dense<0.000000e+00> : vector<16xf32>
      %309 = vector.multi_reduction <add>, %306, %cst_181 [1] : vector<16x128xf32> to vector<16xf32>
      %310 = vector.shape_cast %309 : vector<16xf32> to vector<16x1xf32>
      %cst_182 = arith.constant 1.280000e+02 : f32
      %311 = vector.broadcast %cst_182 : f32 to vector<16x1xf32>
      %312 = arith.divf %310, %311 : vector<16x1xf32>
      %313 = vector.broadcast %312 : vector<16x1xf32> to vector<16x128xf32>
      %314 = arith.subf %306, %313 : vector<16x128xf32>
      %315 = arith.mulf %314, %314 : vector<16x128xf32>
      %cst_183 = arith.constant dense<0.000000e+00> : vector<16xf32>
      %316 = vector.multi_reduction <add>, %315, %cst_183 [1] : vector<16x128xf32> to vector<16xf32>
      %317 = vector.shape_cast %316 : vector<16xf32> to vector<16x1xf32>
      %cst_184 = arith.constant 1.280000e+02 : f32
      %318 = vector.broadcast %cst_184 : f32 to vector<16x1xf32>
      %319 = arith.divf %317, %318 : vector<16x1xf32>
      %cst_185 = arith.constant 9.99999974E-6 : f32
      %320 = vector.broadcast %cst_185 : f32 to vector<16x1xf32>
      %321 = arith.addf %319, %320 : vector<16x1xf32>
      %322 = math.rsqrt %321 : vector<16x1xf32>
      %323 = vector.broadcast %322 : vector<16x1xf32> to vector<16x128xf32>
      %324 = arith.mulf %314, %323 : vector<16x128xf32>
      %325 = vector.broadcast %307 : vector<1x128xf32> to vector<16x128xf32>
      %326 = arith.mulf %324, %325 : vector<16x128xf32>
      %327 = vector.broadcast %308 : vector<1x128xf32> to vector<16x128xf32>
      %328 = arith.addf %326, %327 : vector<16x128xf32>
      %c0_186 = arith.constant 0 : index
      %c0_187 = arith.constant 0 : index
      %329 = vector.load %arg19[%c0_186, %c0_187] : memref<16x128xf32, #tpu.memory_space<vmem>>, vector<16x128xf32>
      tpu.vector_store %arg19[%c0_186, %c0_187], %328 {strides = array<i32>} : memref<16x128xf32, #tpu.memory_space<vmem>>, vector<16x128xf32>,
      %330 = arith.truncf %328 : vector<16x128xf32> to vector<16x128xbf16>
      %c0_188 = arith.constant 0 : index
      %c0_189 = arith.constant 0 : index
      %331 = vector.load %arg20[%c0_188, %c0_189] : memref<16x128xbf16, #tpu.memory_space<vmem>>, vector<16x128xbf16>
      tpu.vector_store %arg20[%c0_188, %c0_189], %330 {strides = array<i32>} : memref<16x128xbf16, #tpu.memory_space<vmem>>, vector<16x128xbf16>,
      %cst_190 = arith.constant 0.000000e+00 : f32
      %332 = vector.broadcast %cst_190 : f32 to vector<16x128xf32>
      %c0_191 = arith.constant 0 : index
      %c0_192 = arith.constant 0 : index
      %333 = vector.load %arg21[%c0_191, %c0_192] : memref<16x128xf32, #tpu.memory_space<vmem>>, vector<16x128xf32>
      tpu.vector_store %arg21[%c0_191, %c0_192], %332 {strides = array<i32>} : memref<16x128xf32, #tpu.memory_space<vmem>>, vector<16x128xf32>,
    } else {
    }
    %c0 = arith.constant 0 : index
    %c0_1 = arith.constant 0 : index
    %3 = vector.load %arg20[%c0, %c0_1] : memref<16x128xbf16, #tpu.memory_space<vmem>>, vector<16x128xbf16>
    %c0_2 = arith.constant 0 : index
    %c0_3 = arith.constant 0 : index
    %4 = vector.load %arg8[%c0_2, %c0_3] : memref<128x512xbf16, #tpu.memory_space<vmem>>, vector<128x512xbf16>
    %cst = arith.constant dense<0.000000e+00> : vector<16x512xf32>
    %5 = tpu.matmul %3, %4, %cst {dimension_numbers = #tpu.dot_dimension_numbers<[1], [0], [0], [1], [0, 0, 1, 1], [], []>} : vector<16x128xbf16>, vector<128x512xbf16>, vector<16x512xf32> -> vector<16x512xf32>
    %c0_4 = arith.constant 0 : index
    %c0_5 = arith.constant 0 : index
    %6 = vector.load %arg9[%c0_4, %c0_5] : memref<1x512xf32, #tpu.memory_space<vmem>>, vector<1x512xf32>
    %7 = vector.broadcast %6 : vector<1x512xf32> to vector<16x512xf32>
    %8 = arith.addf %5, %7 : vector<16x512xf32>
    %cst_6 = arith.constant 0.000000e+00 : f32
    %9 = vector.broadcast %cst_6 : f32 to vector<16x512xf32>
    %10 = arith.maximumf %8, %9 : vector<16x512xf32>
    %c0_7 = arith.constant 0 : index
    %c0_8 = arith.constant 0 : index
    %11 = vector.load %arg21[%c0_7, %c0_8] : memref<16x128xf32, #tpu.memory_space<vmem>>, vector<16x128xf32>
    %12 = arith.truncf %10 : vector<16x512xf32> to vector<16x512xbf16>
    %c0_9 = arith.constant 0 : index
    %c0_10 = arith.constant 0 : index
    %13 = vector.load %arg10[%c0_9, %c0_10] : memref<512x128xbf16, #tpu.memory_space<vmem>>, vector<512x128xbf16>
    %cst_11 = arith.constant dense<0.000000e+00> : vector<16x128xf32>
    %14 = tpu.matmul %12, %13, %cst_11 {dimension_numbers = #tpu.dot_dimension_numbers<[1], [0], [0], [1], [0, 0, 1, 1], [], []>} : vector<16x512xbf16>, vector<512x128xbf16>, vector<16x128xf32> -> vector<16x128xf32>
    %15 = arith.addf %11, %14 : vector<16x128xf32>
    %c0_12 = arith.constant 0 : index
    %c0_13 = arith.constant 0 : index
    %16 = vector.load %arg21[%c0_12, %c0_13] : memref<16x128xf32, #tpu.memory_space<vmem>>, vector<16x128xf32>
    tpu.vector_store %arg21[%c0_12, %c0_13], %15 {strides = array<i32>} : memref<16x128xf32, #tpu.memory_space<vmem>>, vector<16x128xf32>,
    %c0_i32_14 = arith.constant 0 : i32
    %17 = arith.cmpi eq, %arg0, %c0_i32_14 : i32
    %18 = arith.extui %17 : i1 to i32
    %c0_i32_15 = arith.constant 0 : i32
    %19 = arith.cmpi ne, %18, %c0_i32_15 : i32
    scf.if %19 {
      %c0_16 = arith.constant 0 : index
      %c0_17 = arith.constant 0 : index
      %20 = vector.load %arg19[%c0_16, %c0_17] : memref<16x128xf32, #tpu.memory_space<vmem>>, vector<16x128xf32>
      %c0_18 = arith.constant 0 : index
      %c0_19 = arith.constant 0 : index
      %21 = vector.load %arg21[%c0_18, %c0_19] : memref<16x128xf32, #tpu.memory_space<vmem>>, vector<16x128xf32>
      %22 = arith.addf %20, %21 : vector<16x128xf32>
      %c0_20 = arith.constant 0 : index
      %c0_21 = arith.constant 0 : index
      %23 = vector.load %arg11[%c0_20, %c0_21] : memref<1x128xf32, #tpu.memory_space<vmem>>, vector<1x128xf32>
      %24 = vector.broadcast %23 : vector<1x128xf32> to vector<16x128xf32>
      %25 = arith.addf %22, %24 : vector<16x128xf32>
      %c0_22 = arith.constant 0 : index
      %c0_23 = arith.constant 0 : index
      %26 = vector.load %arg12[%c0_22, %c0_23] : memref<1x128xf32, #tpu.memory_space<vmem>>, vector<1x128xf32>
      %c0_24 = arith.constant 0 : index
      %c0_25 = arith.constant 0 : index
      %27 = vector.load %arg13[%c0_24, %c0_25] : memref<1x128xf32, #tpu.memory_space<vmem>>, vector<1x128xf32>
      %cst_26 = arith.constant dense<0.000000e+00> : vector<16xf32>
      %28 = vector.multi_reduction <add>, %25, %cst_26 [1] : vector<16x128xf32> to vector<16xf32>
      %29 = vector.shape_cast %28 : vector<16xf32> to vector<16x1xf32>
      %cst_27 = arith.constant 1.280000e+02 : f32
      %30 = vector.broadcast %cst_27 : f32 to vector<16x1xf32>
      %31 = arith.divf %29, %30 : vector<16x1xf32>
      %32 = vector.broadcast %31 : vector<16x1xf32> to vector<16x128xf32>
      %33 = arith.subf %25, %32 : vector<16x128xf32>
      %34 = arith.mulf %33, %33 : vector<16x128xf32>
      %cst_28 = arith.constant dense<0.000000e+00> : vector<16xf32>
      %35 = vector.multi_reduction <add>, %34, %cst_28 [1] : vector<16x128xf32> to vector<16xf32>
      %36 = vector.shape_cast %35 : vector<16xf32> to vector<16x1xf32>
      %cst_29 = arith.constant 1.280000e+02 : f32
      %37 = vector.broadcast %cst_29 : f32 to vector<16x1xf32>
      %38 = arith.divf %36, %37 : vector<16x1xf32>
      %cst_30 = arith.constant 9.99999974E-6 : f32
      %39 = vector.broadcast %cst_30 : f32 to vector<16x1xf32>
      %40 = arith.addf %38, %39 : vector<16x1xf32>
      %41 = math.rsqrt %40 : vector<16x1xf32>
      %42 = vector.broadcast %41 : vector<16x1xf32> to vector<16x128xf32>
      %43 = arith.mulf %33, %42 : vector<16x128xf32>
      %44 = vector.broadcast %26 : vector<1x128xf32> to vector<16x128xf32>
      %45 = arith.mulf %43, %44 : vector<16x128xf32>
      %46 = vector.broadcast %27 : vector<1x128xf32> to vector<16x128xf32>
      %47 = arith.addf %45, %46 : vector<16x128xf32>
      %48 = arith.truncf %47 : vector<16x128xf32> to vector<16x128xbf16>
      %c0_31 = arith.constant 0 : index
      %c0_32 = arith.constant 0 : index
      %49 = vector.load %arg14[%c0_31, %c0_32] : memref<16x128xbf16, #tpu.memory_space<vmem>>, vector<16x128xbf16>
      tpu.vector_store %arg14[%c0_31, %c0_32], %48 {strides = array<i32>} : memref<16x128xbf16, #tpu.memory_space<vmem>>, vector<16x128xbf16>,
    } else {
    }
    return
  }
  func.func @transform_0(%arg0: i32) -> (i32, i32) {
    %c0_i32 = arith.constant 0 : i32
    %c0_i32_0 = arith.constant 0 : i32
    %c0_i32_1 = arith.constant 0 : i32
    return %c0_i32, %c0_i32_0 : i32, i32
  }
  func.func @transform_1(%arg0: i32) -> (i32, i32) {
    %c0_i32 = arith.constant 0 : i32
    %c0_i32_0 = arith.constant 0 : i32
    %c0_i32_1 = arith.constant 0 : i32
    return %c0_i32, %c0_i32_0 : i32, i32
  }
  func.func @transform_2(%arg0: i32) -> (i32, i32) {
    %c0_i32 = arith.constant 0 : i32
    %c0_i32_0 = arith.constant 0 : i32
    %c0_i32_1 = arith.constant 0 : i32
    return %c0_i32, %c0_i32_0 : i32, i32
  }
  func.func @transform_3(%arg0: i32) -> (i32, i32) {
    %c0_i32 = arith.constant 0 : i32
    %c0_i32_0 = arith.constant 0 : i32
    %c0_i32_1 = arith.constant 0 : i32
    return %c0_i32, %c0_i32_0 : i32, i32
  }
  func.func @transform_4(%arg0: i32) -> (i32, i32) {
    %c0_i32 = arith.constant 0 : i32
    %c0_i32_0 = arith.constant 0 : i32
    %c0_i32_1 = arith.constant 0 : i32
    return %c0_i32, %c0_i32_0 : i32, i32
  }
  func.func @transform_5(%arg0: i32) -> (i32, i32) {
    %c0_i32 = arith.constant 0 : i32
    %c0_i32_0 = arith.constant 0 : i32
    %c0_i32_1 = arith.constant 0 : i32
    return %c0_i32, %c0_i32_0 : i32, i32
  }
  func.func @transform_6(%arg0: i32) -> (i32, i32) {
    %c0_i32 = arith.constant 0 : i32
    %c0_i32_0 = arith.constant 0 : i32
    %c0_i32_1 = arith.constant 0 : i32
    return %c0_i32, %c0_i32_0 : i32, i32
  }
  func.func @transform_7(%arg0: i32) -> (i32, i32) {
    %c0_i32 = arith.constant 0 : i32
    %c0_i32_0 = arith.constant 0 : i32
    return %c0_i32, %arg0 : i32, i32
  }
  func.func @transform_8(%arg0: i32) -> (i32, i32) {
    %c0_i32 = arith.constant 0 : i32
    %c0_i32_0 = arith.constant 0 : i32
    return %c0_i32, %arg0 : i32, i32
  }
  func.func @transform_9(%arg0: i32) -> (i32, i32) {
    %c0_i32 = arith.constant 0 : i32
    %c0_i32_0 = arith.constant 0 : i32
    return %arg0, %c0_i32 : i32, i32
  }
  func.func @transform_10(%arg0: i32) -> (i32, i32) {
    %c0_i32 = arith.constant 0 : i32
    %c0_i32_0 = arith.constant 0 : i32
    %c0_i32_1 = arith.constant 0 : i32
    return %c0_i32, %c0_i32_0 : i32, i32
  }
  func.func @transform_11(%arg0: i32) -> (i32, i32) {
    %c0_i32 = arith.constant 0 : i32
    %c0_i32_0 = arith.constant 0 : i32
    %c0_i32_1 = arith.constant 0 : i32
    return %c0_i32, %c0_i32_0 : i32, i32
  }
  func.func @transform_12(%arg0: i32) -> (i32, i32) {
    %c0_i32 = arith.constant 0 : i32
    %c0_i32_0 = arith.constant 0 : i32
    %c0_i32_1 = arith.constant 0 : i32
    return %c0_i32, %c0_i32_0 : i32, i32
  }
  func.func @transform_13(%arg0: i32) -> (i32, i32) {
    %c0_i32 = arith.constant 0 : i32
    %c0_i32_0 = arith.constant 0 : i32
    %c0_i32_1 = arith.constant 0 : i32
    return %c0_i32, %c0_i32_0 : i32, i32
  }
}

</mosaic_0001>

<llo_original>
// kernel: tpu_custom_call.1
$region0: #{tpu_custom_call.1}
  #allocation0 [shape = 'u32[]', space=smem, size = 0x4, offset = 0x4, fixed_abs, tag = 'smem constant byte address 0x4 - core index']
  #allocation1 [shape = 'u32[72,128]{1,0:T(1,128)}', space=vmem, size = 0x9000, scoped, tag = 'internal scratch']
  %s0 = inlined_call_operand.hbm [shape: f32[8,128], index: 0, kind: input, shape index: {}]
  %s1 = inlined_call_operand.hbm [shape: f32[8,128], index: 1, kind: output, shape index: {}]
  %s2 = sld [smem:[#allocation0]]
  $region41: #{tpu_custom_call.1} parent=0
    _
  %s4 = ssub.s32 1, %s2
  %s5 = scalar_select 0, %s4, %s2
  $region1: #{tpu_custom_call.1} parent=0
    #allocation2 [shape = 'u8[4096]{0}', space=vmem, size = 0x1000, scoped, tag = 'input window, operand 0, single buffered']
    #allocation3 [shape = 's32[2]{0}', space=sflag, size = 0x8, scoped, tag = 'scoped memory for tpu_custom_call.1']
    #allocation4 [shape = 's32[2]{0}', space=sflag, size = 0x8, scoped, tag = 'scoped memory for tpu_custom_call.1']
    #allocation5 [shape = 'u8[4096]{0}', space=vmem, size = 0x1000, scoped, tag = 'output window, operand 0, single buffered']
    %6 = vsyncpa [#allocation3], 0
    %7 = vsyncpa [#allocation4], 0
    loop: start=0, step=1, limit=4
    $region2: #{tpu_custom_call.1} parent=1 // loop_pre_header
      _
    $region3: #{tpu_custom_call.1} parent=1 // loop_header
      %s9 = sphi 0, %s13
      %p10 = scmp.ge.s32.totalorder %s9, 4
      %s17 = sphi 0, %s17
      %s19 = sphi 0, %s17
      %s20 = sphi 0, %s19
      %s34 = sphi 0, %s20
      %s38 = sphi 0, %s38
      %s40 = sphi 0, %s38
      %s41 = sphi 0, %s40
      %s55 = sphi 0, %s41
    $region4: #{tpu_custom_call.1} parent=1 // loop_header_branch
      %12 = sbr.rel (%p10) target = $region8
    $region5: #{tpu_custom_call.1} parent=1 // loop_body
      %s14 = ssub.s32 %s9, 1
      %s15 = ssub.s32 %s9, 2
      %s16 = sadd.s32 %s9, 1
      %s18 = sadd.s32 %s17, 1
      %p21 = scmp.eq.s32.totalorder %s9, 1
      %p22 = scmp.ne.s32.totalorder %s17, %s19
      %p23 = scmp.eq.s32.totalorder %s9, 0
      %p24 = por %p22, %p23
      %p25 = scmp.ne.s32.totalorder %s17, %s19
      %p26 = scmp.eq.s32.totalorder %s14, 1
      %p27 = por %p25, %p26
      %p28 = scmp.ne.s32.totalorder %s19, %s20
      %p29 = scmp.eq.s32.totalorder %s14, 0
      %p30 = por %p28, %p29
      %p31 = scmp.ne.s32.totalorder %s19, %s20
      %p32 = scmp.eq.s32.totalorder %s15, 1
      %p33 = por %p31, %p32
      %p35 = scmp.ne.s32.totalorder %s20, %s34
      %p36 = scmp.eq.s32.totalorder %s15, 0
      %p37 = por %p35, %p36
      %s39 = sadd.s32 %s38, 1
      %p42 = scmp.eq.s32.totalorder %s9, 1
      %p43 = scmp.ne.s32.totalorder %s38, %s40
      %p44 = scmp.eq.s32.totalorder %s9, 0
      %p45 = por %p43, %p44
      %p46 = scmp.ne.s32.totalorder %s38, %s40
      %p47 = scmp.eq.s32.totalorder %s14, 1
      %p48 = por %p46, %p47
      %p49 = scmp.ne.s32.totalorder %s40, %s41
      %p50 = scmp.eq.s32.totalorder %s14, 0
      %p51 = por %p49, %p50
      %p52 = scmp.ne.s32.totalorder %s40, %s41
      %p53 = scmp.eq.s32.totalorder %s15, 1
      %p54 = por %p52, %p53
      %p56 = scmp.ne.s32.totalorder %s41, %s55
      %p57 = scmp.eq.s32.totalorder %s15, 0
      %p58 = por %p56, %p57
      %p59 = scmp.le.s32.totalorder 1, %s9
      %p60 = scmp.lt.s32.totalorder %s9, 3
      %p61 = pnand %p59, %p60
      %p62 = pneg %p61
      // Predicated region
      $region9: #{tpu_custom_call.1} parent=5 // pred_check
        _
      $region10: #{tpu_custom_call.1} parent=5 // pred_check_branch
        %64 = sbr.rel (%p61) target = $region12
      $region11: #{tpu_custom_call.1} parent=5 // pred_region
        %s65 = ssub.s32 %s9, 1
        // Predicated region
        $region13: #{tpu_custom_call.1} parent=11 // pred_check
          %p66 = pneg %p30
        $region14: #{tpu_custom_call.1} parent=11 // pred_check_branch
          %68 = sbr.rel (%p66) target = $region16
        $region15: #{tpu_custom_call.1} parent=11 // pred_region
          %70 = vsyncadd [#allocation3], 0
          %s72 = sshll.u32 %s0, 4
          %s73 = int_to_ptr.hbm [resolvable:$true] %s72
          %s74 = sshll.u32 [#allocation2], 4
          %s75 = int_to_ptr.vmem [resolvable:$true] %s74
          %77 = dma.hbm_to_vmem [thread:$0]  %s73, 128, %s75, [#allocation3]
        $region16: #{tpu_custom_call.1} parent=11 // pred_fallthru
          _
      $region12: #{tpu_custom_call.1} parent=5 // pred_fallthru
        _
      %p78 = scmp.lt.s32.totalorder %s9, 2
      // Predicated region
      $region17: #{tpu_custom_call.1} parent=5 // pred_check
        %p79 = pneg %p78
      $region18: #{tpu_custom_call.1} parent=5 // pred_check_branch
        %81 = sbr.rel (%p79) target = $region20
      $region19: #{tpu_custom_call.1} parent=5 // pred_region
        _
      $region20: #{tpu_custom_call.1} parent=5 // pred_fallthru
        _
      %p82 = scmp.le.s32.totalorder 1, %s9
      %p83 = scmp.lt.s32.totalorder %s9, 3
      %p84 = pnand %p82, %p83
      %p85 = pneg %p84
      // Predicated region
      $region21: #{tpu_custom_call.1} parent=5 // pred_check
        _
      $region22: #{tpu_custom_call.1} parent=5 // pred_check_branch
        %87 = sbr.rel (%p84) target = $region24
      $region23: #{tpu_custom_call.1} parent=5 // pred_region
        %s88 = ssub.s32 %s9, 1
        // Predicated region
        $region25: #{tpu_custom_call.1} parent=23 // pred_check
          %p89 = pneg %p30
        $region26: #{tpu_custom_call.1} parent=23 // pred_check_branch
          %91 = sbr.rel (%p89) target = $region28
        $region27: #{tpu_custom_call.1} parent=23 // pred_region
          %93 = dma.done [#allocation3], 128
        $region28: #{tpu_custom_call.1} parent=23 // pred_fallthru
          _
        %p94 = pneg %p30
        %p95 = pneg %p27
        %p96 = pneg %p51
        %p97 = pneg %p48
        %v98 = vld [vmem:[#allocation2] sm:$0xff]
        %v99 = vadd.f32 %v98, 1.0
        %100 = vst [vmem:[#allocation5] sm:$0xff] %v99
        // Predicated region
        $region29: #{tpu_custom_call.1} parent=23 // pred_check
          %p101 = pneg %p48
        $region30: #{tpu_custom_call.1} parent=23 // pred_check_branch
          %103 = sbr.rel (%p101) target = $region32
        $region31: #{tpu_custom_call.1} parent=23 // pred_region
          %105 = vsyncadd [#allocation4], 0
          %s107 = sshll.u32 [#allocation5], 4
          %s108 = int_to_ptr.vmem [resolvable:$true] %s107
          %s109 = sshll.u32 %s1, 4
          %s110 = int_to_ptr.hbm [resolvable:$true] %s109
          %112 = dma.vmem_to_hbm [thread:$0]  %s108, 128, %s110, [#allocation4]
        $region32: #{tpu_custom_call.1} parent=23 // pred_fallthru
          _
        // Predicated region
        $region33: #{tpu_custom_call.1} parent=23 // pred_check
          %p113 = pneg %p48
        $region34: #{tpu_custom_call.1} parent=23 // pred_check_branch
          %115 = sbr.rel (%p113) target = $region36
        $region35: #{tpu_custom_call.1} parent=23 // pred_region
          %117 = dma.done [#allocation4], 128
        $region36: #{tpu_custom_call.1} parent=23 // pred_fallthru
          _
      $region24: #{tpu_custom_call.1} parent=5 // pred_fallthru
        _
      %p118 = scmp.le.s32.totalorder 2, %s9
      // Predicated region
      $region37: #{tpu_custom_call.1} parent=5 // pred_check
        %p119 = pneg %p118
      $region38: #{tpu_custom_call.1} parent=5 // pred_check_branch
        %121 = sbr.rel (%p119) target = $region40
      $region39: #{tpu_custom_call.1} parent=5 // pred_region
        %s122 = ssub.s32 %s9, 2
      $region40: #{tpu_custom_call.1} parent=5 // pred_fallthru
        _
    $region6: #{tpu_custom_call.1} parent=1 // loop_footer
      %s13 = sadd.s32 1, %s9
    $region7: #{tpu_custom_call.1} parent=1 // loop_footer_branch
      %8 = sbr.rel target = $region3
    $region8: #{tpu_custom_call.1} parent=1 // loop_exit
      _
    %123 = vsyncpa [#allocation3], 1
    %s124 = scalar_lea.sflag [#allocation3], 1
    %125 = vsyncpa %s124, 1
    %126 = vsyncpa [#allocation4], 1
    %s127 = scalar_lea.sflag [#allocation4], 1
    %128 = vsyncpa %s127, 1

// kernel: tpu_custom_call.1
$region0: #{tpu_custom_call.1}
  #allocation0 [shape = 'u32[]', space=smem, size = 0x4, offset = 0x4, fixed_abs, tag = 'smem constant byte address 0x4 - core index']
  #allocation1 [shape = 'u32[72,128]{1,0:T(1,128)}', space=vmem, size = 0x9000, scoped, tag = 'internal scratch']
  #allocation2 [shape = 'bf16[16,8,16]{2,1,0:T(8,128)(2,1)}', space=vmem, size = 0x8000, scoped, tag = 'scratch operand']
  #allocation3 [shape = 'bf16[16,8,16]{2,1,0:T(8,128)(2,1)}', space=vmem, size = 0x8000, scoped, tag = 'scratch operand']
  #allocation4 [shape = 'bf16[16,8,16]{2,1,0:T(8,128)(2,1)}', space=vmem, size = 0x8000, scoped, tag = 'scratch operand']
  #allocation5 [shape = 'bf16[16,128]{1,0:T(8,128)(2,1)}', space=vmem, size = 0x1000, scoped, tag = 'scratch operand']
  #allocation6 [shape = 'f32[16,128]{1,0:T(8,128)}', space=vmem, size = 0x2000, scoped, tag = 'scratch operand']
  #allocation7 [shape = 'bf16[16,128]{1,0:T(8,128)(2,1)}', space=vmem, size = 0x1000, scoped, tag = 'scratch operand']
  #allocation8 [shape = 'f32[16,128]{1,0:T(8,128)}', space=vmem, size = 0x2000, scoped, tag = 'scratch operand']
  %s0 = inlined_call_operand.hbm [shape: bf16[16,128], index: 0, kind: input, shape index: {}]
  %s1 = inlined_call_operand.hbm [shape: bf16[128,384], index: 1, kind: input, shape index: {}]
  %s2 = inlined_call_operand.hbm [shape: f32[1,384], index: 2, kind: input, shape index: {}]
  %s3 = inlined_call_operand.hbm [shape: bf16[128,128], index: 3, kind: input, shape index: {}]
  %s4 = inlined_call_operand.vmem [shape: f32[1,128], index: 4, kind: input, shape index: {}]
  %s5 = inlined_call_operand.vmem [shape: f32[1,128], index: 5, kind: input, shape index: {}]
  %s6 = inlined_call_operand.vmem [shape: f32[1,128], index: 6, kind: input, shape index: {}]
  %s7 = inlined_call_operand.hbm [shape: bf16[128,512], index: 7, kind: input, shape index: {}]
  %s8 = inlined_call_operand.vmem [shape: f32[1,512], index: 8, kind: input, shape index: {}]
  %s9 = inlined_call_operand.hbm [shape: bf16[512,128], index: 9, kind: input, shape index: {}]
  %s10 = inlined_call_operand.vmem [shape: f32[1,128], index: 10, kind: input, shape index: {}]
  %s11 = inlined_call_operand.vmem [shape: f32[1,128], index: 11, kind: input, shape index: {}]
  %s12 = inlined_call_operand.vmem [shape: f32[1,128], index: 12, kind: input, shape index: {}]
  %s13 = inlined_call_operand.hbm [shape: bf16[16,128], index: 13, kind: output, shape index: {}]
  %s14 = sld [smem:[#allocation0]]
  $region94: #{tpu_custom_call.1} parent=0
    _
  %s16 = ssub.s32 1, %s14
  %s17 = scalar_select 0, %s16, %s14
  $region1: #{tpu_custom_call.1} parent=0
    #allocation9 [shape = 'u8[4096]{0}', space=vmem, size = 0x1000, scoped, tag = 'input window, operand 0, single buffered']
    #allocation10 [shape = 's32[1]{0}', space=sflag, size = 0x4, scoped, tag = 'scoped memory for tpu_custom_call.1']
    #allocation11 [shape = 's32[1]{0}', space=sflag, size = 0x4, scoped, tag = 'scoped memory for tpu_custom_call.1']
    #allocation12 [shape = 'u8[98304]{0}', space=vmem, size = 0x18000, scoped, tag = 'input window, operand 1, single buffered']
    #allocation13 [shape = 's32[1]{0}', space=sflag, size = 0x4, scoped, tag = 'scoped memory for tpu_custom_call.1']
    #allocation14 [shape = 'u8[1536]{0}', space=vmem, size = 0x800, scoped, tag = 'input window, operand 2, single buffered']
    #allocation15 [shape = 'u8[32768]{0}', space=vmem, size = 0x8000, scoped, tag = 'input window, operand 3, single buffered']
    #allocation16 [shape = 's32[1]{0}', space=sflag, size = 0x4, scoped, tag = 'scoped memory for tpu_custom_call.1']
    #allocation17 [shape = 'u8[131072]{0}', space=vmem, size = 0x20000, scoped, tag = 'input window, operand 7, single buffered']
    #allocation18 [shape = 'u8[131072]{0}', space=vmem, size = 0x20000, scoped, tag = 'input window, operand 9, single buffered']
    #allocation19 [shape = 's32[1]{0}', space=sflag, size = 0x4, scoped, tag = 'scoped memory for tpu_custom_call.1']
    #allocation20 [shape = 'u8[4096]{0}', space=vmem, size = 0x1000, scoped, tag = 'output window, operand 0, single buffered']
    %18 = vsyncpa [#allocation10], 0
    %19 = vsyncpa [#allocation13], 0
    %20 = vsyncpa [#allocation16], 0
    %21 = vsyncpa [#allocation19], 0
    %22 = vsyncpa [#allocation11], 0
    // Predicated region
    $region2: #{tpu_custom_call.1} parent=1 // pred_check
      _
    $region3: #{tpu_custom_call.1} parent=1 // pred_check_branch
      %24 = sbr.rel (0) target = $region5
    $region4: #{tpu_custom_call.1} parent=1 // pred_region
      %26 = vsyncadd [#allocation10], 0
      %s27 = sshll.u32 %s0, 4
      %s28 = int_to_ptr.hbm [resolvable:$true] %s27
      %s29 = sshll.u32 [#allocation9], 4
      %s30 = int_to_ptr.vmem [resolvable:$true] %s29
      %35 = dma.hbm_to_vmem [thread:$0]  %s28, 128, %s30, [#allocation10], 64, 64, 4
    $region5: #{tpu_custom_call.1} parent=1 // pred_fallthru
      _
    // Predicated region
    $region6: #{tpu_custom_call.1} parent=1 // pred_check
      _
    $region7: #{tpu_custom_call.1} parent=1 // pred_check_branch
      %37 = sbr.rel (0) target = $region9
    $region8: #{tpu_custom_call.1} parent=1 // pred_region
      %39 = vsyncadd [#allocation13], 0
      %s40 = sshll.u32 %s1, 4
      %s41 = int_to_ptr.hbm [resolvable:$true] %s40
      %s42 = sshll.u32 [#allocation12], 4
      %s43 = int_to_ptr.vmem [resolvable:$true] %s42
      %48 = dma.hbm_to_vmem [thread:$0]  %s41, 3072, %s43, [#allocation13], 192, 192, 12
    $region9: #{tpu_custom_call.1} parent=1 // pred_fallthru
      _
    // Predicated region
    $region10: #{tpu_custom_call.1} parent=1 // pred_check
      _
    $region11: #{tpu_custom_call.1} parent=1 // pred_check_branch
      %50 = sbr.rel (0) target = $region13
    $region12: #{tpu_custom_call.1} parent=1 // pred_region
      %52 = vsyncadd [#allocation13], 0
      %s54 = sshll.u32 %s2, 4
      %s55 = int_to_ptr.hbm [resolvable:$true] %s54
      %s56 = sshll.u32 [#allocation14], 4
      %s57 = int_to_ptr.vmem [resolvable:$true] %s56
      %59 = dma.hbm_to_vmem [thread:$0]  %s55, 48, %s57, [#allocation13]
    $region13: #{tpu_custom_call.1} parent=1 // pred_fallthru
      _
    // Predicated region
    $region14: #{tpu_custom_call.1} parent=1 // pred_check
      _
    $region15: #{tpu_custom_call.1} parent=1 // pred_check_branch
      %61 = sbr.rel (0) target = $region17
    $region16: #{tpu_custom_call.1} parent=1 // pred_region
      %63 = vsyncadd [#allocation16], 0
      %s64 = sshll.u32 %s3, 4
      %s65 = int_to_ptr.hbm [resolvable:$true] %s64
      %s66 = sshll.u32 [#allocation15], 4
      %s67 = int_to_ptr.vmem [resolvable:$true] %s66
      %72 = dma.hbm_to_vmem [thread:$0]  %s65, 1024, %s67, [#allocation16], 64, 64, 4
    $region17: #{tpu_custom_call.1} parent=1 // pred_fallthru
      _
    // Predicated region
    $region18: #{tpu_custom_call.1} parent=1 // pred_check
      _
    $region19: #{tpu_custom_call.1} parent=1 // pred_check_branch
      %74 = sbr.rel (0) target = $region21
    $region20: #{tpu_custom_call.1} parent=1 // pred_region
      _
    $region21: #{tpu_custom_call.1} parent=1 // pred_fallthru
      _
    // Predicated region
    $region22: #{tpu_custom_call.1} parent=1 // pred_check
      _
    $region23: #{tpu_custom_call.1} parent=1 // pred_check_branch
      %76 = sbr.rel (0) target = $region25
    $region24: #{tpu_custom_call.1} parent=1 // pred_region
      _
    $region25: #{tpu_custom_call.1} parent=1 // pred_fallthru
      _
    // Predicated region
    $region26: #{tpu_custom_call.1} parent=1 // pred_check
      _
    $region27: #{tpu_custom_call.1} parent=1 // pred_check_branch
      %78 = sbr.rel (0) target = $region29
    $region28: #{tpu_custom_call.1} parent=1 // pred_region
      _
    $region29: #{tpu_custom_call.1} parent=1 // pred_fallthru
      _
    // Predicated region
    $region30: #{tpu_custom_call.1} parent=1 // pred_check
      _
    $region31: #{tpu_custom_call.1} parent=1 // pred_check_branch
      %80 = sbr.rel (0) target = $region33
    $region32: #{tpu_custom_call.1} parent=1 // pred_region
      %82 = vsyncadd [#allocation16], 0
      %s83 = sshll.u32 %s7, 4
      %s84 = int_to_ptr.hbm [resolvable:$true] %s83
      %s85 = sshll.u32 [#allocation17], 4
      %s86 = int_to_ptr.vmem [resolvable:$true] %s85
      %91 = dma.hbm_to_vmem [thread:$0]  %s84, 4096, %s86, [#allocation16], 256, 256, 16
    $region33: #{tpu_custom_call.1} parent=1 // pred_fallthru
      _
    // Predicated region
    $region34: #{tpu_custom_call.1} parent=1 // pred_check
      _
    $region35: #{tpu_custom_call.1} parent=1 // pred_check_branch
      %93 = sbr.rel (0) target = $region37
    $region36: #{tpu_custom_call.1} parent=1 // pred_region
      _
    $region37: #{tpu_custom_call.1} parent=1 // pred_fallthru
      _
    // Predicated region
    $region38: #{tpu_custom_call.1} parent=1 // pred_check
      _
    $region39: #{tpu_custom_call.1} parent=1 // pred_check_branch
      %95 = sbr.rel (0) target = $region41
    $region40: #{tpu_custom_call.1} parent=1 // pred_region
      %97 = vsyncadd [#allocation19], 0
      %s98 = sshll.u32 %s9, 4
      %s99 = int_to_ptr.hbm [resolvable:$true] %s98
      %s100 = sshll.u32 [#allocation18], 4
      %s101 = int_to_ptr.vmem [resolvable:$true] %s100
      %106 = dma.hbm_to_vmem [thread:$0]  %s99, 4096, %s101, [#allocation19], 64, 64, 4
    $region41: #{tpu_custom_call.1} parent=1 // pred_fallthru
      _
    // Predicated region
    $region42: #{tpu_custom_call.1} parent=1 // pred_check
      _
    $region43: #{tpu_custom_call.1} parent=1 // pred_check_branch
      %108 = sbr.rel (0) target = $region45
    $region44: #{tpu_custom_call.1} parent=1 // pred_region
      _
    $region45: #{tpu_custom_call.1} parent=1 // pred_fallthru
      _
    // Predicated region
    $region46: #{tpu_custom_call.1} parent=1 // pred_check
      _
    $region47: #{tpu_custom_call.1} parent=1 // pred_check_branch
      %110 = sbr.rel (0) target = $region49
    $region48: #{tpu_custom_call.1} parent=1 // pred_region
      _
    $region49: #{tpu_custom_call.1} parent=1 // pred_fallthru
      _
    // Predicated region
    $region50: #{tpu_custom_call.1} parent=1 // pred_check
      _
    $region51: #{tpu_custom_call.1} parent=1 // pred_check_branch
      %112 = sbr.rel (0) target = $region53
    $region52: #{tpu_custom_call.1} parent=1 // pred_region
      _
    $region53: #{tpu_custom_call.1} parent=1 // pred_fallthru
      _
    // Predicated region
    $region54: #{tpu_custom_call.1} parent=1 // pred_check
      _
    $region55: #{tpu_custom_call.1} parent=1 // pred_check_branch
      %114 = sbr.rel (0) target = $region57
    $region56: #{tpu_custom_call.1} parent=1 // pred_region
      %116 = dma.done [#allocation10], 128
    $region57: #{tpu_custom_call.1} parent=1 // pred_fallthru
      _
    // Predicated region
    $region58: #{tpu_custom_call.1} parent=1 // pred_check
      _
    $region59: #{tpu_custom_call.1} parent=1 // pred_check_branch
      %118 = sbr.rel (0) target = $region61
    $region60: #{tpu_custom_call.1} parent=1 // pred_region
      %120 = dma.done [#allocation13], 3072
    $region61: #{tpu_custom_call.1} parent=1 // pred_fallthru
      _
    // Predicated region
    $region62: #{tpu_custom_call.1} parent=1 // pred_check
      _
    $region63: #{tpu_custom_call.1} parent=1 // pred_check_branch
      %122 = sbr.rel (0) target = $region65
    $region64: #{tpu_custom_call.1} parent=1 // pred_region
      %124 = dma.done [#allocation13], 48
    $region65: #{tpu_custom_call.1} parent=1 // pred_fallthru
      _
    // Predicated region
    $region66: #{tpu_custom_call.1} parent=1 // pred_check
      _
    $region67: #{tpu_custom_call.1} parent=1 // pred_check_branch
      %126 = sbr.rel (0) target = $region69
    $region68: #{tpu_custom_call.1} parent=1 // pred_region
      %128 = dma.done [#allocation16], 1024
    $region69: #{tpu_custom_call.1} parent=1 // pred_fallthru
      _
    // Predicated region
    $region70: #{tpu_custom_call.1} parent=1 // pred_check
      _
    $region71: #{tpu_custom_call.1} parent=1 // pred_check_branch
      %130 = sbr.rel (0) target = $region73
    $region72: #{tpu_custom_call.1} parent=1 // pred_region
      %132 = dma.done [#allocation16], 4096
    $region73: #{tpu_custom_call.1} parent=1 // pred_fallthru
      _
    // Predicated region
    $region74: #{tpu_custom_call.1} parent=1 // pred_check
      _
    $region75: #{tpu_custom_call.1} parent=1 // pred_check_branch
      %134 = sbr.rel (0) target = $region77
    $region76: #{tpu_custom_call.1} parent=1 // pred_region
      %136 = dma.done [#allocation19], 4096
    $region77: #{tpu_custom_call.1} parent=1 // pred_fallthru
      _
    %p138 = scmp.eq.s32.totalorder 0, 0
    // Predicated region
    $region78: #{tpu_custom_call.1} parent=1 // pred_check
      %p139 = pneg %p138
    $region79: #{tpu_custom_call.1} parent=1 // pred_check_branch
      %141 = sbr.rel (%p139) target = $region81
    $region80: #{tpu_custom_call.1} parent=1 // pred_region
      %v142 = vld [vmem:[#allocation9] sm:$0xf]
      %v143 = vld [vmem:[#allocation9 + $0x4] sm:$0xf]
      %v144 = vunpack.c.l.bf16 %v142
      %v145 = vunpack.c.l.bf16 %v143
      %v146 = vld [vmem:[#allocation12] sm:$0xff]
      %v147 = vld [vmem:[#allocation12 + $0x8] sm:$0xf]
      %v148 = vld [vmem:[#allocation12 + $0xc] sm:$0xff]
      %v149 = vld [vmem:[#allocation12 + $0x14] sm:$0xf]
      %v150 = vld [vmem:[#allocation12 + $0x18] sm:$0xff]
      %v151 = vld [vmem:[#allocation12 + $0x20] sm:$0xf]
      %v152 = vld [vmem:[#allocation12 + $0x24] sm:$0xff]
      %v153 = vld [vmem:[#allocation12 + $0x2c] sm:$0xf]
      %v154 = vld [vmem:[#allocation12 + $0x30] sm:$0xff]
      %v155 = vld [vmem:[#allocation12 + $0x38] sm:$0xf]
      %v156 = vld [vmem:[#allocation12 + $0x3c] sm:$0xff]
      %v157 = vld [vmem:[#allocation12 + $0x44] sm:$0xf]
      %v158 = vld [vmem:[#allocation12 + $0x48] sm:$0xff]
      %v159 = vld [vmem:[#allocation12 + $0x50] sm:$0xf]
      %v160 = vld [vmem:[#allocation12 + $0x54] sm:$0xff]
      %v161 = vld [vmem:[#allocation12 + $0x5c] sm:$0xf]
      %v162 = vld [vmem:[#allocation12 + $0x60] sm:$0xff]
      %v163 = vld [vmem:[#allocation12 + $0x68] sm:$0xf]
      %v164 = vld [vmem:[#allocation12 + $0x6c] sm:$0xff]
      %v165 = vld [vmem:[#allocation12 + $0x74] sm:$0xf]
      %v166 = vld [vmem:[#allocation12 + $0x78] sm:$0xff]
      %v167 = vld [vmem:[#allocation12 + $0x80] sm:$0xf]
      %v168 = vld [vmem:[#allocation12 + $0x84] sm:$0xff]
      %v169 = vld [vmem:[#allocation12 + $0x8c] sm:$0xf]
      %v170 = vld [vmem:[#allocation12 + $0x90] sm:$0xff]
      %v171 = vld [vmem:[#allocation12 + $0x98] sm:$0xf]
      %v172 = vld [vmem:[#allocation12 + $0x9c] sm:$0xff]
      %v173 = vld [vmem:[#allocation12 + $0xa4] sm:$0xf]
      %v174 = vld [vmem:[#allocation12 + $0xa8] sm:$0xff]
      %v175 = vld [vmem:[#allocation12 + $0xb0] sm:$0xf]
      %v176 = vld [vmem:[#allocation12 + $0xb4] sm:$0xff]
      %v177 = vld [vmem:[#allocation12 + $0xbc] sm:$0xf]
      %v178 = vld [vmem:[#allocation14] sm:$0x7]
      %v180 = vperm.slane %v178, 0
      %v181 = vperm.slane %v178, 1
      %v182 = vperm.slane %v178, 2
      %v188 = vunpack.c.l.b16 %v142
      %v189 = vunpack.c.l.b16 %v143
      %v190 = vpack.c.b16 %v189, %v188
      %v224 = vunpack.c.l.b16 %v146
      %v225 = vunpack.c.h.b16 %v146
      %v226 = vunpack.c.l.b16 %v147
      %v227 = vunpack.c.l.b16 %v148
      %v228 = vunpack.c.h.b16 %v148
      %v229 = vunpack.c.l.b16 %v149
      %v230 = vunpack.c.l.b16 %v150
      %v231 = vunpack.c.h.b16 %v150
      %v232 = vunpack.c.l.b16 %v151
      %v233 = vunpack.c.l.b16 %v152
      %v234 = vunpack.c.h.b16 %v152
      %v235 = vunpack.c.l.b16 %v153
      %v236 = vunpack.c.l.b16 %v154
      %v237 = vunpack.c.h.b16 %v154
      %v238 = vunpack.c.l.b16 %v155
      %v239 = vunpack.c.l.b16 %v156
      %v240 = vunpack.c.h.b16 %v156
      %v241 = vunpack.c.l.b16 %v157
      %v242 = vunpack.c.l.b16 %v158
      %v243 = vunpack.c.h.b16 %v158
      %v244 = vunpack.c.l.b16 %v159
      %v245 = vunpack.c.l.b16 %v160
      %v246 = vunpack.c.h.b16 %v160
      %v247 = vunpack.c.l.b16 %v161
      %v248 = vunpack.c.l.b16 %v162
      %v249 = vunpack.c.h.b16 %v162
      %v250 = vunpack.c.l.b16 %v163
      %v251 = vunpack.c.l.b16 %v164
      %v252 = vunpack.c.h.b16 %v164
      %v253 = vunpack.c.l.b16 %v165
      %v254 = vunpack.c.l.b16 %v166
      %v255 = vunpack.c.h.b16 %v166
      %v256 = vunpack.c.l.b16 %v167
      %v257 = vunpack.c.l.b16 %v168
      %v258 = vunpack.c.h.b16 %v168
      %v259 = vunpack.c.l.b16 %v169
      %v260 = vunpack.c.l.b16 %v170
      %v261 = vunpack.c.h.b16 %v170
      %v262 = vunpack.c.l.b16 %v171
      %v263 = vunpack.c.l.b16 %v172
      %v264 = vunpack.c.h.b16 %v172
      %v265 = vunpack.c.l.b16 %v173
      %v266 = vunpack.c.l.b16 %v174
      %v267 = vunpack.c.h.b16 %v174
      %v268 = vunpack.c.l.b16 %v175
      %v269 = vunpack.c.l.b16 %v176
      %v270 = vunpack.c.h.b16 %v176
      %v271 = vunpack.c.l.b16 %v177
      %v272 = vpack.c.b16 %v227, %v224
      %v273 = vpack.c.b16 %v228, %v225
      %v274 = vpack.c.b16 %v229, %v226
      %v275 = vpack.c.b16 %v233, %v230
      %v276 = vpack.c.b16 %v234, %v231
      %v277 = vpack.c.b16 %v235, %v232
      %v278 = vpack.c.b16 %v239, %v236
      %v279 = vpack.c.b16 %v240, %v237
      %v280 = vpack.c.b16 %v241, %v238
      %v281 = vpack.c.b16 %v245, %v242
      %v282 = vpack.c.b16 %v246, %v243
      %v283 = vpack.c.b16 %v247, %v244
      %v284 = vpack.c.b16 %v251, %v248
      %v285 = vpack.c.b16 %v252, %v249
      %v286 = vpack.c.b16 %v253, %v250
      %v287 = vpack.c.b16 %v257, %v254
      %v288 = vpack.c.b16 %v258, %v255
      %v289 = vpack.c.b16 %v259, %v256
      %v290 = vpack.c.b16 %v263, %v260
      %v291 = vpack.c.b16 %v264, %v261
      %v292 = vpack.c.b16 %v265, %v262
      %v293 = vpack.c.b16 %v269, %v266
      %v294 = vpack.c.b16 %v270, %v267
      %v295 = vpack.c.b16 %v271, %v268
      %320 = vmatpush.bf16.msra.mxu0 %v293
      %321 = vmatpush.bf16.msra.mxu0 %v290
      %322 = vmatpush.bf16.msra.mxu0 %v287
      %323 = vmatpush.bf16.msra.mxu0 %v284
      %324 = vmatpush.bf16.msra.mxu0 %v281
      %325 = vmatpush.bf16.msra.mxu0 %v278
      %326 = vmatpush.bf16.msra.mxu0 %v275
      %327 = vmatpush.bf16.msra.mxu0 %v272
      %328 = vmatmul.bf16.gmra.mxu0 %v190
      %v329 = vpop.f32.mrf.mxu0
      %v330 = vadd.f32 %v180, %v329
      %v331 = vpop.f32.mrf.mxu0
      %v332 = vadd.f32 %v180, %v331
      %333 = vdwg.mxu0
      %334 = vmatpush.bf16.msra.mxu0 %v294
      %335 = vmatpush.bf16.msra.mxu0 %v291
      %336 = vmatpush.bf16.msra.mxu0 %v288
      %337 = vmatpush.bf16.msra.mxu0 %v285
      %338 = vmatpush.bf16.msra.mxu0 %v282
      %339 = vmatpush.bf16.msra.mxu0 %v279
      %340 = vmatpush.bf16.msra.mxu0 %v276
      %341 = vmatpush.bf16.msra.mxu0 %v273
      %342 = vmatmul.bf16.gmra.mxu0 %v190
      %v343 = vpop.f32.mrf.mxu0
      %v344 = vadd.f32 %v181, %v343
      %v345 = vpop.f32.mrf.mxu0
      %v346 = vadd.f32 %v181, %v345
      %347 = vdwg.mxu0
      %348 = vmatpush.bf16.msra.mxu0 %v295
      %349 = vmatpush.bf16.msra.mxu0 %v292
      %350 = vmatpush.bf16.msra.mxu0 %v289
      %351 = vmatpush.bf16.msra.mxu0 %v286
      %352 = vmatpush.bf16.msra.mxu0 %v283
      %353 = vmatpush.bf16.msra.mxu0 %v280
      %354 = vmatpush.bf16.msra.mxu0 %v277
      %355 = vmatpush.bf16.msra.mxu0 %v274
      %356 = vmatmul.bf16.gmra.mxu0 %v190
      %v357 = vpop.f32.mrf.mxu0
      %v358 = vadd.f32 %v182, %v357
      %v359 = vpop.f32.mrf.mxu0
      %v360 = vadd.f32 %v182, %v359
      %361 = vdwg.mxu0
      %v362 = vpack.c.bf16 %v344, %v330
      %v363 = vpack.c.bf16 %v358, %v358
      %v364 = vpack.c.bf16 %v346, %v332
      %v365 = vpack.c.bf16 %v360, %v360
      %vm366 = vcmask 125952
      %367 = vst.msk [vmem:[#allocation2] sm:$0xf] %vm366, %v362
      %v369 = vrot.slane %v362, 4
      %371 = vst.msk [vmem:[#allocation3] sm:$0xf] %vm366, %v369
      %372 = vst.msk [vmem:[#allocation4] sm:$0xf] %vm366, %v363
      %s373 = scalar_lea.vmem [#allocation2], 4
      %374 = vst.msk [vmem:[%s373] sm:$0xf] %vm366, %v364
      %v376 = vrot.slane %v364, 4
      %s378 = scalar_lea.vmem [#allocation3], 4
      %379 = vst.msk [vmem:[%s378] sm:$0xf] %vm366, %v376
      %s380 = scalar_lea.vmem [#allocation4], 4
      %381 = vst.msk [vmem:[%s380] sm:$0xf] %vm366, %v365
      %382 = vrot.lane.b32.xlu0 %v362, 112
      %v383 = vpop.permute.xlu0 %382
      %s385 = scalar_lea.vmem [#allocation2], 8
      %386 = vst.msk [vmem:[%s385] sm:$0xf] %vm366, %v383
      %v387 = vrot.slane %v383, 4
      %s389 = scalar_lea.vmem [#allocation3], 8
      %390 = vst.msk [vmem:[%s389] sm:$0xf] %vm366, %v387
      %392 = vrot.lane.b32.xlu0 %v363, 112
      %v393 = vpop.permute.xlu0 %392
      %s395 = scalar_lea.vmem [#allocation4], 8
      %396 = vst.msk [vmem:[%s395] sm:$0xf] %vm366, %v393
      %397 = vrot.lane.b32.xlu0 %v364, 112
      %v398 = vpop.permute.xlu0 %397
      %s400 = scalar_lea.vmem [#allocation2], 12
      %401 = vst.msk [vmem:[%s400] sm:$0xf] %vm366, %v398
      %v402 = vrot.slane %v398, 4
      %s404 = scalar_lea.vmem [#allocation3], 12
      %405 = vst.msk [vmem:[%s404] sm:$0xf] %vm366, %v402
      %407 = vrot.lane.b32.xlu0 %v365, 112
      %v408 = vpop.permute.xlu0 %407
      %s410 = scalar_lea.vmem [#allocation4], 12
      %411 = vst.msk [vmem:[%s410] sm:$0xf] %vm366, %v408
      %412 = vrot.lane.b32.xlu0 %v362, 96
      %v413 = vpop.permute.xlu0 %412
      %s415 = scalar_lea.vmem [#allocation2], 16
      %416 = vst.msk [vmem:[%s415] sm:$0xf] %vm366, %v413
      %v417 = vrot.slane %v413, 4
      %s419 = scalar_lea.vmem [#allocation3], 16
      %420 = vst.msk [vmem:[%s419] sm:$0xf] %vm366, %v417
      %421 = vrot.lane.b32.xlu0 %v363, 96
      %v422 = vpop.permute.xlu0 %421
      %s424 = scalar_lea.vmem [#allocation4], 16
      %425 = vst.msk [vmem:[%s424] sm:$0xf] %vm366, %v422
      %426 = vrot.lane.b32.xlu0 %v364, 96
      %v427 = vpop.permute.xlu0 %426
      %s429 = scalar_lea.vmem [#allocation2], 20
      %430 = vst.msk [vmem:[%s429] sm:$0xf] %vm366, %v427
      %v431 = vrot.slane %v427, 4
      %s433 = scalar_lea.vmem [#allocation3], 20
      %434 = vst.msk [vmem:[%s433] sm:$0xf] %vm366, %v431
      %435 = vrot.lane.b32.xlu0 %v365, 96
      %v436 = vpop.permute.xlu0 %435
      %s438 = scalar_lea.vmem [#allocation4], 20
      %439 = vst.msk [vmem:[%s438] sm:$0xf] %vm366, %v436
      %440 = vrot.lane.b32.xlu0 %v362, 80
      %v441 = vpop.permute.xlu0 %440
      %s443 = scalar_lea.vmem [#allocation2], 24
      %444 = vst.msk [vmem:[%s443] sm:$0xf] %vm366, %v441
      %v445 = vrot.slane %v441, 4
      %s447 = scalar_lea.vmem [#allocation3], 24
      %448 = vst.msk [vmem:[%s447] sm:$0xf] %vm366, %v445
      %449 = vrot.lane.b32.xlu0 %v363, 80
      %v450 = vpop.permute.xlu0 %449
      %s452 = scalar_lea.vmem [#allocation4], 24
      %453 = vst.msk [vmem:[%s452] sm:$0xf] %vm366, %v450
      %454 = vrot.lane.b32.xlu0 %v364, 80
      %v455 = vpop.permute.xlu0 %454
      %s457 = scalar_lea.vmem [#allocation2], 28
      %458 = vst.msk [vmem:[%s457] sm:$0xf] %vm366, %v455
      %v459 = vrot.slane %v455, 4
      %s461 = scalar_lea.vmem [#allocation3], 28
      %462 = vst.msk [vmem:[%s461] sm:$0xf] %vm366, %v459
      %463 = vrot.lane.b32.xlu0 %v365, 80
      %v464 = vpop.permute.xlu0 %463
      %s466 = scalar_lea.vmem [#allocation4], 28
      %467 = vst.msk [vmem:[%s466] sm:$0xf] %vm366, %v464
      %468 = vrot.lane.b32.xlu0 %v362, 64
      %v469 = vpop.permute.xlu0 %468
      %s471 = scalar_lea.vmem [#allocation2], 32
      %472 = vst.msk [vmem:[%s471] sm:$0xf] %vm366, %v469
      %v473 = vrot.slane %v469, 4
      %s475 = scalar_lea.vmem [#allocation3], 32
      %476 = vst.msk [vmem:[%s475] sm:$0xf] %vm366, %v473
      %477 = vrot.lane.b32.xlu0 %v363, 64
      %v478 = vpop.permute.xlu0 %477
      %s480 = scalar_lea.vmem [#allocation4], 32
      %481 = vst.msk [vmem:[%s480] sm:$0xf] %vm366, %v478
      %482 = vrot.lane.b32.xlu0 %v364, 64
      %v483 = vpop.permute.xlu0 %482
      %s485 = scalar_lea.vmem [#allocation2], 36
      %486 = vst.msk [vmem:[%s485] sm:$0xf] %vm366, %v483
      %v487 = vrot.slane %v483, 4
      %s489 = scalar_lea.vmem [#allocation3], 36
      %490 = vst.msk [vmem:[%s489] sm:$0xf] %vm366, %v487
      %491 = vrot.lane.b32.xlu0 %v365, 64
      %v492 = vpop.permute.xlu0 %491
      %s494 = scalar_lea.vmem [#allocation4], 36
      %495 = vst.msk [vmem:[%s494] sm:$0xf] %vm366, %v492
      %496 = vrot.lane.b32.xlu0 %v362, 48
      %v497 = vpop.permute.xlu0 %496
      %s499 = scalar_lea.vmem [#allocation2], 40
      %500 = vst.msk [vmem:[%s499] sm:$0xf] %vm366, %v497
      %v501 = vrot.slane %v497, 4
      %s503 = scalar_lea.vmem [#allocation3], 40
      %504 = vst.msk [vmem:[%s503] sm:$0xf] %vm366, %v501
      %505 = vrot.lane.b32.xlu0 %v363, 48
      %v506 = vpop.permute.xlu0 %505
      %s508 = scalar_lea.vmem [#allocation4], 40
      %509 = vst.msk [vmem:[%s508] sm:$0xf] %vm366, %v506
      %510 = vrot.lane.b32.xlu0 %v364, 48
      %v511 = vpop.permute.xlu0 %510
      %s513 = scalar_lea.vmem [#allocation2], 44
      %514 = vst.msk [vmem:[%s513] sm:$0xf] %vm366, %v511
      %v515 = vrot.slane %v511, 4
      %s517 = scalar_lea.vmem [#allocation3], 44
      %518 = vst.msk [vmem:[%s517] sm:$0xf] %vm366, %v515
      %519 = vrot.lane.b32.xlu0 %v365, 48
      %v520 = vpop.permute.xlu0 %519
      %s522 = scalar_lea.vmem [#allocation4], 44
      %523 = vst.msk [vmem:[%s522] sm:$0xf] %vm366, %v520
      %524 = vrot.lane.b32.xlu0 %v362, 32
      %v525 = vpop.permute.xlu0 %524
      %s527 = scalar_lea.vmem [#allocation2], 48
      %528 = vst.msk [vmem:[%s527] sm:$0xf] %vm366, %v525
      %v529 = vrot.slane %v525, 4
      %s531 = scalar_lea.vmem [#allocation3], 48
      %532 = vst.msk [vmem:[%s531] sm:$0xf] %vm366, %v529
      %533 = vrot.lane.b32.xlu0 %v363, 32
      %v534 = vpop.permute.xlu0 %533
      %s536 = scalar_lea.vmem [#allocation4], 48
      %537 = vst.msk [vmem:[%s536] sm:$0xf] %vm366, %v534
      %538 = vrot.lane.b32.xlu0 %v364, 32
      %v539 = vpop.permute.xlu0 %538
      %s541 = scalar_lea.vmem [#allocation2], 52
      %542 = vst.msk [vmem:[%s541] sm:$0xf] %vm366, %v539
      %v543 = vrot.slane %v539, 4
      %s545 = scalar_lea.vmem [#allocation3], 52
      %546 = vst.msk [vmem:[%s545] sm:$0xf] %vm366, %v543
      %547 = vrot.lane.b32.xlu0 %v365, 32
      %v548 = vpop.permute.xlu0 %547
      %s550 = scalar_lea.vmem [#allocation4], 52
      %551 = vst.msk [vmem:[%s550] sm:$0xf] %vm366, %v548
      %552 = vrot.lane.b32.xlu0 %v362, 16
      %v553 = vpop.permute.xlu0 %552
      %s555 = scalar_lea.vmem [#allocation2], 56
      %556 = vst.msk [vmem:[%s555] sm:$0xf] %vm366, %v553
      %v557 = vrot.slane %v553, 4
      %s559 = scalar_lea.vmem [#allocation3], 56
      %560 = vst.msk [vmem:[%s559] sm:$0xf] %vm366, %v557
      %561 = vrot.lane.b32.xlu0 %v363, 16
      %v562 = vpop.permute.xlu0 %561
      %s564 = scalar_lea.vmem [#allocation4], 56
      %565 = vst.msk [vmem:[%s564] sm:$0xf] %vm366, %v562
      %566 = vrot.lane.b32.xlu0 %v364, 16
      %v567 = vpop.permute.xlu0 %566
      %s569 = scalar_lea.vmem [#allocation2], 60
      %570 = vst.msk [vmem:[%s569] sm:$0xf] %vm366, %v567
      %v571 = vrot.slane %v567, 4
      %s573 = scalar_lea.vmem [#allocation3], 60
      %574 = vst.msk [vmem:[%s573] sm:$0xf] %vm366, %v571
      %575 = vrot.lane.b32.xlu0 %v365, 16
      %v576 = vpop.permute.xlu0 %575
      %s578 = scalar_lea.vmem [#allocation4], 60
      %579 = vst.msk [vmem:[%s578] sm:$0xf] %vm366, %v576
      %v580 = vld [vmem:[#allocation2] sm:$0xf]
      %v581 = vld [vmem:[#allocation2 + $0x4] sm:$0xf]
      %v582 = vld [vmem:[#allocation2 + $0x8] sm:$0xf]
      %v583 = vld [vmem:[#allocation2 + $0xc] sm:$0xf]
      %v584 = vld [vmem:[#allocation2 + $0x10] sm:$0xf]
      %v585 = vld [vmem:[#allocation2 + $0x14] sm:$0xf]
      %v586 = vld [vmem:[#allocation2 + $0x18] sm:$0xf]
      %v587 = vld [vmem:[#allocation2 + $0x1c] sm:$0xf]
      %v588 = vld [vmem:[#allocation2 + $0x20] sm:$0xf]
      %v589 = vld [vmem:[#allocation2 + $0x24] sm:$0xf]
      %v590 = vld [vmem:[#allocation2 + $0x28] sm:$0xf]
      %v591 = vld [vmem:[#allocation2 + $0x2c] sm:$0xf]
      %v592 = vld [vmem:[#allocation2 + $0x30] sm:$0xf]
      %v593 = vld [vmem:[#allocation2 + $0x34] sm:$0xf]
      %v594 = vld [vmem:[#allocation2 + $0x38] sm:$0xf]
      %v595 = vld [vmem:[#allocation2 + $0x3c] sm:$0xf]
      %v596 = vld [vmem:[#allocation3] sm:$0xf]
      %v597 = vld [vmem:[#allocation3 + $0x4] sm:$0xf]
      %v598 = vld [vmem:[#allocation3 + $0x8] sm:$0xf]
      %v599 = vld [vmem:[#allocation3 + $0xc] sm:$0xf]
      %v600 = vld [vmem:[#allocation3 + $0x10] sm:$0xf]
      %v601 = vld [vmem:[#allocation3 + $0x14] sm:$0xf]
      %v602 = vld [vmem:[#allocation3 + $0x18] sm:$0xf]
      %v603 = vld [vmem:[#allocation3 + $0x1c] sm:$0xf]
      %v604 = vld [vmem:[#allocation3 + $0x20] sm:$0xf]
      %v605 = vld [vmem:[#allocation3 + $0x24] sm:$0xf]
      %v606 = vld [vmem:[#allocation3 + $0x28] sm:$0xf]
      %v607 = vld [vmem:[#allocation3 + $0x2c] sm:$0xf]
      %v608 = vld [vmem:[#allocation3 + $0x30] sm:$0xf]
      %v609 = vld [vmem:[#allocation3 + $0x34] sm:$0xf]
      %v610 = vld [vmem:[#allocation3 + $0x38] sm:$0xf]
      %v611 = vld [vmem:[#allocation3 + $0x3c] sm:$0xf]
      %v612 = vld [vmem:[#allocation4] sm:$0xf]
      %v613 = vld [vmem:[#allocation4 + $0x4] sm:$0xf]
      %v614 = vld [vmem:[#allocation4 + $0x8] sm:$0xf]
      %v615 = vld [vmem:[#allocation4 + $0xc] sm:$0xf]
      %v616 = vld [vmem:[#allocation4 + $0x10] sm:$0xf]
      %v617 = vld [vmem:[#allocation4 + $0x14] sm:$0xf]
      %v618 = vld [vmem:[#allocation4 + $0x18] sm:$0xf]
      %v619 = vld [vmem:[#allocation4 + $0x1c] sm:$0xf]
      %v620 = vld [vmem:[#allocation4 + $0x20] sm:$0xf]
      %v621 = vld [vmem:[#allocation4 + $0x24] sm:$0xf]
      %v622 = vld [vmem:[#allocation4 + $0x28] sm:$0xf]
      %v623 = vld [vmem:[#allocation4 + $0x2c] sm:$0xf]
      %v624 = vld [vmem:[#allocation4 + $0x30] sm:$0xf]
      %v625 = vld [vmem:[#allocation4 + $0x34] sm:$0xf]
      %v626 = vld [vmem:[#allocation4 + $0x38] sm:$0xf]
      %v627 = vld [vmem:[#allocation4 + $0x3c] sm:$0xf]
      %vm628 = vcmask 130048
      %v630 = vsel %vm628, %v580, 0
      %v633 = vsel %vm628, %v596, 0
      %635 = vmatpush.bf16.xpose.msra.mxu0 0
      %636 = vmatpush.bf16.xpose.msra.mxu0 0
      %637 = vmatpush.bf16.xpose.msra.mxu0 0
      %638 = vmatpush.bf16.xpose.msra.mxu0 0
      %639 = vmatpush.bf16.xpose.msra.mxu0 0
      %640 = vmatpush.bf16.xpose.msra.mxu0 0
      %641 = vmatpush.bf16.xpose.msra.mxu0 0
      %642 = vmatpush.bf16.xpose.msra.mxu0 %v633
      %643 = vmatmul.bf16.gmra.mxu0 %v630
      %v644 = vpop.f32.mrf.mxu0
      %v645 = vadd.f32 0.0, %v644
      %v646 = vpop.f32.mrf.mxu0
      %647 = vdwg.mxu0
      %v649 = vsel %vm628, %v581, 0
      %v652 = vsel %vm628, %v597, 0
      %654 = vmatpush.bf16.xpose.msra.mxu0 0
      %655 = vmatpush.bf16.xpose.msra.mxu0 0
      %656 = vmatpush.bf16.xpose.msra.mxu0 0
      %657 = vmatpush.bf16.xpose.msra.mxu0 0
      %658 = vmatpush.bf16.xpose.msra.mxu0 0
      %659 = vmatpush.bf16.xpose.msra.mxu0 0
      %660 = vmatpush.bf16.xpose.msra.mxu0 0
      %661 = vmatpush.bf16.xpose.msra.mxu0 %v652
      %662 = vmatmul.bf16.gmra.mxu0 %v649
      %v663 = vpop.f32.mrf.mxu0
      %v664 = vadd.f32 0.0, %v663
      %v665 = vpop.f32.mrf.mxu0
      %666 = vdwg.mxu0
      %v668 = vsel %vm628, %v582, 0
      %v671 = vsel %vm628, %v598, 0
      %673 = vmatpush.bf16.xpose.msra.mxu0 0
      %674 = vmatpush.bf16.xpose.msra.mxu0 0
      %675 = vmatpush.bf16.xpose.msra.mxu0 0
      %676 = vmatpush.bf16.xpose.msra.mxu0 0
      %677 = vmatpush.bf16.xpose.msra.mxu0 0
      %678 = vmatpush.bf16.xpose.msra.mxu0 0
      %679 = vmatpush.bf16.xpose.msra.mxu0 0
      %680 = vmatpush.bf16.xpose.msra.mxu0 %v671
      %681 = vmatmul.bf16.gmra.mxu0 %v668
      %v682 = vpop.f32.mrf.mxu0
      %v683 = vadd.f32 0.0, %v682
      %v684 = vpop.f32.mrf.mxu0
      %685 = vdwg.mxu0
      %v687 = vsel %vm628, %v583, 0
      %v690 = vsel %vm628, %v599, 0
      %692 = vmatpush.bf16.xpose.msra.mxu0 0
      %693 = vmatpush.bf16.xpose.msra.mxu0 0
      %694 = vmatpush.bf16.xpose.msra.mxu0 0
      %695 = vmatpush.bf16.xpose.msra.mxu0 0
      %696 = vmatpush.bf16.xpose.msra.mxu0 0
      %697 = vmatpush.bf16.xpose.msra.mxu0 0
      %698 = vmatpush.bf16.xpose.msra.mxu0 0
      %699 = vmatpush.bf16.xpose.msra.mxu0 %v690
      %700 = vmatmul.bf16.gmra.mxu0 %v687
      %v701 = vpop.f32.mrf.mxu0
      %v702 = vadd.f32 0.0, %v701
      %v703 = vpop.f32.mrf.mxu0
      %704 = vdwg.mxu0
      %v706 = vsel %vm628, %v584, 0
      %v709 = vsel %vm628, %v600, 0
      %711 = vmatpush.bf16.xpose.msra.mxu0 0
      %712 = vmatpush.bf16.xpose.msra.mxu0 0
      %713 = vmatpush.bf16.xpose.msra.mxu0 0
      %714 = vmatpush.bf16.xpose.msra.mxu0 0
      %715 = vmatpush.bf16.xpose.msra.mxu0 0
      %716 = vmatpush.bf16.xpose.msra.mxu0 0
      %717 = vmatpush.bf16.xpose.msra.mxu0 0
      %718 = vmatpush.bf16.xpose.msra.mxu0 %v709
      %719 = vmatmul.bf16.gmra.mxu0 %v706
      %v720 = vpop.f32.mrf.mxu0
      %v721 = vadd.f32 0.0, %v720
      %v722 = vpop.f32.mrf.mxu0
      %723 = vdwg.mxu0
      %v725 = vsel %vm628, %v585, 0
      %v728 = vsel %vm628, %v601, 0
      %730 = vmatpush.bf16.xpose.msra.mxu0 0
      %731 = vmatpush.bf16.xpose.msra.mxu0 0
      %732 = vmatpush.bf16.xpose.msra.mxu0 0
      %733 = vmatpush.bf16.xpose.msra.mxu0 0
      %734 = vmatpush.bf16.xpose.msra.mxu0 0
      %735 = vmatpush.bf16.xpose.msra.mxu0 0
      %736 = vmatpush.bf16.xpose.msra.mxu0 0
      %737 = vmatpush.bf16.xpose.msra.mxu0 %v728
      %738 = vmatmul.bf16.gmra.mxu0 %v725
      %v739 = vpop.f32.mrf.mxu0
      %v740 = vadd.f32 0.0, %v739
      %v741 = vpop.f32.mrf.mxu0
      %742 = vdwg.mxu0
      %v744 = vsel %vm628, %v586, 0
      %v747 = vsel %vm628, %v602, 0
      %749 = vmatpush.bf16.xpose.msra.mxu0 0
      %750 = vmatpush.bf16.xpose.msra.mxu0 0
      %751 = vmatpush.bf16.xpose.msra.mxu0 0
      %752 = vmatpush.bf16.xpose.msra.mxu0 0
      %753 = vmatpush.bf16.xpose.msra.mxu0 0
      %754 = vmatpush.bf16.xpose.msra.mxu0 0
      %755 = vmatpush.bf16.xpose.msra.mxu0 0
      %756 = vmatpush.bf16.xpose.msra.mxu0 %v747
      %757 = vmatmul.bf16.gmra.mxu0 %v744
      %v758 = vpop.f32.mrf.mxu0
      %v759 = vadd.f32 0.0, %v758
      %v760 = vpop.f32.mrf.mxu0
      %761 = vdwg.mxu0
      %v763 = vsel %vm628, %v587, 0
      %v766 = vsel %vm628, %v603, 0
      %768 = vmatpush.bf16.xpose.msra.mxu0 0
      %769 = vmatpush.bf16.xpose.msra.mxu0 0
      %770 = vmatpush.bf16.xpose.msra.mxu0 0
      %771 = vmatpush.bf16.xpose.msra.mxu0 0
      %772 = vmatpush.bf16.xpose.msra.mxu0 0
      %773 = vmatpush.bf16.xpose.msra.mxu0 0
      %774 = vmatpush.bf16.xpose.msra.mxu0 0
      %775 = vmatpush.bf16.xpose.msra.mxu0 %v766
      %776 = vmatmul.bf16.gmra.mxu0 %v763
      %v777 = vpop.f32.mrf.mxu0
      %v778 = vadd.f32 0.0, %v777
      %v779 = vpop.f32.mrf.mxu0
      %780 = vdwg.mxu0
      %v782 = vsel %vm628, %v588, 0
      %v785 = vsel %vm628, %v604, 0
      %787 = vmatpush.bf16.xpose.msra.mxu0 0
      %788 = vmatpush.bf16.xpose.msra.mxu0 0
      %789 = vmatpush.bf16.xpose.msra.mxu0 0
      %790 = vmatpush.bf16.xpose.msra.mxu0 0
      %791 = vmatpush.bf16.xpose.msra.mxu0 0
      %792 = vmatpush.bf16.xpose.msra.mxu0 0
      %793 = vmatpush.bf16.xpose.msra.mxu0 0
      %794 = vmatpush.bf16.xpose.msra.mxu0 %v785
      %795 = vmatmul.bf16.gmra.mxu0 %v782
      %v796 = vpop.f32.mrf.mxu0
      %v797 = vadd.f32 0.0, %v796
      %v798 = vpop.f32.mrf.mxu0
      %799 = vdwg.mxu0
      %v801 = vsel %vm628, %v589, 0
      %v804 = vsel %vm628, %v605, 0
      %806 = vmatpush.bf16.xpose.msra.mxu0 0
      %807 = vmatpush.bf16.xpose.msra.mxu0 0
      %808 = vmatpush.bf16.xpose.msra.mxu0 0
      %809 = vmatpush.bf16.xpose.msra.mxu0 0
      %810 = vmatpush.bf16.xpose.msra.mxu0 0
      %811 = vmatpush.bf16.xpose.msra.mxu0 0
      %812 = vmatpush.bf16.xpose.msra.mxu0 0
      %813 = vmatpush.bf16.xpose.msra.mxu0 %v804
      %814 = vmatmul.bf16.gmra.mxu0 %v801
      %v815 = vpop.f32.mrf.mxu0
      %v816 = vadd.f32 0.0, %v815
      %v817 = vpop.f32.mrf.mxu0
      %818 = vdwg.mxu0
      %v820 = vsel %vm628, %v590, 0
      %v823 = vsel %vm628, %v606, 0
      %825 = vmatpush.bf16.xpose.msra.mxu0 0
      %826 = vmatpush.bf16.xpose.msra.mxu0 0
      %827 = vmatpush.bf16.xpose.msra.mxu0 0
      %828 = vmatpush.bf16.xpose.msra.mxu0 0
      %829 = vmatpush.bf16.xpose.msra.mxu0 0
      %830 = vmatpush.bf16.xpose.msra.mxu0 0
      %831 = vmatpush.bf16.xpose.msra.mxu0 0
      %832 = vmatpush.bf16.xpose.msra.mxu0 %v823
      %833 = vmatmul.bf16.gmra.mxu0 %v820
      %v834 = vpop.f32.mrf.mxu0
      %v835 = vadd.f32 0.0, %v834
      %v836 = vpop.f32.mrf.mxu0
      %837 = vdwg.mxu0
      %v839 = vsel %vm628, %v591, 0
      %v842 = vsel %vm628, %v607, 0
      %844 = vmatpush.bf16.xpose.msra.mxu0 0
      %845 = vmatpush.bf16.xpose.msra.mxu0 0
      %846 = vmatpush.bf16.xpose.msra.mxu0 0
      %847 = vmatpush.bf16.xpose.msra.mxu0 0
      %848 = vmatpush.bf16.xpose.msra.mxu0 0
      %849 = vmatpush.bf16.xpose.msra.mxu0 0
      %850 = vmatpush.bf16.xpose.msra.mxu0 0
      %851 = vmatpush.bf16.xpose.msra.mxu0 %v842
      %852 = vmatmul.bf16.gmra.mxu0 %v839
      %v853 = vpop.f32.mrf.mxu0
      %v854 = vadd.f32 0.0, %v853
      %v855 = vpop.f32.mrf.mxu0
      %856 = vdwg.mxu0
      %v858 = vsel %vm628, %v592, 0
      %v861 = vsel %vm628, %v608, 0
      %863 = vmatpush.bf16.xpose.msra.mxu0 0
      %864 = vmatpush.bf16.xpose.msra.mxu0 0
      %865 = vmatpush.bf16.xpose.msra.mxu0 0
      %866 = vmatpush.bf16.xpose.msra.mxu0 0
      %867 = vmatpush.bf16.xpose.msra.mxu0 0
      %868 = vmatpush.bf16.xpose.msra.mxu0 0
      %869 = vmatpush.bf16.xpose.msra.mxu0 0
      %870 = vmatpush.bf16.xpose.msra.mxu0 %v861
      %871 = vmatmul.bf16.gmra.mxu0 %v858
      %v872 = vpop.f32.mrf.mxu0
      %v873 = vadd.f32 0.0, %v872
      %v874 = vpop.f32.mrf.mxu0
      %875 = vdwg.mxu0
      %v877 = vsel %vm628, %v593, 0
      %v880 = vsel %vm628, %v609, 0
      %882 = vmatpush.bf16.xpose.msra.mxu0 0
      %883 = vmatpush.bf16.xpose.msra.mxu0 0
      %884 = vmatpush.bf16.xpose.msra.mxu0 0
      %885 = vmatpush.bf16.xpose.msra.mxu0 0
      %886 = vmatpush.bf16.xpose.msra.mxu0 0
      %887 = vmatpush.bf16.xpose.msra.mxu0 0
      %888 = vmatpush.bf16.xpose.msra.mxu0 0
      %889 = vmatpush.bf16.xpose.msra.mxu0 %v880
      %890 = vmatmul.bf16.gmra.mxu0 %v877
      %v891 = vpop.f32.mrf.mxu0
      %v892 = vadd.f32 0.0, %v891
      %v893 = vpop.f32.mrf.mxu0
      %894 = vdwg.mxu0
      %v896 = vsel %vm628, %v594, 0
      %v899 = vsel %vm628, %v610, 0
      %901 = vmatpush.bf16.xpose.msra.mxu0 0
      %902 = vmatpush.bf16.xpose.msra.mxu0 0
      %903 = vmatpush.bf16.xpose.msra.mxu0 0
      %904 = vmatpush.bf16.xpose.msra.mxu0 0
      %905 = vmatpush.bf16.xpose.msra.mxu0 0
      %906 = vmatpush.bf16.xpose.msra.mxu0 0
      %907 = vmatpush.bf16.xpose.msra.mxu0 0
      %908 = vmatpush.bf16.xpose.msra.mxu0 %v899
      %909 = vmatmul.bf16.gmra.mxu0 %v896
      %v910 = vpop.f32.mrf.mxu0
      %v911 = vadd.f32 0.0, %v910
      %v912 = vpop.f32.mrf.mxu0
      %913 = vdwg.mxu0
      %v915 = vsel %vm628, %v595, 0
      %v918 = vsel %vm628, %v611, 0
      %920 = vmatpush.bf16.xpose.msra.mxu0 0
      %921 = vmatpush.bf16.xpose.msra.mxu0 0
      %922 = vmatpush.bf16.xpose.msra.mxu0 0
      %923 = vmatpush.bf16.xpose.msra.mxu0 0
      %924 = vmatpush.bf16.xpose.msra.mxu0 0
      %925 = vmatpush.bf16.xpose.msra.mxu0 0
      %926 = vmatpush.bf16.xpose.msra.mxu0 0
      %927 = vmatpush.bf16.xpose.msra.mxu0 %v918
      %928 = vmatmul.bf16.gmra.mxu0 %v915
      %v929 = vpop.f32.mrf.mxu0
      %v930 = vadd.f32 0.0, %v929
      %v931 = vpop.f32.mrf.mxu0
      %932 = vdwg.mxu0
      %v933 = vmul.f32 %v645, 0.25
      %v934 = vmul.f32 %v664, 0.25
      %v935 = vmul.f32 %v683, 0.25
      %v936 = vmul.f32 %v702, 0.25
      %v937 = vmul.f32 %v721, 0.25
      %v938 = vmul.f32 %v740, 0.25
      %v939 = vmul.f32 %v759, 0.25
      %v940 = vmul.f32 %v778, 0.25
      %v941 = vmul.f32 %v797, 0.25
      %v942 = vmul.f32 %v816, 0.25
      %v943 = vmul.f32 %v835, 0.25
      %v944 = vmul.f32 %v854, 0.25
      %v945 = vmul.f32 %v873, 0.25
      %v946 = vmul.f32 %v892, 0.25
      %v947 = vmul.f32 %v911, 0.25
      %v948 = vmul.f32 %v930, 0.25
      %vm949 = vcmask 64512
      %v950 = vsel %vm949, %v933, -inf
      %951 = vmax.xlane.f32.xlu0 %v950
      %v952 = vpop.xlane.xlu0 %951
      %v953 = vsel %vm949, %v934, -inf
      %954 = vmax.xlane.f32.xlu0 %v953
      %v955 = vpop.xlane.xlu0 %954
      %v956 = vsel %vm949, %v935, -inf
      %957 = vmax.xlane.f32.xlu0 %v956
      %v958 = vpop.xlane.xlu0 %957
      %v959 = vsel %vm949, %v936, -inf
      %960 = vmax.xlane.f32.xlu0 %v959
      %v961 = vpop.xlane.xlu0 %960
      %v962 = vsel %vm949, %v937, -inf
      %963 = vmax.xlane.f32.xlu0 %v962
      %v964 = vpop.xlane.xlu0 %963
      %v965 = vsel %vm949, %v938, -inf
      %966 = vmax.xlane.f32.xlu0 %v965
      %v967 = vpop.xlane.xlu0 %966
      %v968 = vsel %vm949, %v939, -inf
      %969 = vmax.xlane.f32.xlu0 %v968
      %v970 = vpop.xlane.xlu0 %969
      %v971 = vsel %vm949, %v940, -inf
      %972 = vmax.xlane.f32.xlu0 %v971
      %v973 = vpop.xlane.xlu0 %972
      %v974 = vsel %vm949, %v941, -inf
      %975 = vmax.xlane.f32.xlu0 %v974
      %v976 = vpop.xlane.xlu0 %975
      %v977 = vsel %vm949, %v942, -inf
      %978 = vmax.xlane.f32.xlu0 %v977
      %v979 = vpop.xlane.xlu0 %978
      %v980 = vsel %vm949, %v943, -inf
      %981 = vmax.xlane.f32.xlu0 %v980
      %v982 = vpop.xlane.xlu0 %981
      %v983 = vsel %vm949, %v944, -inf
      %984 = vmax.xlane.f32.xlu0 %v983
      %v985 = vpop.xlane.xlu0 %984
      %v986 = vsel %vm949, %v945, -inf
      %987 = vmax.xlane.f32.xlu0 %v986
      %v988 = vpop.xlane.xlu0 %987
      %v989 = vsel %vm949, %v946, -inf
      %990 = vmax.xlane.f32.xlu0 %v989
      %v991 = vpop.xlane.xlu0 %990
      %v992 = vsel %vm949, %v947, -inf
      %993 = vmax.xlane.f32.xlu0 %v992
      %v994 = vpop.xlane.xlu0 %993
      %v995 = vsel %vm949, %v948, -inf
      %996 = vmax.xlane.f32.xlu0 %v995
      %v997 = vpop.xlane.xlu0 %996
      %v998 = vsub.f32 %v933, %v952
      %v999 = vsub.f32 %v934, %v955
      %v1000 = vsub.f32 %v935, %v958
      %v1001 = vsub.f32 %v936, %v961
      %v1002 = vsub.f32 %v937, %v964
      %v1003 = vsub.f32 %v938, %v967
      %v1004 = vsub.f32 %v939, %v970
      %v1005 = vsub.f32 %v940, %v973
      %v1006 = vsub.f32 %v941, %v976
      %v1007 = vsub.f32 %v942, %v979
      %v1008 = vsub.f32 %v943, %v982
      %v1009 = vsub.f32 %v944, %v985
      %v1010 = vsub.f32 %v945, %v988
      %v1011 = vsub.f32 %v946, %v991
      %v1012 = vsub.f32 %v947, %v994
      %v1013 = vsub.f32 %v948, %v997
      %v1014 = vmul.f32 %v998, 1.442695
      %v1015 = vpow.pop %v1014
      %v1016 = vmul.f32 %v999, 1.442695
      %v1017 = vpow.pop %v1016
      %v1018 = vmul.f32 %v1000, 1.442695
      %v1019 = vpow.pop %v1018
      %v1020 = vmul.f32 %v1001, 1.442695
      %v1021 = vpow.pop %v1020
      %v1022 = vmul.f32 %v1002, 1.442695
      %v1023 = vpow.pop %v1022
      %v1024 = vmul.f32 %v1003, 1.442695
      %v1025 = vpow.pop %v1024
      %v1026 = vmul.f32 %v1004, 1.442695
      %v1027 = vpow.pop %v1026
      %v1028 = vmul.f32 %v1005, 1.442695
      %v1029 = vpow.pop %v1028
      %v1030 = vmul.f32 %v1006, 1.442695
      %v1031 = vpow.pop %v1030
      %v1032 = vmul.f32 %v1007, 1.442695
      %v1033 = vpow.pop %v1032
      %v1034 = vmul.f32 %v1008, 1.442695
      %v1035 = vpow.pop %v1034
      %v1036 = vmul.f32 %v1009, 1.442695
      %v1037 = vpow.pop %v1036
      %v1038 = vmul.f32 %v1010, 1.442695
      %v1039 = vpow.pop %v1038
      %v1040 = vmul.f32 %v1011, 1.442695
      %v1041 = vpow.pop %v1040
      %v1042 = vmul.f32 %v1012, 1.442695
      %v1043 = vpow.pop %v1042
      %v1044 = vmul.f32 %v1013, 1.442695
      %v1045 = vpow.pop %v1044
      %v1046 = vsel %vm949, %v1015, 0.0
      %1047 = vadd.xlane.f32.xlu0 %v1046
      %v1048 = vpop.xlane.xlu0 %1047
      %v1049 = vsel %vm949, %v1017, 0.0
      %1050 = vadd.xlane.f32.xlu0 %v1049
      %v1051 = vpop.xlane.xlu0 %1050
      %v1052 = vsel %vm949, %v1019, 0.0
      %1053 = vadd.xlane.f32.xlu0 %v1052
      %v1054 = vpop.xlane.xlu0 %1053
      %v1055 = vsel %vm949, %v1021, 0.0
      %1056 = vadd.xlane.f32.xlu0 %v1055
      %v1057 = vpop.xlane.xlu0 %1056
      %v1058 = vsel %vm949, %v1023, 0.0
      %1059 = vadd.xlane.f32.xlu0 %v1058
      %v1060 = vpop.xlane.xlu0 %1059
      %v1061 = vsel %vm949, %v1025, 0.0
      %1062 = vadd.xlane.f32.xlu0 %v1061
      %v1063 = vpop.xlane.xlu0 %1062
      %v1064 = vsel %vm949, %v1027, 0.0
      %1065 = vadd.xlane.f32.xlu0 %v1064
      %v1066 = vpop.xlane.xlu0 %1065
      %v1067 = vsel %vm949, %v1029, 0.0
      %1068 = vadd.xlane.f32.xlu0 %v1067
      %v1069 = vpop.xlane.xlu0 %1068
      %v1070 = vsel %vm949, %v1031, 0.0
      %1071 = vadd.xlane.f32.xlu0 %v1070
      %v1072 = vpop.xlane.xlu0 %1071
      %v1073 = vsel %vm949, %v1033, 0.0
      %1074 = vadd.xlane.f32.xlu0 %v1073
      %v1075 = vpop.xlane.xlu0 %1074
      %v1076 = vsel %vm949, %v1035, 0.0
      %1077 = vadd.xlane.f32.xlu0 %v1076
      %v1078 = vpop.xlane.xlu0 %1077
      %v1079 = vsel %vm949, %v1037, 0.0
      %1080 = vadd.xlane.f32.xlu0 %v1079
      %v1081 = vpop.xlane.xlu0 %1080
      %v1082 = vsel %vm949, %v1039, 0.0
      %1083 = vadd.xlane.f32.xlu0 %v1082
      %v1084 = vpop.xlane.xlu0 %1083
      %v1085 = vsel %vm949, %v1041, 0.0
      %1086 = vadd.xlane.f32.xlu0 %v1085
      %v1087 = vpop.xlane.xlu0 %1086
      %v1088 = vsel %vm949, %v1043, 0.0
      %1089 = vadd.xlane.f32.xlu0 %v1088
      %v1090 = vpop.xlane.xlu0 %1089
      %v1091 = vsel %vm949, %v1045, 0.0
      %1092 = vadd.xlane.f32.xlu0 %v1091
      %v1093 = vpop.xlane.xlu0 %1092
      %v1094 = vrcp.pop %v1048
      %v1095 = vrcp.pop %v1051
      %v1096 = vrcp.pop %v1054
      %v1097 = vrcp.pop %v1057
      %v1098 = vrcp.pop %v1060
      %v1099 = vrcp.pop %v1063
      %v1100 = vrcp.pop %v1066
      %v1101 = vrcp.pop %v1069
      %v1102 = vrcp.pop %v1072
      %v1103 = vrcp.pop %v1075
      %v1104 = vrcp.pop %v1078
      %v1105 = vrcp.pop %v1081
      %v1106 = vrcp.pop %v1084
      %v1107 = vrcp.pop %v1087
      %v1108 = vrcp.pop %v1090
      %v1109 = vrcp.pop %v1093
      %v1110 = vmul.f32 %v1015, %v1094
      %v1111 = vmul.f32 %v1017, %v1095
      %v1112 = vmul.f32 %v1019, %v1096
      %v1113 = vmul.f32 %v1021, %v1097
      %v1114 = vmul.f32 %v1023, %v1098
      %v1115 = vmul.f32 %v1025, %v1099
      %v1116 = vmul.f32 %v1027, %v1100
      %v1117 = vmul.f32 %v1029, %v1101
      %v1118 = vmul.f32 %v1031, %v1102
      %v1119 = vmul.f32 %v1033, %v1103
      %v1120 = vmul.f32 %v1035, %v1104
      %v1121 = vmul.f32 %v1037, %v1105
      %v1122 = vmul.f32 %v1039, %v1106
      %v1123 = vmul.f32 %v1041, %v1107
      %v1124 = vmul.f32 %v1043, %v1108
      %v1125 = vmul.f32 %v1045, %v1109
      %v1126 = vpack.c.bf16 %v1110, %v1110
      %v1127 = vpack.c.bf16 %v1111, %v1111
      %v1128 = vpack.c.bf16 %v1112, %v1112
      %v1129 = vpack.c.bf16 %v1113, %v1113
      %v1130 = vpack.c.bf16 %v1114, %v1114
      %v1131 = vpack.c.bf16 %v1115, %v1115
      %v1132 = vpack.c.bf16 %v1116, %v1116
      %v1133 = vpack.c.bf16 %v1117, %v1117
      %v1134 = vpack.c.bf16 %v1118, %v1118
      %v1135 = vpack.c.bf16 %v1119, %v1119
      %v1136 = vpack.c.bf16 %v1120, %v1120
      %v1137 = vpack.c.bf16 %v1121, %v1121
      %v1138 = vpack.c.bf16 %v1122, %v1122
      %v1139 = vpack.c.bf16 %v1123, %v1123
      %v1140 = vpack.c.bf16 %v1124, %v1124
      %v1141 = vpack.c.bf16 %v1125, %v1125
      %v1143 = vsel %vm949, %v1126, 0
      %vm1145 = vcmask 1043456
      %v1147 = vsel %vm1145, %v612, 0
      %1149 = vmatpush.bf16.msra.mxu0 0
      %1150 = vmatpush.bf16.msra.mxu0 0
      %1151 = vmatpush.bf16.msra.mxu0 0
      %1152 = vmatpush.bf16.msra.mxu0 0
      %1153 = vmatpush.bf16.msra.mxu0 0
      %1154 = vmatpush.bf16.msra.mxu0 0
      %1155 = vmatpush.bf16.msra.mxu0 0
      %1156 = vmatpush.bf16.msra.mxu0 %v1147
      %1157 = vmatmul.bf16.gmra.mxu0 %v1143
      %v1158 = vpop.f32.mrf.mxu0
      %v1159 = vadd.f32 0.0, %v1158
      %v1160 = vpop.f32.mrf.mxu0
      %1161 = vdwg.mxu0
      %v1163 = vsel %vm949, %v1127, 0
      %v1166 = vsel %vm1145, %v613, 0
      %1168 = vmatpush.bf16.msra.mxu0 0
      %1169 = vmatpush.bf16.msra.mxu0 0
      %1170 = vmatpush.bf16.msra.mxu0 0
      %1171 = vmatpush.bf16.msra.mxu0 0
      %1172 = vmatpush.bf16.msra.mxu0 0
      %1173 = vmatpush.bf16.msra.mxu0 0
      %1174 = vmatpush.bf16.msra.mxu0 0
      %1175 = vmatpush.bf16.msra.mxu0 %v1166
      %1176 = vmatmul.bf16.gmra.mxu0 %v1163
      %v1177 = vpop.f32.mrf.mxu0
      %v1178 = vadd.f32 0.0, %v1177
      %v1179 = vpop.f32.mrf.mxu0
      %1180 = vdwg.mxu0
      %v1182 = vsel %vm949, %v1128, 0
      %v1185 = vsel %vm1145, %v614, 0
      %1187 = vmatpush.bf16.msra.mxu0 0
      %1188 = vmatpush.bf16.msra.mxu0 0
      %1189 = vmatpush.bf16.msra.mxu0 0
      %1190 = vmatpush.bf16.msra.mxu0 0
      %1191 = vmatpush.bf16.msra.mxu0 0
      %1192 = vmatpush.bf16.msra.mxu0 0
      %1193 = vmatpush.bf16.msra.mxu0 0
      %1194 = vmatpush.bf16.msra.mxu0 %v1185
      %1195 = vmatmul.bf16.gmra.mxu0 %v1182
      %v1196 = vpop.f32.mrf.mxu0
      %v1197 = vadd.f32 0.0, %v1196
      %v1198 = vpop.f32.mrf.mxu0
      %1199 = vdwg.mxu0
      %v1201 = vsel %vm949, %v1129, 0
      %v1204 = vsel %vm1145, %v615, 0
      %1206 = vmatpush.bf16.msra.mxu0 0
      %1207 = vmatpush.bf16.msra.mxu0 0
      %1208 = vmatpush.bf16.msra.mxu0 0
      %1209 = vmatpush.bf16.msra.mxu0 0
      %1210 = vmatpush.bf16.msra.mxu0 0
      %1211 = vmatpush.bf16.msra.mxu0 0
      %1212 = vmatpush.bf16.msra.mxu0 0
      %1213 = vmatpush.bf16.msra.mxu0 %v1204
      %1214 = vmatmul.bf16.gmra.mxu0 %v1201
      %v1215 = vpop.f32.mrf.mxu0
      %v1216 = vadd.f32 0.0, %v1215
      %v1217 = vpop.f32.mrf.mxu0
      %1218 = vdwg.mxu0
      %v1220 = vsel %vm949, %v1130, 0
      %v1223 = vsel %vm1145, %v616, 0
      %1225 = vmatpush.bf16.msra.mxu0 0
      %1226 = vmatpush.bf16.msra.mxu0 0
      %1227 = vmatpush.bf16.msra.mxu0 0
      %1228 = vmatpush.bf16.msra.mxu0 0
      %1229 = vmatpush.bf16.msra.mxu0 0
      %1230 = vmatpush.bf16.msra.mxu0 0
      %1231 = vmatpush.bf16.msra.mxu0 0
      %1232 = vmatpush.bf16.msra.mxu0 %v1223
      %1233 = vmatmul.bf16.gmra.mxu0 %v1220
      %v1234 = vpop.f32.mrf.mxu0
      %v1235 = vadd.f32 0.0, %v1234
      %v1236 = vpop.f32.mrf.mxu0
      %1237 = vdwg.mxu0
      %v1239 = vsel %vm949, %v1131, 0
      %v1242 = vsel %vm1145, %v617, 0
      %1244 = vmatpush.bf16.msra.mxu0 0
      %1245 = vmatpush.bf16.msra.mxu0 0
      %1246 = vmatpush.bf16.msra.mxu0 0
      %1247 = vmatpush.bf16.msra.mxu0 0
      %1248 = vmatpush.bf16.msra.mxu0 0
      %1249 = vmatpush.bf16.msra.mxu0 0
      %1250 = vmatpush.bf16.msra.mxu0 0
      %1251 = vmatpush.bf16.msra.mxu0 %v1242
      %1252 = vmatmul.bf16.gmra.mxu0 %v1239
      %v1253 = vpop.f32.mrf.mxu0
      %v1254 = vadd.f32 0.0, %v1253
      %v1255 = vpop.f32.mrf.mxu0
      %1256 = vdwg.mxu0
      %v1258 = vsel %vm949, %v1132, 0
      %v1261 = vsel %vm1145, %v618, 0
      %1263 = vmatpush.bf16.msra.mxu0 0
      %1264 = vmatpush.bf16.msra.mxu0 0
      %1265 = vmatpush.bf16.msra.mxu0 0
      %1266 = vmatpush.bf16.msra.mxu0 0
      %1267 = vmatpush.bf16.msra.mxu0 0
      %1268 = vmatpush.bf16.msra.mxu0 0
      %1269 = vmatpush.bf16.msra.mxu0 0
      %1270 = vmatpush.bf16.msra.mxu0 %v1261
      %1271 = vmatmul.bf16.gmra.mxu0 %v1258
      %v1272 = vpop.f32.mrf.mxu0
      %v1273 = vadd.f32 0.0, %v1272
      %v1274 = vpop.f32.mrf.mxu0
      %1275 = vdwg.mxu0
      %v1277 = vsel %vm949, %v1133, 0
      %v1280 = vsel %vm1145, %v619, 0
      %1282 = vmatpush.bf16.msra.mxu0 0
      %1283 = vmatpush.bf16.msra.mxu0 0
      %1284 = vmatpush.bf16.msra.mxu0 0
      %1285 = vmatpush.bf16.msra.mxu0 0
      %1286 = vmatpush.bf16.msra.mxu0 0
      %1287 = vmatpush.bf16.msra.mxu0 0
      %1288 = vmatpush.bf16.msra.mxu0 0
      %1289 = vmatpush.bf16.msra.mxu0 %v1280
      %1290 = vmatmul.bf16.gmra.mxu0 %v1277
      %v1291 = vpop.f32.mrf.mxu0
      %v1292 = vadd.f32 0.0, %v1291
      %v1293 = vpop.f32.mrf.mxu0
      %1294 = vdwg.mxu0
      %v1296 = vsel %vm949, %v1134, 0
      %v1299 = vsel %vm1145, %v620, 0
      %1301 = vmatpush.bf16.msra.mxu0 0
      %1302 = vmatpush.bf16.msra.mxu0 0
      %1303 = vmatpush.bf16.msra.mxu0 0
      %1304 = vmatpush.bf16.msra.mxu0 0
      %1305 = vmatpush.bf16.msra.mxu0 0
      %1306 = vmatpush.bf16.msra.mxu0 0
      %1307 = vmatpush.bf16.msra.mxu0 0
      %1308 = vmatpush.bf16.msra.mxu0 %v1299
      %1309 = vmatmul.bf16.gmra.mxu0 %v1296
      %v1310 = vpop.f32.mrf.mxu0
      %v1311 = vadd.f32 0.0, %v1310
      %v1312 = vpop.f32.mrf.mxu0
      %1313 = vdwg.mxu0
      %v1315 = vsel %vm949, %v1135, 0
      %v1318 = vsel %vm1145, %v621, 0
      %1320 = vmatpush.bf16.msra.mxu0 0
      %1321 = vmatpush.bf16.msra.mxu0 0
      %1322 = vmatpush.bf16.msra.mxu0 0
      %1323 = vmatpush.bf16.msra.mxu0 0
      %1324 = vmatpush.bf16.msra.mxu0 0
      %1325 = vmatpush.bf16.msra.mxu0 0
      %1326 = vmatpush.bf16.msra.mxu0 0
      %1327 = vmatpush.bf16.msra.mxu0 %v1318
      %1328 = vmatmul.bf16.gmra.mxu0 %v1315
      %v1329 = vpop.f32.mrf.mxu0
      %v1330 = vadd.f32 0.0, %v1329
      %v1331 = vpop.f32.mrf.mxu0
      %1332 = vdwg.mxu0
      %v1334 = vsel %vm949, %v1136, 0
      %v1337 = vsel %vm1145, %v622, 0
      %1339 = vmatpush.bf16.msra.mxu0 0
      %1340 = vmatpush.bf16.msra.mxu0 0
      %1341 = vmatpush.bf16.msra.mxu0 0
      %1342 = vmatpush.bf16.msra.mxu0 0
      %1343 = vmatpush.bf16.msra.mxu0 0
      %1344 = vmatpush.bf16.msra.mxu0 0
      %1345 = vmatpush.bf16.msra.mxu0 0
      %1346 = vmatpush.bf16.msra.mxu0 %v1337
      %1347 = vmatmul.bf16.gmra.mxu0 %v1334
      %v1348 = vpop.f32.mrf.mxu0
      %v1349 = vadd.f32 0.0, %v1348
      %v1350 = vpop.f32.mrf.mxu0
      %1351 = vdwg.mxu0
      %v1353 = vsel %vm949, %v1137, 0
      %v1356 = vsel %vm1145, %v623, 0
      %1358 = vmatpush.bf16.msra.mxu0 0
      %1359 = vmatpush.bf16.msra.mxu0 0
      %1360 = vmatpush.bf16.msra.mxu0 0
      %1361 = vmatpush.bf16.msra.mxu0 0
      %1362 = vmatpush.bf16.msra.mxu0 0
      %1363 = vmatpush.bf16.msra.mxu0 0
      %1364 = vmatpush.bf16.msra.mxu0 0
      %1365 = vmatpush.bf16.msra.mxu0 %v1356
      %1366 = vmatmul.bf16.gmra.mxu0 %v1353
      %v1367 = vpop.f32.mrf.mxu0
      %v1368 = vadd.f32 0.0, %v1367
      %v1369 = vpop.f32.mrf.mxu0
      %1370 = vdwg.mxu0
      %v1372 = vsel %vm949, %v1138, 0
      %v1375 = vsel %vm1145, %v624, 0
      %1377 = vmatpush.bf16.msra.mxu0 0
      %1378 = vmatpush.bf16.msra.mxu0 0
      %1379 = vmatpush.bf16.msra.mxu0 0
      %1380 = vmatpush.bf16.msra.mxu0 0
      %1381 = vmatpush.bf16.msra.mxu0 0
      %1382 = vmatpush.bf16.msra.mxu0 0
      %1383 = vmatpush.bf16.msra.mxu0 0
      %1384 = vmatpush.bf16.msra.mxu0 %v1375
      %1385 = vmatmul.bf16.gmra.mxu0 %v1372
      %v1386 = vpop.f32.mrf.mxu0
      %v1387 = vadd.f32 0.0, %v1386
      %v1388 = vpop.f32.mrf.mxu0
      %1389 = vdwg.mxu0
      %v1391 = vsel %vm949, %v1139, 0
      %v1394 = vsel %vm1145, %v625, 0
      %1396 = vmatpush.bf16.msra.mxu0 0
      %1397 = vmatpush.bf16.msra.mxu0 0
      %1398 = vmatpush.bf16.msra.mxu0 0
      %1399 = vmatpush.bf16.msra.mxu0 0
      %1400 = vmatpush.bf16.msra.mxu0 0
      %1401 = vmatpush.bf16.msra.mxu0 0
      %1402 = vmatpush.bf16.msra.mxu0 0
      %1403 = vmatpush.bf16.msra.mxu0 %v1394
      %1404 = vmatmul.bf16.gmra.mxu0 %v1391
      %v1405 = vpop.f32.mrf.mxu0
      %v1406 = vadd.f32 0.0, %v1405
      %v1407 = vpop.f32.mrf.mxu0
      %1408 = vdwg.mxu0
      %v1410 = vsel %vm949, %v1140, 0
      %v1413 = vsel %vm1145, %v626, 0
      %1415 = vmatpush.bf16.msra.mxu0 0
      %1416 = vmatpush.bf16.msra.mxu0 0
      %1417 = vmatpush.bf16.msra.mxu0 0
      %1418 = vmatpush.bf16.msra.mxu0 0
      %1419 = vmatpush.bf16.msra.mxu0 0
      %1420 = vmatpush.bf16.msra.mxu0 0
      %1421 = vmatpush.bf16.msra.mxu0 0
      %1422 = vmatpush.bf16.msra.mxu0 %v1413
      %1423 = vmatmul.bf16.gmra.mxu0 %v1410
      %v1424 = vpop.f32.mrf.mxu0
      %v1425 = vadd.f32 0.0, %v1424
      %v1426 = vpop.f32.mrf.mxu0
      %1427 = vdwg.mxu0
      %v1429 = vsel %vm949, %v1141, 0
      %v1432 = vsel %vm1145, %v627, 0
      %1434 = vmatpush.bf16.msra.mxu0 0
      %1435 = vmatpush.bf16.msra.mxu0 0
      %1436 = vmatpush.bf16.msra.mxu0 0
      %1437 = vmatpush.bf16.msra.mxu0 0
      %1438 = vmatpush.bf16.msra.mxu0 0
      %1439 = vmatpush.bf16.msra.mxu0 0
      %1440 = vmatpush.bf16.msra.mxu0 0
      %1441 = vmatpush.bf16.msra.mxu0 %v1432
      %1442 = vmatmul.bf16.gmra.mxu0 %v1429
      %v1443 = vpop.f32.mrf.mxu0
      %v1444 = vadd.f32 0.0, %v1443
      %v1445 = vpop.f32.mrf.mxu0
      %1446 = vdwg.mxu0
      %v1447 = vpack.c.bf16 %v1159, %v1159
      %v1448 = vpack.c.bf16 %v1178, %v1178
      %v1449 = vpack.c.bf16 %v1197, %v1197
      %v1450 = vpack.c.bf16 %v1216, %v1216
      %v1451 = vpack.c.bf16 %v1235, %v1235
      %v1452 = vpack.c.bf16 %v1254, %v1254
      %v1453 = vpack.c.bf16 %v1273, %v1273
      %v1454 = vpack.c.bf16 %v1292, %v1292
      %v1455 = vpack.c.bf16 %v1311, %v1311
      %v1456 = vpack.c.bf16 %v1330, %v1330
      %v1457 = vpack.c.bf16 %v1349, %v1349
      %v1458 = vpack.c.bf16 %v1368, %v1368
      %v1459 = vpack.c.bf16 %v1387, %v1387
      %v1460 = vpack.c.bf16 %v1406, %v1406
      %v1461 = vpack.c.bf16 %v1425, %v1425
      %v1462 = vpack.c.bf16 %v1444, %v1444
      %v1464 = vunpack.c.l.b16 %v1449
      %v1465 = vpack.c.b16 %v1464, %v1464
      %1466 = vrot.lane.b32.xlu0 %v1465, 16
      %v1467 = vpop.permute.xlu0 %1466
      %v1469 = vunpack.c.l.b16 %v1451
      %v1470 = vpack.c.b16 %v1469, %v1469
      %1471 = vrot.lane.b32.xlu0 %v1470, 32
      %v1472 = vpop.permute.xlu0 %1471
      %v1474 = vunpack.c.l.b16 %v1453
      %v1475 = vpack.c.b16 %v1474, %v1474
      %1476 = vrot.lane.b32.xlu0 %v1475, 48
      %v1477 = vpop.permute.xlu0 %1476
      %v1479 = vunpack.c.l.b16 %v1455
      %v1480 = vpack.c.b16 %v1479, %v1479
      %1481 = vrot.lane.b32.xlu0 %v1480, 64
      %v1482 = vpop.permute.xlu0 %1481
      %v1484 = vunpack.c.l.b16 %v1457
      %v1485 = vpack.c.b16 %v1484, %v1484
      %1486 = vrot.lane.b32.xlu0 %v1485, 80
      %v1487 = vpop.permute.xlu0 %1486
      %v1489 = vunpack.c.l.b16 %v1459
      %v1490 = vpack.c.b16 %v1489, %v1489
      %1491 = vrot.lane.b32.xlu0 %v1490, 96
      %v1492 = vpop.permute.xlu0 %1491
      %v1494 = vunpack.c.l.b16 %v1461
      %v1495 = vpack.c.b16 %v1494, %v1494
      %1496 = vrot.lane.b32.xlu0 %v1495, 112
      %v1497 = vpop.permute.xlu0 %1496
      %v1500 = vsel %vm628, %v1447, %v1467
      %vm1501 = vcmask 261120
      %v1503 = vsel %vm1501, %v1500, %v1472
      %vm1504 = vcmask 392192
      %v1506 = vsel %vm1504, %v1503, %v1477
      %vm1507 = vcmask 523264
      %v1509 = vsel %vm1507, %v1506, %v1482
      %vm1510 = vcmask 654336
      %v1512 = vsel %vm1510, %v1509, %v1487
      %vm1513 = vcmask 785408
      %v1515 = vsel %vm1513, %v1512, %v1492
      %vm1516 = vcmask 916480
      %v1518 = vsel %vm1516, %v1515, %v1497
      %1520 = vst [vmem:[#allocation5] sm:$0xf] %v1518
      %v1522 = vunpack.c.l.b16 %v1450
      %v1523 = vpack.c.b16 %v1522, %v1522
      %1524 = vrot.lane.b32.xlu0 %v1523, 16
      %v1525 = vpop.permute.xlu0 %1524
      %v1527 = vunpack.c.l.b16 %v1452
      %v1528 = vpack.c.b16 %v1527, %v1527
      %1529 = vrot.lane.b32.xlu0 %v1528, 32
      %v1530 = vpop.permute.xlu0 %1529
      %v1532 = vunpack.c.l.b16 %v1454
      %v1533 = vpack.c.b16 %v1532, %v1532
      %1534 = vrot.lane.b32.xlu0 %v1533, 48
      %v1535 = vpop.permute.xlu0 %1534
      %v1537 = vunpack.c.l.b16 %v1456
      %v1538 = vpack.c.b16 %v1537, %v1537
      %1539 = vrot.lane.b32.xlu0 %v1538, 64
      %v1540 = vpop.permute.xlu0 %1539
      %v1542 = vunpack.c.l.b16 %v1458
      %v1543 = vpack.c.b16 %v1542, %v1542
      %1544 = vrot.lane.b32.xlu0 %v1543, 80
      %v1545 = vpop.permute.xlu0 %1544
      %v1547 = vunpack.c.l.b16 %v1460
      %v1548 = vpack.c.b16 %v1547, %v1547
      %1549 = vrot.lane.b32.xlu0 %v1548, 96
      %v1550 = vpop.permute.xlu0 %1549
      %v1552 = vunpack.c.l.b16 %v1462
      %v1553 = vpack.c.b16 %v1552, %v1552
      %1554 = vrot.lane.b32.xlu0 %v1553, 112
      %v1555 = vpop.permute.xlu0 %1554
      %v1558 = vsel %vm628, %v1448, %v1525
      %v1560 = vsel %vm1501, %v1558, %v1530
      %v1562 = vsel %vm1504, %v1560, %v1535
      %v1564 = vsel %vm1507, %v1562, %v1540
      %v1566 = vsel %vm1510, %v1564, %v1545
      %v1568 = vsel %vm1513, %v1566, %v1550
      %v1570 = vsel %vm1516, %v1568, %v1555
      %1572 = vst [vmem:[#allocation5 + $0x4] sm:$0xf] %v1570
      %v1573 = vld [vmem:[#allocation5] sm:$0xf]
      %v1574 = vld [vmem:[#allocation5 + $0x4] sm:$0xf]
      %v1575 = vld [vmem:[#allocation15] sm:$0xf]
      %v1576 = vld [vmem:[#allocation15 + $0x4] sm:$0xf]
      %v1577 = vld [vmem:[#allocation15 + $0x8] sm:$0xf]
      %v1578 = vld [vmem:[#allocation15 + $0xc] sm:$0xf]
      %v1579 = vld [vmem:[#allocation15 + $0x10] sm:$0xf]
      %v1580 = vld [vmem:[#allocation15 + $0x14] sm:$0xf]
      %v1581 = vld [vmem:[#allocation15 + $0x18] sm:$0xf]
      %v1582 = vld [vmem:[#allocation15 + $0x1c] sm:$0xf]
      %v1583 = vld [vmem:[#allocation15 + $0x20] sm:$0xf]
      %v1584 = vld [vmem:[#allocation15 + $0x24] sm:$0xf]
      %v1585 = vld [vmem:[#allocation15 + $0x28] sm:$0xf]
      %v1586 = vld [vmem:[#allocation15 + $0x2c] sm:$0xf]
      %v1587 = vld [vmem:[#allocation15 + $0x30] sm:$0xf]
      %v1588 = vld [vmem:[#allocation15 + $0x34] sm:$0xf]
      %v1589 = vld [vmem:[#allocation15 + $0x38] sm:$0xf]
      %v1590 = vld [vmem:[#allocation15 + $0x3c] sm:$0xf]
      %v1591 = vld [vmem:[%s4] sm:$0x1]
      %v1593 = vperm.slane %v1591, 0
      %v1597 = vunpack.c.l.b16 %v1573
      %v1598 = vunpack.c.l.b16 %v1574
      %v1599 = vpack.c.b16 %v1598, %v1597
      %v1617 = vunpack.c.l.b16 %v1575
      %v1618 = vunpack.c.l.b16 %v1576
      %v1619 = vunpack.c.l.b16 %v1577
      %v1620 = vunpack.c.l.b16 %v1578
      %v1621 = vunpack.c.l.b16 %v1579
      %v1622 = vunpack.c.l.b16 %v1580
      %v1623 = vunpack.c.l.b16 %v1581
      %v1624 = vunpack.c.l.b16 %v1582
      %v1625 = vunpack.c.l.b16 %v1583
      %v1626 = vunpack.c.l.b16 %v1584
      %v1627 = vunpack.c.l.b16 %v1585
      %v1628 = vunpack.c.l.b16 %v1586
      %v1629 = vunpack.c.l.b16 %v1587
      %v1630 = vunpack.c.l.b16 %v1588
      %v1631 = vunpack.c.l.b16 %v1589
      %v1632 = vunpack.c.l.b16 %v1590
      %v1633 = vpack.c.b16 %v1618, %v1617
      %v1634 = vpack.c.b16 %v1620, %v1619
      %v1635 = vpack.c.b16 %v1622, %v1621
      %v1636 = vpack.c.b16 %v1624, %v1623
      %v1637 = vpack.c.b16 %v1626, %v1625
      %v1638 = vpack.c.b16 %v1628, %v1627
      %v1639 = vpack.c.b16 %v1630, %v1629
      %v1640 = vpack.c.b16 %v1632, %v1631
      %1649 = vmatpush.bf16.msra.mxu0 %v1640
      %1650 = vmatpush.bf16.msra.mxu0 %v1639
      %1651 = vmatpush.bf16.msra.mxu0 %v1638
      %1652 = vmatpush.bf16.msra.mxu0 %v1637
      %1653 = vmatpush.bf16.msra.mxu0 %v1636
      %1654 = vmatpush.bf16.msra.mxu0 %v1635
      %1655 = vmatpush.bf16.msra.mxu0 %v1634
      %1656 = vmatpush.bf16.msra.mxu0 %v1633
      %1657 = vmatmul.bf16.gmra.mxu0 %v1599
      %v1658 = vpop.f32.mrf.mxu0
      %v1659 = vadd.f32 %v1593, %v1658
      %v1660 = vpop.f32.mrf.mxu0
      %v1661 = vadd.f32 %v1593, %v1660
      %1662 = vdwg.mxu0
      %v1663 = vadd.f32 %v144, %v1659
      %v1664 = vadd.f32 %v145, %v1661
      %v1665 = vld [vmem:[%s5] sm:$0x1]
      %v1666 = vld [vmem:[%s6] sm:$0x1]
      %1667 = vadd.xlane.f32.xlu0 %v1663
      %v1668 = vpop.xlane.xlu0 %1667
      %1669 = vadd.xlane.f32.xlu0 %v1664
      %v1670 = vpop.xlane.xlu0 %1669
      %v1671 = vrcp.pop 128.0
      %v1672 = vmul.f32 128.0, %v1671
      %v1673 = vsub.f32 1.0, %v1672
      %v1674 = vmul.f32 %v1671, %v1673
      %v1675 = vadd.f32 %v1671, %v1674
      %vm1676 = vweird.f32 %v1671
      %v1677 = vsel %vm1676, %v1671, %v1675
      %v1678 = vmul.f32 %v1668, %v1677
      %v1679 = vmul.f32 %v1670, %v1677
      %v1680 = vsub.f32 %v1663, %v1678
      %v1681 = vsub.f32 %v1664, %v1679
      %v1682 = vmul.f32 %v1680, %v1680
      %v1683 = vmul.f32 %v1681, %v1681
      %1684 = vadd.xlane.f32.xlu0 %v1682
      %v1685 = vpop.xlane.xlu0 %1684
      %1686 = vadd.xlane.f32.xlu0 %v1683
      %v1687 = vpop.xlane.xlu0 %1686
      %v1688 = vmul.f32 %v1685, %v1677
      %v1689 = vmul.f32 %v1687, %v1677
      %v1690 = vadd.f32 %v1688, 1e-05
      %v1691 = vadd.f32 %v1689, 1e-05
      %v1692 = vrsqrt.pop %v1690
      %v1693 = vmul.f32 %v1692, %v1690
      %v1694 = vmul.f32 %v1693, %v1692
      %v1695 = vmul.f32 0.5, %v1694
      %v1696 = vsub.f32 1.5, %v1695
      %v1697 = vmul.f32 %v1692, %v1696
      %vm1698 = vweird.f32 %v1690
      %vm1699 = vweird.f32 %v1692
      %vm1700 = vmor %vm1698, %vm1699
      %v1701 = vsel %vm1700, %v1692, %v1697
      %v1702 = vrsqrt.pop %v1691
      %v1703 = vmul.f32 %v1702, %v1691
      %v1704 = vmul.f32 %v1703, %v1702
      %v1705 = vmul.f32 0.5, %v1704
      %v1706 = vsub.f32 1.5, %v1705
      %v1707 = vmul.f32 %v1702, %v1706
      %vm1708 = vweird.f32 %v1691
      %vm1709 = vweird.f32 %v1702
      %vm1710 = vmor %vm1708, %vm1709
      %v1711 = vsel %vm1710, %v1702, %v1707
      %v1712 = vmul.f32 %v1680, %v1701
      %v1713 = vmul.f32 %v1681, %v1711
      %v1715 = vperm.slane %v1665, 0
      %v1717 = vmul.f32 %v1712, %v1715
      %v1718 = vmul.f32 %v1713, %v1715
      %v1720 = vperm.slane %v1666, 0
      %v1722 = vadd.f32 %v1717, %v1720
      %v1723 = vadd.f32 %v1718, %v1720
      %1724 = vst [vmem:[#allocation6] sm:$0xff] %v1722
      %1725 = vst [vmem:[#allocation6 + $0x8] sm:$0xff] %v1723
      %v1726 = vpack.c.bf16 %v1722, %v1722
      %v1727 = vpack.c.bf16 %v1723, %v1723
      %1728 = vst [vmem:[#allocation7] sm:$0xf] %v1726
      %1729 = vst [vmem:[#allocation7 + $0x4] sm:$0xf] %v1727
      %1730 = vst [vmem:[#allocation8] sm:$0xff] 0.0
      %1731 = vst [vmem:[#allocation8 + $0x8] sm:$0xff] 0.0
    $region81: #{tpu_custom_call.1} parent=1 // pred_fallthru
      _
    %v1732 = vld [vmem:[#allocation7] sm:$0xf]
    %v1733 = vld [vmem:[#allocation7 + $0x4] sm:$0xf]
    %v1734 = vld [vmem:[#allocation17] sm:$0xff]
    %v1735 = vld [vmem:[#allocation17 + $0x8] sm:$0xff]
    %v1736 = vld [vmem:[#allocation17 + $0x10] sm:$0xff]
    %v1737 = vld [vmem:[#allocation17 + $0x18] sm:$0xff]
    %v1738 = vld [vmem:[#allocation17 + $0x20] sm:$0xff]
    %v1739 = vld [vmem:[#allocation17 + $0x28] sm:$0xff]
    %v1740 = vld [vmem:[#allocation17 + $0x30] sm:$0xff]
    %v1741 = vld [vmem:[#allocation17 + $0x38] sm:$0xff]
    %v1742 = vld [vmem:[#allocation17 + $0x40] sm:$0xff]
    %v1743 = vld [vmem:[#allocation17 + $0x48] sm:$0xff]
    %v1744 = vld [vmem:[#allocation17 + $0x50] sm:$0xff]
    %v1745 = vld [vmem:[#allocation17 + $0x58] sm:$0xff]
    %v1746 = vld [vmem:[#allocation17 + $0x60] sm:$0xff]
    %v1747 = vld [vmem:[#allocation17 + $0x68] sm:$0xff]
    %v1748 = vld [vmem:[#allocation17 + $0x70] sm:$0xff]
    %v1749 = vld [vmem:[#allocation17 + $0x78] sm:$0xff]
    %v1750 = vld [vmem:[#allocation17 + $0x80] sm:$0xff]
    %v1751 = vld [vmem:[#allocation17 + $0x88] sm:$0xff]
    %v1752 = vld [vmem:[#allocation17 + $0x90] sm:$0xff]
    %v1753 = vld [vmem:[#allocation17 + $0x98] sm:$0xff]
    %v1754 = vld [vmem:[#allocation17 + $0xa0] sm:$0xff]
    %v1755 = vld [vmem:[#allocation17 + $0xa8] sm:$0xff]
    %v1756 = vld [vmem:[#allocation17 + $0xb0] sm:$0xff]
    %v1757 = vld [vmem:[#allocation17 + $0xb8] sm:$0xff]
    %v1758 = vld [vmem:[#allocation17 + $0xc0] sm:$0xff]
    %v1759 = vld [vmem:[#allocation17 + $0xc8] sm:$0xff]
    %v1760 = vld [vmem:[#allocation17 + $0xd0] sm:$0xff]
    %v1761 = vld [vmem:[#allocation17 + $0xd8] sm:$0xff]
    %v1762 = vld [vmem:[#allocation17 + $0xe0] sm:$0xff]
    %v1763 = vld [vmem:[#allocation17 + $0xe8] sm:$0xff]
    %v1764 = vld [vmem:[#allocation17 + $0xf0] sm:$0xff]
    %v1765 = vld [vmem:[#allocation17 + $0xf8] sm:$0xff]
    %v1766 = vld [vmem:[%s8] sm:$0xf]
    %v1768 = vperm.slane %v1766, 0
    %v1769 = vperm.slane %v1766, 1
    %v1770 = vperm.slane %v1766, 2
    %v1771 = vperm.slane %v1766, 3
    %v1778 = vunpack.c.l.b16 %v1732
    %v1779 = vunpack.c.l.b16 %v1733
    %v1780 = vpack.c.b16 %v1779, %v1778
    %v1814 = vunpack.c.l.b16 %v1734
    %v1815 = vunpack.c.h.b16 %v1734
    %v1816 = vunpack.c.l.b16 %v1735
    %v1817 = vunpack.c.h.b16 %v1735
    %v1818 = vunpack.c.l.b16 %v1736
    %v1819 = vunpack.c.h.b16 %v1736
    %v1820 = vunpack.c.l.b16 %v1737
    %v1821 = vunpack.c.h.b16 %v1737
    %v1822 = vunpack.c.l.b16 %v1738
    %v1823 = vunpack.c.h.b16 %v1738
    %v1824 = vunpack.c.l.b16 %v1739
    %v1825 = vunpack.c.h.b16 %v1739
    %v1826 = vunpack.c.l.b16 %v1740
    %v1827 = vunpack.c.h.b16 %v1740
    %v1828 = vunpack.c.l.b16 %v1741
    %v1829 = vunpack.c.h.b16 %v1741
    %v1830 = vunpack.c.l.b16 %v1742
    %v1831 = vunpack.c.h.b16 %v1742
    %v1832 = vunpack.c.l.b16 %v1743
    %v1833 = vunpack.c.h.b16 %v1743
    %v1834 = vunpack.c.l.b16 %v1744
    %v1835 = vunpack.c.h.b16 %v1744
    %v1836 = vunpack.c.l.b16 %v1745
    %v1837 = vunpack.c.h.b16 %v1745
    %v1838 = vunpack.c.l.b16 %v1746
    %v1839 = vunpack.c.h.b16 %v1746
    %v1840 = vunpack.c.l.b16 %v1747
    %v1841 = vunpack.c.h.b16 %v1747
    %v1842 = vunpack.c.l.b16 %v1748
    %v1843 = vunpack.c.h.b16 %v1748
    %v1844 = vunpack.c.l.b16 %v1749
    %v1845 = vunpack.c.h.b16 %v1749
    %v1846 = vunpack.c.l.b16 %v1750
    %v1847 = vunpack.c.h.b16 %v1750
    %v1848 = vunpack.c.l.b16 %v1751
    %v1849 = vunpack.c.h.b16 %v1751
    %v1850 = vunpack.c.l.b16 %v1752
    %v1851 = vunpack.c.h.b16 %v1752
    %v1852 = vunpack.c.l.b16 %v1753
    %v1853 = vunpack.c.h.b16 %v1753
    %v1854 = vunpack.c.l.b16 %v1754
    %v1855 = vunpack.c.h.b16 %v1754
    %v1856 = vunpack.c.l.b16 %v1755
    %v1857 = vunpack.c.h.b16 %v1755
    %v1858 = vunpack.c.l.b16 %v1756
    %v1859 = vunpack.c.h.b16 %v1756
    %v1860 = vunpack.c.l.b16 %v1757
    %v1861 = vunpack.c.h.b16 %v1757
    %v1862 = vunpack.c.l.b16 %v1758
    %v1863 = vunpack.c.h.b16 %v1758
    %v1864 = vunpack.c.l.b16 %v1759
    %v1865 = vunpack.c.h.b16 %v1759
    %v1866 = vunpack.c.l.b16 %v1760
    %v1867 = vunpack.c.h.b16 %v1760
    %v1868 = vunpack.c.l.b16 %v1761
    %v1869 = vunpack.c.h.b16 %v1761
    %v1870 = vunpack.c.l.b16 %v1762
    %v1871 = vunpack.c.h.b16 %v1762
    %v1872 = vunpack.c.l.b16 %v1763
    %v1873 = vunpack.c.h.b16 %v1763
    %v1874 = vunpack.c.l.b16 %v1764
    %v1875 = vunpack.c.h.b16 %v1764
    %v1876 = vunpack.c.l.b16 %v1765
    %v1877 = vunpack.c.h.b16 %v1765
    %v1878 = vpack.c.b16 %v1818, %v1814
    %v1879 = vpack.c.b16 %v1819, %v1815
    %v1880 = vpack.c.b16 %v1820, %v1816
    %v1881 = vpack.c.b16 %v1821, %v1817
    %v1882 = vpack.c.b16 %v1826, %v1822
    %v1883 = vpack.c.b16 %v1827, %v1823
    %v1884 = vpack.c.b16 %v1828, %v1824
    %v1885 = vpack.c.b16 %v1829, %v1825
    %v1886 = vpack.c.b16 %v1834, %v1830
    %v1887 = vpack.c.b16 %v1835, %v1831
    %v1888 = vpack.c.b16 %v1836, %v1832
    %v1889 = vpack.c.b16 %v1837, %v1833
    %v1890 = vpack.c.b16 %v1842, %v1838
    %v1891 = vpack.c.b16 %v1843, %v1839
    %v1892 = vpack.c.b16 %v1844, %v1840
    %v1893 = vpack.c.b16 %v1845, %v1841
    %v1894 = vpack.c.b16 %v1850, %v1846
    %v1895 = vpack.c.b16 %v1851, %v1847
    %v1896 = vpack.c.b16 %v1852, %v1848
    %v1897 = vpack.c.b16 %v1853, %v1849
    %v1898 = vpack.c.b16 %v1858, %v1854
    %v1899 = vpack.c.b16 %v1859, %v1855
    %v1900 = vpack.c.b16 %v1860, %v1856
    %v1901 = vpack.c.b16 %v1861, %v1857
    %v1902 = vpack.c.b16 %v1866, %v1862
    %v1903 = vpack.c.b16 %v1867, %v1863
    %v1904 = vpack.c.b16 %v1868, %v1864
    %v1905 = vpack.c.b16 %v1869, %v1865
    %v1906 = vpack.c.b16 %v1874, %v1870
    %v1907 = vpack.c.b16 %v1875, %v1871
    %v1908 = vpack.c.b16 %v1876, %v1872
    %v1909 = vpack.c.b16 %v1877, %v1873
    %1942 = vmatpush.bf16.msra.mxu0 %v1906
    %1943 = vmatpush.bf16.msra.mxu0 %v1902
    %1944 = vmatpush.bf16.msra.mxu0 %v1898
    %1945 = vmatpush.bf16.msra.mxu0 %v1894
    %1946 = vmatpush.bf16.msra.mxu0 %v1890
    %1947 = vmatpush.bf16.msra.mxu0 %v1886
    %1948 = vmatpush.bf16.msra.mxu0 %v1882
    %1949 = vmatpush.bf16.msra.mxu0 %v1878
    %1950 = vmatmul.bf16.gmra.mxu0 %v1780
    %v1951 = vpop.f32.mrf.mxu0
    %v1952 = vadd.f32 %v1768, %v1951
    %v1953 = vpop.f32.mrf.mxu0
    %v1954 = vadd.f32 %v1768, %v1953
    %1955 = vdwg.mxu0
    %1956 = vmatpush.bf16.msra.mxu0 %v1907
    %1957 = vmatpush.bf16.msra.mxu0 %v1903
    %1958 = vmatpush.bf16.msra.mxu0 %v1899
    %1959 = vmatpush.bf16.msra.mxu0 %v1895
    %1960 = vmatpush.bf16.msra.mxu0 %v1891
    %1961 = vmatpush.bf16.msra.mxu0 %v1887
    %1962 = vmatpush.bf16.msra.mxu0 %v1883
    %1963 = vmatpush.bf16.msra.mxu0 %v1879
    %1964 = vmatmul.bf16.gmra.mxu0 %v1780
    %v1965 = vpop.f32.mrf.mxu0
    %v1966 = vadd.f32 %v1769, %v1965
    %v1967 = vpop.f32.mrf.mxu0
    %v1968 = vadd.f32 %v1769, %v1967
    %1969 = vdwg.mxu0
    %1970 = vmatpush.bf16.msra.mxu0 %v1908
    %1971 = vmatpush.bf16.msra.mxu0 %v1904
    %1972 = vmatpush.bf16.msra.mxu0 %v1900
    %1973 = vmatpush.bf16.msra.mxu0 %v1896
    %1974 = vmatpush.bf16.msra.mxu0 %v1892
    %1975 = vmatpush.bf16.msra.mxu0 %v1888
    %1976 = vmatpush.bf16.msra.mxu0 %v1884
    %1977 = vmatpush.bf16.msra.mxu0 %v1880
    %1978 = vmatmul.bf16.gmra.mxu0 %v1780
    %v1979 = vpop.f32.mrf.mxu0
    %v1980 = vadd.f32 %v1770, %v1979
    %v1981 = vpop.f32.mrf.mxu0
    %v1982 = vadd.f32 %v1770, %v1981
    %1983 = vdwg.mxu0
    %1984 = vmatpush.bf16.msra.mxu0 %v1909
    %1985 = vmatpush.bf16.msra.mxu0 %v1905
    %1986 = vmatpush.bf16.msra.mxu0 %v1901
    %1987 = vmatpush.bf16.msra.mxu0 %v1897
    %1988 = vmatpush.bf16.msra.mxu0 %v1893
    %1989 = vmatpush.bf16.msra.mxu0 %v1889
    %1990 = vmatpush.bf16.msra.mxu0 %v1885
    %1991 = vmatpush.bf16.msra.mxu0 %v1881
    %1992 = vmatmul.bf16.gmra.mxu0 %v1780
    %v1993 = vpop.f32.mrf.mxu0
    %v1994 = vadd.f32 %v1771, %v1993
    %v1995 = vpop.f32.mrf.mxu0
    %v1996 = vadd.f32 %v1771, %v1995
    %1997 = vdwg.mxu0
    %v1998 = vmax.f32 %v1952, 0.0
    %v1999 = vmax.f32 %v1966, 0.0
    %v2000 = vmax.f32 %v1980, 0.0
    %v2001 = vmax.f32 %v1994, 0.0
    %v2002 = vmax.f32 %v1954, 0.0
    %v2003 = vmax.f32 %v1968, 0.0
    %v2004 = vmax.f32 %v1982, 0.0
    %v2005 = vmax.f32 %v1996, 0.0
    %v2006 = vld [vmem:[#allocation8] sm:$0xff]
    %v2007 = vld [vmem:[#allocation8 + $0x8] sm:$0xff]
    %v2008 = vpack.c.bf16 %v2002, %v1998
    %v2009 = vpack.c.bf16 %v2003, %v1999
    %v2010 = vpack.c.bf16 %v2004, %v2000
    %v2011 = vpack.c.bf16 %v2005, %v2001
    %v2012 = vld [vmem:[#allocation18] sm:$0xf]
    %v2013 = vld [vmem:[#allocation18 + $0x4] sm:$0xf]
    %v2014 = vld [vmem:[#allocation18 + $0x8] sm:$0xf]
    %v2015 = vld [vmem:[#allocation18 + $0xc] sm:$0xf]
    %v2016 = vld [vmem:[#allocation18 + $0x10] sm:$0xf]
    %v2017 = vld [vmem:[#allocation18 + $0x14] sm:$0xf]
    %v2018 = vld [vmem:[#allocation18 + $0x18] sm:$0xf]
    %v2019 = vld [vmem:[#allocation18 + $0x1c] sm:$0xf]
    %v2020 = vld [vmem:[#allocation18 + $0x20] sm:$0xf]
    %v2021 = vld [vmem:[#allocation18 + $0x24] sm:$0xf]
    %v2022 = vld [vmem:[#allocation18 + $0x28] sm:$0xf]
    %v2023 = vld [vmem:[#allocation18 + $0x2c] sm:$0xf]
    %v2024 = vld [vmem:[#allocation18 + $0x30] sm:$0xf]
    %v2025 = vld [vmem:[#allocation18 + $0x34] sm:$0xf]
    %v2026 = vld [vmem:[#allocation18 + $0x38] sm:$0xf]
    %v2027 = vld [vmem:[#allocation18 + $0x3c] sm:$0xf]
    %v2028 = vld [vmem:[#allocation18 + $0x40] sm:$0xf]
    %v2029 = vld [vmem:[#allocation18 + $0x44] sm:$0xf]
    %v2030 = vld [vmem:[#allocation18 + $0x48] sm:$0xf]
    %v2031 = vld [vmem:[#allocation18 + $0x4c] sm:$0xf]
    %v2032 = vld [vmem:[#allocation18 + $0x50] sm:$0xf]
    %v2033 = vld [vmem:[#allocation18 + $0x54] sm:$0xf]
    %v2034 = vld [vmem:[#allocation18 + $0x58] sm:$0xf]
    %v2035 = vld [vmem:[#allocation18 + $0x5c] sm:$0xf]
    %v2036 = vld [vmem:[#allocation18 + $0x60] sm:$0xf]
    %v2037 = vld [vmem:[#allocation18 + $0x64] sm:$0xf]
    %v2038 = vld [vmem:[#allocation18 + $0x68] sm:$0xf]
    %v2039 = vld [vmem:[#allocation18 + $0x6c] sm:$0xf]
    %v2040 = vld [vmem:[#allocation18 + $0x70] sm:$0xf]
    %v2041 = vld [vmem:[#allocation18 + $0x74] sm:$0xf]
    %v2042 = vld [vmem:[#allocation18 + $0x78] sm:$0xf]
    %v2043 = vld [vmem:[#allocation18 + $0x7c] sm:$0xf]
    %v2044 = vld [vmem:[#allocation18 + $0x80] sm:$0xf]
    %v2045 = vld [vmem:[#allocation18 + $0x84] sm:$0xf]
    %v2046 = vld [vmem:[#allocation18 + $0x88] sm:$0xf]
    %v2047 = vld [vmem:[#allocation18 + $0x8c] sm:$0xf]
    %v2048 = vld [vmem:[#allocation18 + $0x90] sm:$0xf]
    %v2049 = vld [vmem:[#allocation18 + $0x94] sm:$0xf]
    %v2050 = vld [vmem:[#allocation18 + $0x98] sm:$0xf]
    %v2051 = vld [vmem:[#allocation18 + $0x9c] sm:$0xf]
    %v2052 = vld [vmem:[#allocation18 + $0xa0] sm:$0xf]
    %v2053 = vld [vmem:[#allocation18 + $0xa4] sm:$0xf]
    %v2054 = vld [vmem:[#allocation18 + $0xa8] sm:$0xf]
    %v2055 = vld [vmem:[#allocation18 + $0xac] sm:$0xf]
    %v2056 = vld [vmem:[#allocation18 + $0xb0] sm:$0xf]
    %v2057 = vld [vmem:[#allocation18 + $0xb4] sm:$0xf]
    %v2058 = vld [vmem:[#allocation18 + $0xb8] sm:$0xf]
    %v2059 = vld [vmem:[#allocation18 + $0xbc] sm:$0xf]
    %v2060 = vld [vmem:[#allocation18 + $0xc0] sm:$0xf]
    %v2061 = vld [vmem:[#allocation18 + $0xc4] sm:$0xf]
    %v2062 = vld [vmem:[#allocation18 + $0xc8] sm:$0xf]
    %v2063 = vld [vmem:[#allocation18 + $0xcc] sm:$0xf]
    %v2064 = vld [vmem:[#allocation18 + $0xd0] sm:$0xf]
    %v2065 = vld [vmem:[#allocation18 + $0xd4] sm:$0xf]
    %v2066 = vld [vmem:[#allocation18 + $0xd8] sm:$0xf]
    %v2067 = vld [vmem:[#allocation18 + $0xdc] sm:$0xf]
    %v2068 = vld [vmem:[#allocation18 + $0xe0] sm:$0xf]
    %v2069 = vld [vmem:[#allocation18 + $0xe4] sm:$0xf]
    %v2070 = vld [vmem:[#allocation18 + $0xe8] sm:$0xf]
    %v2071 = vld [vmem:[#allocation18 + $0xec] sm:$0xf]
    %v2072 = vld [vmem:[#allocation18 + $0xf0] sm:$0xf]
    %v2073 = vld [vmem:[#allocation18 + $0xf4] sm:$0xf]
    %v2074 = vld [vmem:[#allocation18 + $0xf8] sm:$0xf]
    %v2075 = vld [vmem:[#allocation18 + $0xfc] sm:$0xf]
    %v2140 = vunpack.c.l.b16 %v2012
    %v2141 = vunpack.c.l.b16 %v2013
    %v2142 = vunpack.c.l.b16 %v2014
    %v2143 = vunpack.c.l.b16 %v2015
    %v2144 = vunpack.c.l.b16 %v2016
    %v2145 = vunpack.c.l.b16 %v2017
    %v2146 = vunpack.c.l.b16 %v2018
    %v2147 = vunpack.c.l.b16 %v2019
    %v2148 = vunpack.c.l.b16 %v2020
    %v2149 = vunpack.c.l.b16 %v2021
    %v2150 = vunpack.c.l.b16 %v2022
    %v2151 = vunpack.c.l.b16 %v2023
    %v2152 = vunpack.c.l.b16 %v2024
    %v2153 = vunpack.c.l.b16 %v2025
    %v2154 = vunpack.c.l.b16 %v2026
    %v2155 = vunpack.c.l.b16 %v2027
    %v2156 = vunpack.c.l.b16 %v2028
    %v2157 = vunpack.c.l.b16 %v2029
    %v2158 = vunpack.c.l.b16 %v2030
    %v2159 = vunpack.c.l.b16 %v2031
    %v2160 = vunpack.c.l.b16 %v2032
    %v2161 = vunpack.c.l.b16 %v2033
    %v2162 = vunpack.c.l.b16 %v2034
    %v2163 = vunpack.c.l.b16 %v2035
    %v2164 = vunpack.c.l.b16 %v2036
    %v2165 = vunpack.c.l.b16 %v2037
    %v2166 = vunpack.c.l.b16 %v2038
    %v2167 = vunpack.c.l.b16 %v2039
    %v2168 = vunpack.c.l.b16 %v2040
    %v2169 = vunpack.c.l.b16 %v2041
    %v2170 = vunpack.c.l.b16 %v2042
    %v2171 = vunpack.c.l.b16 %v2043
    %v2172 = vunpack.c.l.b16 %v2044
    %v2173 = vunpack.c.l.b16 %v2045
    %v2174 = vunpack.c.l.b16 %v2046
    %v2175 = vunpack.c.l.b16 %v2047
    %v2176 = vunpack.c.l.b16 %v2048
    %v2177 = vunpack.c.l.b16 %v2049
    %v2178 = vunpack.c.l.b16 %v2050
    %v2179 = vunpack.c.l.b16 %v2051
    %v2180 = vunpack.c.l.b16 %v2052
    %v2181 = vunpack.c.l.b16 %v2053
    %v2182 = vunpack.c.l.b16 %v2054
    %v2183 = vunpack.c.l.b16 %v2055
    %v2184 = vunpack.c.l.b16 %v2056
    %v2185 = vunpack.c.l.b16 %v2057
    %v2186 = vunpack.c.l.b16 %v2058
    %v2187 = vunpack.c.l.b16 %v2059
    %v2188 = vunpack.c.l.b16 %v2060
    %v2189 = vunpack.c.l.b16 %v2061
    %v2190 = vunpack.c.l.b16 %v2062
    %v2191 = vunpack.c.l.b16 %v2063
    %v2192 = vunpack.c.l.b16 %v2064
    %v2193 = vunpack.c.l.b16 %v2065
    %v2194 = vunpack.c.l.b16 %v2066
    %v2195 = vunpack.c.l.b16 %v2067
    %v2196 = vunpack.c.l.b16 %v2068
    %v2197 = vunpack.c.l.b16 %v2069
    %v2198 = vunpack.c.l.b16 %v2070
    %v2199 = vunpack.c.l.b16 %v2071
    %v2200 = vunpack.c.l.b16 %v2072
    %v2201 = vunpack.c.l.b16 %v2073
    %v2202 = vunpack.c.l.b16 %v2074
    %v2203 = vunpack.c.l.b16 %v2075
    %v2204 = vpack.c.b16 %v2141, %v2140
    %v2205 = vpack.c.b16 %v2143, %v2142
    %v2206 = vpack.c.b16 %v2145, %v2144
    %v2207 = vpack.c.b16 %v2147, %v2146
    %v2208 = vpack.c.b16 %v2149, %v2148
    %v2209 = vpack.c.b16 %v2151, %v2150
    %v2210 = vpack.c.b16 %v2153, %v2152
    %v2211 = vpack.c.b16 %v2155, %v2154
    %v2212 = vpack.c.b16 %v2157, %v2156
    %v2213 = vpack.c.b16 %v2159, %v2158
    %v2214 = vpack.c.b16 %v2161, %v2160
    %v2215 = vpack.c.b16 %v2163, %v2162
    %v2216 = vpack.c.b16 %v2165, %v2164
    %v2217 = vpack.c.b16 %v2167, %v2166
    %v2218 = vpack.c.b16 %v2169, %v2168
    %v2219 = vpack.c.b16 %v2171, %v2170
    %v2220 = vpack.c.b16 %v2173, %v2172
    %v2221 = vpack.c.b16 %v2175, %v2174
    %v2222 = vpack.c.b16 %v2177, %v2176
    %v2223 = vpack.c.b16 %v2179, %v2178
    %v2224 = vpack.c.b16 %v2181, %v2180
    %v2225 = vpack.c.b16 %v2183, %v2182
    %v2226 = vpack.c.b16 %v2185, %v2184
    %v2227 = vpack.c.b16 %v2187, %v2186
    %v2228 = vpack.c.b16 %v2189, %v2188
    %v2229 = vpack.c.b16 %v2191, %v2190
    %v2230 = vpack.c.b16 %v2193, %v2192
    %v2231 = vpack.c.b16 %v2195, %v2194
    %v2232 = vpack.c.b16 %v2197, %v2196
    %v2233 = vpack.c.b16 %v2199, %v2198
    %v2234 = vpack.c.b16 %v2201, %v2200
    %v2235 = vpack.c.b16 %v2203, %v2202
    %2268 = vmatpush.bf16.msra.mxu0 %v2211
    %2269 = vmatpush.bf16.msra.mxu0 %v2210
    %2270 = vmatpush.bf16.msra.mxu0 %v2209
    %2271 = vmatpush.bf16.msra.mxu0 %v2208
    %2272 = vmatpush.bf16.msra.mxu0 %v2207
    %2273 = vmatpush.bf16.msra.mxu0 %v2206
    %2274 = vmatpush.bf16.msra.mxu0 %v2205
    %2275 = vmatpush.bf16.msra.mxu0 %v2204
    %2276 = vmatmul.bf16.gmra.mxu0 %v2008
    %v2277 = vpop.f32.mrf.mxu0
    %v2278 = vadd.f32 0.0, %v2277
    %v2279 = vpop.f32.mrf.mxu0
    %v2280 = vadd.f32 0.0, %v2279
    %2281 = vdwg.mxu0
    %2282 = vmatpush.bf16.msra.mxu0 %v2219
    %2283 = vmatpush.bf16.msra.mxu0 %v2218
    %2284 = vmatpush.bf16.msra.mxu0 %v2217
    %2285 = vmatpush.bf16.msra.mxu0 %v2216
    %2286 = vmatpush.bf16.msra.mxu0 %v2215
    %2287 = vmatpush.bf16.msra.mxu0 %v2214
    %2288 = vmatpush.bf16.msra.mxu0 %v2213
    %2289 = vmatpush.bf16.msra.mxu0 %v2212
    %2290 = vmatmul.bf16.gmra.mxu0 %v2009
    %v2291 = vpop.f32.mrf.mxu0
    %v2292 = vadd.f32 %v2278, %v2291
    %v2293 = vpop.f32.mrf.mxu0
    %v2294 = vadd.f32 %v2280, %v2293
    %2295 = vdwg.mxu0
    %2296 = vmatpush.bf16.msra.mxu0 %v2227
    %2297 = vmatpush.bf16.msra.mxu0 %v2226
    %2298 = vmatpush.bf16.msra.mxu0 %v2225
    %2299 = vmatpush.bf16.msra.mxu0 %v2224
    %2300 = vmatpush.bf16.msra.mxu0 %v2223
    %2301 = vmatpush.bf16.msra.mxu0 %v2222
    %2302 = vmatpush.bf16.msra.mxu0 %v2221
    %2303 = vmatpush.bf16.msra.mxu0 %v2220
    %2304 = vmatmul.bf16.gmra.mxu0 %v2010
    %v2305 = vpop.f32.mrf.mxu0
    %v2306 = vadd.f32 %v2292, %v2305
    %v2307 = vpop.f32.mrf.mxu0
    %v2308 = vadd.f32 %v2294, %v2307
    %2309 = vdwg.mxu0
    %2310 = vmatpush.bf16.msra.mxu0 %v2235
    %2311 = vmatpush.bf16.msra.mxu0 %v2234
    %2312 = vmatpush.bf16.msra.mxu0 %v2233
    %2313 = vmatpush.bf16.msra.mxu0 %v2232
    %2314 = vmatpush.bf16.msra.mxu0 %v2231
    %2315 = vmatpush.bf16.msra.mxu0 %v2230
    %2316 = vmatpush.bf16.msra.mxu0 %v2229
    %2317 = vmatpush.bf16.msra.mxu0 %v2228
    %2318 = vmatmul.bf16.gmra.mxu0 %v2011
    %v2319 = vpop.f32.mrf.mxu0
    %v2320 = vadd.f32 %v2306, %v2319
    %v2321 = vpop.f32.mrf.mxu0
    %v2322 = vadd.f32 %v2308, %v2321
    %2323 = vdwg.mxu0
    %v2324 = vadd.f32 %v2006, %v2320
    %v2325 = vadd.f32 %v2007, %v2322
    %2326 = vst [vmem:[#allocation8] sm:$0xff] %v2324
    %2327 = vst [vmem:[#allocation8 + $0x8] sm:$0xff] %v2325
    // Predicated region
    $region82: #{tpu_custom_call.1} parent=1 // pred_check
      %p2328 = pneg %p138
    $region83: #{tpu_custom_call.1} parent=1 // pred_check_branch
      %2330 = sbr.rel (%p2328) target = $region85
    $region84: #{tpu_custom_call.1} parent=1 // pred_region
      %v2331 = vld [vmem:[#allocation6] sm:$0xff]
      %v2332 = vld [vmem:[#allocation6 + $0x8] sm:$0xff]
      %v2333 = vld [vmem:[#allocation8] sm:$0xff]
      %v2334 = vld [vmem:[#allocation8 + $0x8] sm:$0xff]
      %v2335 = vadd.f32 %v2331, %v2333
      %v2336 = vadd.f32 %v2332, %v2334
      %v2337 = vld [vmem:[%s10] sm:$0x1]
      %v2339 = vperm.slane %v2337, 0
      %v2341 = vadd.f32 %v2335, %v2339
      %v2342 = vadd.f32 %v2336, %v2339
      %v2343 = vld [vmem:[%s11] sm:$0x1]
      %v2344 = vld [vmem:[%s12] sm:$0x1]
      %2345 = vadd.xlane.f32.xlu0 %v2341
      %v2346 = vpop.xlane.xlu0 %2345
      %2347 = vadd.xlane.f32.xlu0 %v2342
      %v2348 = vpop.xlane.xlu0 %2347
      %v2349 = vrcp.pop 128.0
      %v2350 = vmul.f32 128.0, %v2349
      %v2351 = vsub.f32 1.0, %v2350
      %v2352 = vmul.f32 %v2349, %v2351
      %v2353 = vadd.f32 %v2349, %v2352
      %vm2354 = vweird.f32 %v2349
      %v2355 = vsel %vm2354, %v2349, %v2353
      %v2356 = vmul.f32 %v2346, %v2355
      %v2357 = vmul.f32 %v2348, %v2355
      %v2358 = vsub.f32 %v2341, %v2356
      %v2359 = vsub.f32 %v2342, %v2357
      %v2360 = vmul.f32 %v2358, %v2358
      %v2361 = vmul.f32 %v2359, %v2359
      %2362 = vadd.xlane.f32.xlu0 %v2360
      %v2363 = vpop.xlane.xlu0 %2362
      %2364 = vadd.xlane.f32.xlu0 %v2361
      %v2365 = vpop.xlane.xlu0 %2364
      %v2366 = vmul.f32 %v2363, %v2355
      %v2367 = vmul.f32 %v2365, %v2355
      %v2368 = vadd.f32 %v2366, 1e-05
      %v2369 = vadd.f32 %v2367, 1e-05
      %v2370 = vrsqrt.pop %v2368
      %v2371 = vmul.f32 %v2370, %v2368
      %v2372 = vmul.f32 %v2371, %v2370
      %v2373 = vmul.f32 0.5, %v2372
      %v2374 = vsub.f32 1.5, %v2373
      %v2375 = vmul.f32 %v2370, %v2374
      %vm2376 = vweird.f32 %v2368
      %vm2377 = vweird.f32 %v2370
      %vm2378 = vmor %vm2376, %vm2377
      %v2379 = vsel %vm2378, %v2370, %v2375
      %v2380 = vrsqrt.pop %v2369
      %v2381 = vmul.f32 %v2380, %v2369
      %v2382 = vmul.f32 %v2381, %v2380
      %v2383 = vmul.f32 0.5, %v2382
      %v2384 = vsub.f32 1.5, %v2383
      %v2385 = vmul.f32 %v2380, %v2384
      %vm2386 = vweird.f32 %v2369
      %vm2387 = vweird.f32 %v2380
      %vm2388 = vmor %vm2386, %vm2387
      %v2389 = vsel %vm2388, %v2380, %v2385
      %v2390 = vmul.f32 %v2358, %v2379
      %v2391 = vmul.f32 %v2359, %v2389
      %v2393 = vperm.slane %v2343, 0
      %v2395 = vmul.f32 %v2390, %v2393
      %v2396 = vmul.f32 %v2391, %v2393
      %v2398 = vperm.slane %v2344, 0
      %v2400 = vadd.f32 %v2395, %v2398
      %v2401 = vadd.f32 %v2396, %v2398
      %v2402 = vpack.c.bf16 %v2400, %v2400
      %v2403 = vpack.c.bf16 %v2401, %v2401
      %2404 = vst [vmem:[#allocation20] sm:$0xf] %v2402
      %2405 = vst [vmem:[#allocation20 + $0x4] sm:$0xf] %v2403
    $region85: #{tpu_custom_call.1} parent=1 // pred_fallthru
      _
    // Predicated region
    $region86: #{tpu_custom_call.1} parent=1 // pred_check
      _
    $region87: #{tpu_custom_call.1} parent=1 // pred_check_branch
      %2407 = sbr.rel (0) target = $region89
    $region88: #{tpu_custom_call.1} parent=1 // pred_region
      %2409 = vsyncadd [#allocation11], 0
      %s2410 = sshll.u32 [#allocation20], 4
      %s2411 = int_to_ptr.vmem [resolvable:$true] %s2410
      %s2412 = sshll.u32 %s13, 4
      %s2413 = int_to_ptr.hbm [resolvable:$true] %s2412
      %2418 = dma.vmem_to_hbm [thread:$0]  %s2411, 128, %s2413, [#allocation11], 64, 64, 4
    $region89: #{tpu_custom_call.1} parent=1 // pred_fallthru
      _
    // Predicated region
    $region90: #{tpu_custom_call.1} parent=1 // pred_check
      _
    $region91: #{tpu_custom_call.1} parent=1 // pred_check_branch
      %2420 = sbr.rel (0) target = $region93
    $region92: #{tpu_custom_call.1} parent=1 // pred_region
      %2422 = dma.done [#allocation11], 128
    $region93: #{tpu_custom_call.1} parent=1 // pred_fallthru
      _
    %2423 = vsyncpa [#allocation10], 1
    %2424 = vsyncpa [#allocation13], 1
    %2425 = vsyncpa [#allocation16], 1
    %2426 = vsyncpa [#allocation19], 1
    %2427 = vsyncpa [#allocation11], 1

</llo_original>
